<compile_context>
chip_gen: v7x
topology: tpu7x:2x2x1
jax: 0.10.0
libtpu: 0.0.40
codegen_flags: <defaults>
</compile_context>

<pallas_src>
import functools
import math

import jax
import jax.numpy as jnp
from jax.experimental import pallas as pl
from jax.experimental.pallas import tpu as pltpu

ENTITY_SIZE = 4
OA_SIZE = 4
GOAL_SIZE = 2
ENC_W_ROWS = ENTITY_SIZE + OA_SIZE + GOAL_SIZE   # 10 packed weight rows per agent


# --------------------------------------------------------------------------------------
# Kernel
# --------------------------------------------------------------------------------------
def _attention_actor_kernel(en_ref, oa_ref, goal_ref,
                            enc_w_ref, enc_b_ref, head_w_ref, head_b_ref,
                            merge_w_ref, merge_b_ref,
                            out_ref, *, n_agents, hidden_dim):
    H = hidden_dim
    n_oa = n_agents - 1
    n_goal = n_agents
    TB = en_ref.shape[1]                       # batch tile (rows / sublanes)

    def leaky(v):                              # nn.LeakyReLU default slope
        return jnp.where(v > 0, v, 0.01 * v)

    # ---- hoisted weight loads: each slab is read exactly once per grid step ----
    enc_w = enc_w_ref[...].reshape(ENC_W_ROWS, H)        # per-agent, BN folded in
    enc_b = enc_b_ref[...].reshape(3, H)
    w_en, w_oa, w_goal = enc_w[0:4], enc_w[4:8], enc_w[8:10]
    b_en, b_oa, b_goal = enc_b[0:1], enc_b[1:2], enc_b[2:3]

    hw = head_w_ref[...]                                  # [6, H, H] shared heads
    k0w, k1w, s0w, s1w, v0w, v1w = hw[0], hw[1], hw[2], hw[3], hw[4], hw[5]
    hb = head_b_ref[...]                                  # [2, H]
    v0b, v1b = hb[0:1], hb[1:2]

    w_m = merge_w_ref[...].reshape(3 * H, 2)              # per-agent merge linear
    b_m = merge_b_ref[...].reshape(1, 2)

    # ---- encoders (entity slots batched onto the row axis; one matmul each) ----
    en_x = en_ref[...].reshape(TB, ENTITY_SIZE)
    en_enc = leaky(jnp.dot(en_x, w_en, preferred_element_type=jnp.float32) + b_en)      # [TB,H]

    oa_x = oa_ref[...].reshape(n_oa * TB, OA_SIZE)
    oa_enc = leaky(jnp.dot(oa_x, w_oa, preferred_element_type=jnp.float32) + b_oa)      # [(n-1)TB,H]

    goal_x = goal_ref[...].reshape(n_goal * TB, GOAL_SIZE)
    goal_enc = leaky(jnp.dot(goal_x, w_goal, preferred_element_type=jnp.float32) + b_goal)

    # ---- shared attention heads: keys / values batched over all entity slots ----
    sel0 = jnp.dot(en_enc, s0w, preferred_element_type=jnp.float32)                     # [TB,H]
    sel1 = jnp.dot(en_enc, s1w, preferred_element_type=jnp.float32)
    keys0 = jnp.dot(oa_enc, k0w, preferred_element_type=jnp.float32).reshape(n_oa, TB, H)
    vals0 = leaky(jnp.dot(oa_enc, v0w, preferred_element_type=jnp.float32)
                  + v0b).reshape(n_oa, TB, H)
    keys1 = jnp.dot(goal_enc, k1w, preferred_element_type=jnp.float32).reshape(n_goal, TB, H)
    vals1 = leaky(jnp.dot(goal_enc, v1w, preferred_element_type=jnp.float32)
                  + v1b).reshape(n_goal, TB, H)

    inv_sqrt = 1.0 / math.sqrt(float(H))       # attend_dim == hidden_dim

    def attend(sel, keys, vals):
        # Stacked scores [n, TB, 1]; softmax over the tiny entity axis (axis 0) is pure
        # element-wise work across slabs - no lane concatenation, no relayout of batch.
        scores = jnp.sum(sel[None, :, :] * keys, axis=-1, keepdims=True) * inv_sqrt
        m = jnp.max(scores, axis=0, keepdims=True)
        p = jnp.exp(scores - m)
        denom = jnp.sum(p, axis=0, keepdims=True)
        # approx=True would move the divide to the EUP slot; kept exact to hold 1e-4 tol.
        attn = p * pl.reciprocal(denom, approx=False)
        return jnp.sum(attn * vals, axis=0)                                             # [TB,H]

    other0 = attend(sel0, keys0, vals0)        # attention over other-agent encodings
    other1 = attend(sel1, keys1, vals1)        # attention over goal encodings

    # ---- merge: sum of partial matmuls against static weight slices (no [TB,3H] concat) ----
    h = (jnp.dot(en_enc, w_m[0:H], preferred_element_type=jnp.float32)
         + jnp.dot(other0, w_m[H:2 * H], preferred_element_type=jnp.float32)
         + jnp.dot(other1, w_m[2 * H:3 * H], preferred_element_type=jnp.float32)
         + b_m)
    out_ref[...] = jnp.tanh(h).reshape(1, TB, 2)


# --------------------------------------------------------------------------------------
# Wrappers: input layout, parameter packing (BN fold), pallas_call
# --------------------------------------------------------------------------------------
def prepare_inputs(states, n_agents):
    """Wrapper-side layout plumbing: slice the per-agent observation into entity-major,
    rectangular blocks so the kernel never does narrow unaligned lane slices."""
    A, B, _ = states.shape
    en_in = states[:, :, :ENTITY_SIZE]                                           # [A,B,4]
    oa_flat = states[:, :, ENTITY_SIZE:ENTITY_SIZE + OA_SIZE * (n_agents - 1)]
    oa_in = oa_flat.reshape(A, B, n_agents - 1, OA_SIZE).transpose(0, 2, 1, 3)   # [A,n-1,B,4]
    base = ENTITY_SIZE + OA_SIZE * (n_agents - 1)
    g_flat = states[:, :, base:base + GOAL_SIZE * n_agents]
    goal_in = g_flat.reshape(A, B, n_agents, GOAL_SIZE).transpose(0, 2, 1, 3)    # [A,n,B,2]
    return en_in, oa_in, goal_in


def pack_params(raw, n_agents, hidden_dim):
    """Fold eval-mode BatchNorm1d(affine=False) into the following Linear and pack all
    parameters into 6 slabs (per-agent encoder W/b, shared head W/b, per-agent merge W/b)."""
    H = hidden_dim
    eps = 1e-5

    def fold(W, b, mu, var):           # W: torch layout [out, in]
        s = 1.0 / jnp.sqrt(var + eps)                  # [in]
        Wf = (W * s[None, :]).T                        # [in, out]   (x @ Wf)
        bf = b - (mu * s) @ W.T                        # [out]
        return Wf, bf

    enc_w, enc_b, merge_w, merge_b = [], [], [], []
    for p in raw["agents"]:
        we, be = fold(p["en_W"], p["en_b"], p["en_mu"], p["en_var"])   # [4,H],[H]
        wo, bo = fold(p["oa_W"], p["oa_b"], p["oa_mu"], p["oa_var"])   # [4,H],[H]
        wg, bg = fold(p["g_W"], p["g_b"], p["g_mu"], p["g_var"])       # [2,H],[H]
        enc_w.append(jnp.concatenate([we, wo, wg], axis=0))            # [10,H]
        enc_b.append(jnp.stack([be, bo, bg], axis=0))                  # [3,H]
        merge_w.append(p["m_W"].T)                                     # [3H,2]
        merge_b.append(p["m_b"][None, :])                              # [1,2]

    sh = raw["shared"]
    head_w = jnp.stack([sh["K0"].T, sh["K1"].T, sh["S0"].T, sh["S1"].T,
                        sh["V0_W"].T, sh["V1_W"].T], axis=0)           # [6,H,H]
    head_b = jnp.stack([sh["V0_b"], sh["V1_b"]], axis=0)               # [2,H]

    return (jnp.stack(enc_w), jnp.stack(enc_b), head_w, head_b,
            jnp.stack(merge_w), jnp.stack(merge_b))


def _pallas_forward(en_in, oa_in, goal_in, packed, n_agents, hidden_dim):
    A, B, _ = en_in.shape
    H = hidden_dim
    n_oa, n_goal = n_agents - 1, n_agents
    assert B % 8 == 0, "batch must be a multiple of 8 (sublane tile) for the batched-entity layout"

    # Batch tile: largest aligned tile <= 512 rows (fits v5e's 16 MiB default scoped VMEM
    # and v7x's 64 MiB VMEM with double-buffering headroom); small batches stay one tile.
    TB = B
    for cand in (512, 256, 128):
        if B % cand == 0:
            TB = cand
            break
    n_bt = B // TB

    kernel = functools.partial(_attention_actor_kernel, n_agents=n_agents, hidden_dim=H)

    in_specs = [
        pl.BlockSpec((1, TB, ENTITY_SIZE), lambda i, b: (i, b, 0)),            # en_in
        pl.BlockSpec((1, n_oa, TB, OA_SIZE), lambda i, b: (i, 0, b, 0)),       # oa_in
        pl.BlockSpec((1, n_goal, TB, GOAL_SIZE), lambda i, b: (i, 0, b, 0)),   # goal_in
        pl.BlockSpec((1, ENC_W_ROWS, H), lambda i, b: (i, 0, 0)),              # enc_w (per agent)
        pl.BlockSpec((1, 3, H), lambda i, b: (i, 0, 0)),                       # enc_b (per agent)
        pl.BlockSpec((6, H, H), lambda i, b: (0, 0, 0)),                       # head_w (shared)
        pl.BlockSpec((2, H), lambda i, b: (0, 0)),                             # head_b (shared)
        pl.BlockSpec((1, 3 * H, 2), lambda i, b: (i, 0, 0)),                   # merge_w (per agent)
        pl.BlockSpec((1, 1, 2), lambda i, b: (i, 0, 0)),                       # merge_b (per agent)
    ]
    out_specs = pl.BlockSpec((1, TB, 2), lambda i, b: (i, b, 0))

    return pl.pallas_call(
        kernel,
        out_shape=jax.ShapeDtypeStruct((A, B, 2), jnp.float32),
        grid=(A, n_bt),
        in_specs=in_specs,
        out_specs=out_specs,
        compiler_params=pltpu.CompilerParams(
            dimension_semantics=("parallel", "parallel")),   # both axes independent (2 TCs on v7x)
    )(en_in, oa_in, goal_in, *packed)


@functools.partial(jax.jit, static_argnames=("n_agents", "hidden_dim"))
def attention_actor_forward(states, packed, n_agents, hidden_dim):
    """states: [n_agents, B, obs_dim]. Returns stacked per-agent actions [n_agents, B, 2]
    (the PyTorch module returns the same data as a Python list of per-agent tensors)."""
    en_in, oa_in, goal_in = prepare_inputs(states, n_agents)
    return _pallas_forward(en_in, oa_in, goal_in, packed, n_agents, hidden_dim)


# --------------------------------------------------------------------------------------
# Synthetic parameters + pure-JAX reference (mirrors the PyTorch forward, eval-mode BN)
# --------------------------------------------------------------------------------------
def init_raw_params(key, n_agents, hidden_dim):
    H = hidden_dim

    def linear(k, fan_in, fan_out):
        kw, kb = jax.random.split(k)
        bound = 1.0 / math.sqrt(fan_in)
        W = jax.random.uniform(kw, (fan_out, fan_in), jnp.float32, -bound, bound)
        b = jax.random.uniform(kb, (fan_out,), jnp.float32, -bound, bound)
        return W, b

    def bn_stats(k, n):   # synthetic running stats (PyTorch defaults would be mean=0, var=1)
        km, kv = jax.random.split(k)
        mu = 0.5 * jax.random.normal(km, (n,), jnp.float32)
        var = jax.random.uniform(kv, (n,), jnp.float32, 0.5, 1.5)
        return mu, var

    keys = jax.random.split(key, n_agents + 1)
    agents = []
    for i in range(n_agents):
        ks = jax.random.split(keys[i], 7)
        en_W, en_b = linear(ks[0], ENTITY_SIZE, H); en_mu, en_var = bn_stats(ks[1], ENTITY_SIZE)
        oa_W, oa_b = linear(ks[2], OA_SIZE, H);     oa_mu, oa_var = bn_stats(ks[3], OA_SIZE)
        g_W, g_b = linear(ks[4], GOAL_SIZE, H);     g_mu, g_var = bn_stats(ks[5], GOAL_SIZE)
        m_W, m_b = linear(ks[6], 3 * H, 2)
        agents.append(dict(en_W=en_W, en_b=en_b, en_mu=en_mu, en_var=en_var,
                           oa_W=oa_W, oa_b=oa_b, oa_mu=oa_mu, oa_var=oa_var,
                           g_W=g_W, g_b=g_b, g_mu=g_mu, g_var=g_var,
                           m_W=m_W, m_b=m_b))
    ks = jax.random.split(keys[-1], 6)
    K0, _ = linear(ks[0], H, H); K1, _ = linear(ks[1], H, H)        # key extractors (no bias)
    S0, _ = linear(ks[2], H, H); S1, _ = linear(ks[3], H, H)        # selector extractors (no bias)
    V0_W, V0_b = linear(ks[4], H, H); V1_W, V1_b = linear(ks[5], H, H)
    shared = dict(K0=K0, K1=K1, S0=S0, S1=S1, V0_W=V0_W, V0_b=V0_b, V1_W=V1_W, V1_b=V1_b)
    return dict(agents=agents, shared=shared)


def _reference_forward(states, raw, n_agents, hidden_dim):
    eps = 1e-5
    H = hidden_dim
    lrelu = lambda v: jnp.where(v > 0, v, 0.01 * v)
    bn = lambda x, mu, var: (x - mu) / jnp.sqrt(var + eps)
    sh = raw["shared"]
    outs = []
    for i in range(n_agents):
        s = states[i]
        p = raw["agents"][i]
        en = lrelu(bn(s[:, :ENTITY_SIZE], p["en_mu"], p["en_var"]) @ p["en_W"].T + p["en_b"])
        oa_encs = []
        for j in range(n_agents - 1):
            xj = s[:, ENTITY_SIZE + OA_SIZE * j: ENTITY_SIZE + OA_SIZE * (j + 1)]
            oa_encs.append(lrelu(bn(xj, p["oa_mu"], p["oa_var"]) @ p["oa_W"].T + p["oa_b"]))
        base = ENTITY_SIZE + OA_SIZE * (n_agents - 1)
        goal_encs = []
        for j in range(n_agents):
            xj = s[:, base + GOAL_SIZE * j: base + GOAL_SIZE * (j + 1)]
            goal_encs.append(lrelu(bn(xj, p["g_mu"], p["g_var"]) @ p["g_W"].T + p["g_b"]))

        def head(sel_W, key_W, val_W, val_b, encs):
            sel = en @ sel_W.T
            keys = jnp.stack([e @ key_W.T for e in encs], 0)                 # [n,B,H]
            vals = jnp.stack([lrelu(e @ val_W.T + val_b) for e in encs], 0)  # [n,B,H]
            logits = jnp.einsum("bh,nbh->bn", sel, keys) / math.sqrt(H)
            w = jax.nn.softmax(logits, axis=-1)
            return jnp.einsum("bn,nbh->bh", w, vals)

        o0 = head(sh["S0"], sh["K0"], sh["V0_W"], sh["V0_b"], oa_encs)
        o1 = head(sh["S1"], sh["K1"], sh["V1_W"], sh["V1_b"], goal_encs)
        merged = jnp.concatenate([en, o0, o1], axis=1)
        outs.append(jnp.tanh(merged @ p["m_W"].T + p["m_b"]))
    return jnp.stack(outs, 0)


# --------------------------------------------------------------------------------------
if __name__ == "__main__":
    n_agents = 3
    hidden_dim = 32
    batch = 64
    obs_dim = ENTITY_SIZE + OA_SIZE * (n_agents - 1) + GOAL_SIZE * n_agents   # 18

    key = jax.random.PRNGKey(0)
    k_param, k_x = jax.random.split(key)
    raw = init_raw_params(k_param, n_agents, hidden_dim)
    packed = pack_params(raw, n_agents, hidden_dim)

    states = jax.random.normal(k_x, (n_agents, batch, obs_dim), dtype=jnp.float32)

    out = attention_actor_forward(states, packed, n_agents, hidden_dim)
    out = jax.block_until_ready(out)

    ref = jax.block_until_ready(_reference_forward(states, raw, n_agents, hidden_dim))
    assert out.shape == (n_agents, batch, 2)
    err = float(jnp.max(jnp.abs(out - ref)))
    assert err < 1e-4, f"mismatch vs pure-JAX reference: {err}"

    # The PyTorch module returns a list of per-agent actions:
    _actions = [out[i] for i in range(n_agents)]

    print("KERNEL_OK")
</pallas_src>

<mosaic_0001>
module attributes {stable_mosaic.version = 11 : i64} {
  func.func @_attention_actor_kernel(%arg0: i32, %arg1: i32, %arg2: memref<1x64x4xf32, #tpu.memory_space<vmem>>, %arg3: memref<1x2x64x4xf32, #tpu.memory_space<vmem>>, %arg4: memref<1x3x64x2xf32, #tpu.memory_space<vmem>>, %arg5: memref<1x10x32xf32, #tpu.memory_space<vmem>>, %arg6: memref<1x3x32xf32, #tpu.memory_space<vmem>>, %arg7: memref<6x32x32xf32, #tpu.memory_space<vmem>>, %arg8: memref<2x32xf32, #tpu.memory_space<vmem>>, %arg9: memref<1x96x2xf32, #tpu.memory_space<vmem>>, %arg10: memref<1x1x2xf32, #tpu.memory_space<vmem>>, %arg11: memref<1x64x2xf32, #tpu.memory_space<vmem>>) attributes {dimension_semantics = [#tpu.dimension_semantics<parallel>, #tpu.dimension_semantics<parallel>], iteration_bounds = array<i64: 3, 1>, scalar_prefetch = 0 : i64, scratch_operands = 0 : i64, tpu.core_type = #tpu.core_type<tc>, window_params = [{transform_indices = @transform_0, window_bounds = array<i64: 1, 64, 4>}, {transform_indices = @transform_1, window_bounds = array<i64: 1, 2, 64, 4>}, {transform_indices = @transform_2, window_bounds = array<i64: 1, 3, 64, 2>}, {transform_indices = @transform_3, window_bounds = array<i64: 1, 10, 32>}, {transform_indices = @transform_4, window_bounds = array<i64: 1, 3, 32>}, {pipeline_mode = #tpu.pipeline_mode<synchronous>, transform_indices = @transform_5, window_bounds = array<i64: 6, 32, 32>}, {pipeline_mode = #tpu.pipeline_mode<synchronous>, transform_indices = @transform_6, window_bounds = array<i64: 2, 32>}, {transform_indices = @transform_7, window_bounds = array<i64: 1, 96, 2>}, {transform_indices = @transform_8, window_bounds = array<i64: 1, 1, 2>}, {transform_indices = @transform_9, window_bounds = array<i64: 1, 64, 2>}]} {
    %c0 = arith.constant 0 : index
    %c0_0 = arith.constant 0 : index
    %c0_1 = arith.constant 0 : index
    %0 = vector.load %arg5[%c0, %c0_0, %c0_1] : memref<1x10x32xf32, #tpu.memory_space<vmem>>, vector<1x10x32xf32>
    %1 = vector.shape_cast %0 : vector<1x10x32xf32> to vector<10x32xf32>
    %c0_2 = arith.constant 0 : index
    %c0_3 = arith.constant 0 : index
    %c0_4 = arith.constant 0 : index
    %2 = vector.load %arg6[%c0_2, %c0_3, %c0_4] : memref<1x3x32xf32, #tpu.memory_space<vmem>>, vector<1x3x32xf32>
    %3 = vector.shape_cast %2 : vector<1x3x32xf32> to vector<3x32xf32>
    %4 = vector.extract_strided_slice %1 {offsets = [0, 0], sizes = [4, 32], strides = [1, 1]} : vector<10x32xf32> to vector<4x32xf32>
    %5 = vector.extract_strided_slice %1 {offsets = [4, 0], sizes = [4, 32], strides = [1, 1]} : vector<10x32xf32> to vector<4x32xf32>
    %6 = vector.extract_strided_slice %1 {offsets = [8, 0], sizes = [2, 32], strides = [1, 1]} : vector<10x32xf32> to vector<2x32xf32>
    %7 = vector.extract_strided_slice %3 {offsets = [0, 0], sizes = [1, 32], strides = [1, 1]} : vector<3x32xf32> to vector<1x32xf32>
    %8 = vector.extract_strided_slice %3 {offsets = [1, 0], sizes = [1, 32], strides = [1, 1]} : vector<3x32xf32> to vector<1x32xf32>
    %9 = vector.extract_strided_slice %3 {offsets = [2, 0], sizes = [1, 32], strides = [1, 1]} : vector<3x32xf32> to vector<1x32xf32>
    %c0_5 = arith.constant 0 : index
    %c0_6 = arith.constant 0 : index
    %c0_7 = arith.constant 0 : index
    %10 = vector.load %arg7[%c0_5, %c0_6, %c0_7] : memref<6x32x32xf32, #tpu.memory_space<vmem>>, vector<6x32x32xf32>
    %11 = vector.extract_strided_slice %10 {offsets = [0, 0, 0], sizes = [1, 32, 32], strides = [1, 1, 1]} : vector<6x32x32xf32> to vector<1x32x32xf32>
    %12 = vector.shape_cast %11 : vector<1x32x32xf32> to vector<32x32xf32>
    %13 = vector.extract_strided_slice %10 {offsets = [1, 0, 0], sizes = [1, 32, 32], strides = [1, 1, 1]} : vector<6x32x32xf32> to vector<1x32x32xf32>
    %14 = vector.shape_cast %13 : vector<1x32x32xf32> to vector<32x32xf32>
    %15 = vector.extract_strided_slice %10 {offsets = [2, 0, 0], sizes = [1, 32, 32], strides = [1, 1, 1]} : vector<6x32x32xf32> to vector<1x32x32xf32>
    %16 = vector.shape_cast %15 : vector<1x32x32xf32> to vector<32x32xf32>
    %17 = vector.extract_strided_slice %10 {offsets = [3, 0, 0], sizes = [1, 32, 32], strides = [1, 1, 1]} : vector<6x32x32xf32> to vector<1x32x32xf32>
    %18 = vector.shape_cast %17 : vector<1x32x32xf32> to vector<32x32xf32>
    %19 = vector.extract_strided_slice %10 {offsets = [4, 0, 0], sizes = [1, 32, 32], strides = [1, 1, 1]} : vector<6x32x32xf32> to vector<1x32x32xf32>
    %20 = vector.shape_cast %19 : vector<1x32x32xf32> to vector<32x32xf32>
    %21 = vector.extract_strided_slice %10 {offsets = [5, 0, 0], sizes = [1, 32, 32], strides = [1, 1, 1]} : vector<6x32x32xf32> to vector<1x32x32xf32>
    %22 = vector.shape_cast %21 : vector<1x32x32xf32> to vector<32x32xf32>
    %c0_8 = arith.constant 0 : index
    %c0_9 = arith.constant 0 : index
    %23 = vector.load %arg8[%c0_8, %c0_9] : memref<2x32xf32, #tpu.memory_space<vmem>>, vector<2x32xf32>
    %24 = vector.extract_strided_slice %23 {offsets = [0, 0], sizes = [1, 32], strides = [1, 1]} : vector<2x32xf32> to vector<1x32xf32>
    %25 = vector.extract_strided_slice %23 {offsets = [1, 0], sizes = [1, 32], strides = [1, 1]} : vector<2x32xf32> to vector<1x32xf32>
    %c0_10 = arith.constant 0 : index
    %c0_11 = arith.constant 0 : index
    %c0_12 = arith.constant 0 : index
    %26 = vector.load %arg9[%c0_10, %c0_11, %c0_12] : memref<1x96x2xf32, #tpu.memory_space<vmem>>, vector<1x96x2xf32>
    %27 = vector.shape_cast %26 : vector<1x96x2xf32> to vector<96x2xf32>
    %c0_13 = arith.constant 0 : index
    %c0_14 = arith.constant 0 : index
    %c0_15 = arith.constant 0 : index
    %28 = vector.load %arg10[%c0_13, %c0_14, %c0_15] : memref<1x1x2xf32, #tpu.memory_space<vmem>>, vector<1x1x2xf32>
    %29 = vector.shape_cast %28 : vector<1x1x2xf32> to vector<1x2xf32>
    %c0_16 = arith.constant 0 : index
    %c0_17 = arith.constant 0 : index
    %c0_18 = arith.constant 0 : index
    %30 = vector.load %arg2[%c0_16, %c0_17, %c0_18] : memref<1x64x4xf32, #tpu.memory_space<vmem>>, vector<1x64x4xf32>
    %31 = vector.shape_cast %30 : vector<1x64x4xf32> to vector<64x4xf32>
    %cst = arith.constant dense<0.000000e+00> : vector<64x32xf32>
    %32 = tpu.matmul %31, %4, %cst {dimension_numbers = #tpu.dot_dimension_numbers<[1], [0], [0], [1], [0, 0, 1, 1], [], []>} : vector<64x4xf32>, vector<4x32xf32>, vector<64x32xf32> -> vector<64x32xf32>
    %33 = vector.broadcast %7 : vector<1x32xf32> to vector<64x32xf32>
    %34 = arith.addf %32, %33 : vector<64x32xf32>
    %cst_19 = arith.constant 0.000000e+00 : f32
    %35 = vector.broadcast %cst_19 : f32 to vector<64x32xf32>
    %36 = arith.cmpf ogt, %34, %35 : vector<64x32xf32>
    %cst_20 = arith.constant 0.00999999977 : f32
    %37 = vector.broadcast %cst_20 : f32 to vector<64x32xf32>
    %38 = arith.mulf %37, %34 : vector<64x32xf32>
    %39 = arith.select %36, %34, %38 : vector<64x32xi1>, vector<64x32xf32>
    %c0_21 = arith.constant 0 : index
    %c0_22 = arith.constant 0 : index
    %c0_23 = arith.constant 0 : index
    %c0_24 = arith.constant 0 : index
    %40 = vector.load %arg3[%c0_21, %c0_22, %c0_23, %c0_24] : memref<1x2x64x4xf32, #tpu.memory_space<vmem>>, vector<1x2x64x4xf32>
    %41 = vector.shape_cast %40 : vector<1x2x64x4xf32> to vector<128x4xf32>
    %cst_25 = arith.constant dense<0.000000e+00> : vector<128x32xf32>
    %42 = tpu.matmul %41, %5, %cst_25 {dimension_numbers = #tpu.dot_dimension_numbers<[1], [0], [0], [1], [0, 0, 1, 1], [], []>} : vector<128x4xf32>, vector<4x32xf32>, vector<128x32xf32> -> vector<128x32xf32>
    %43 = vector.broadcast %8 : vector<1x32xf32> to vector<128x32xf32>
    %44 = arith.addf %42, %43 : vector<128x32xf32>
    %cst_26 = arith.constant 0.000000e+00 : f32
    %45 = vector.broadcast %cst_26 : f32 to vector<128x32xf32>
    %46 = arith.cmpf ogt, %44, %45 : vector<128x32xf32>
    %cst_27 = arith.constant 0.00999999977 : f32
    %47 = vector.broadcast %cst_27 : f32 to vector<128x32xf32>
    %48 = arith.mulf %47, %44 : vector<128x32xf32>
    %49 = arith.select %46, %44, %48 : vector<128x32xi1>, vector<128x32xf32>
    %c0_28 = arith.constant 0 : index
    %c0_29 = arith.constant 0 : index
    %c0_30 = arith.constant 0 : index
    %c0_31 = arith.constant 0 : index
    %50 = vector.load %arg4[%c0_28, %c0_29, %c0_30, %c0_31] : memref<1x3x64x2xf32, #tpu.memory_space<vmem>>, vector<1x3x64x2xf32>
    %51 = vector.shape_cast %50 : vector<1x3x64x2xf32> to vector<192x2xf32>
    %cst_32 = arith.constant dense<0.000000e+00> : vector<192x32xf32>
    %52 = tpu.matmul %51, %6, %cst_32 {dimension_numbers = #tpu.dot_dimension_numbers<[1], [0], [0], [1], [0, 0, 1, 1], [], []>} : vector<192x2xf32>, vector<2x32xf32>, vector<192x32xf32> -> vector<192x32xf32>
    %53 = vector.broadcast %9 : vector<1x32xf32> to vector<192x32xf32>
    %54 = arith.addf %52, %53 : vector<192x32xf32>
    %cst_33 = arith.constant 0.000000e+00 : f32
    %55 = vector.broadcast %cst_33 : f32 to vector<192x32xf32>
    %56 = arith.cmpf ogt, %54, %55 : vector<192x32xf32>
    %cst_34 = arith.constant 0.00999999977 : f32
    %57 = vector.broadcast %cst_34 : f32 to vector<192x32xf32>
    %58 = arith.mulf %57, %54 : vector<192x32xf32>
    %59 = arith.select %56, %54, %58 : vector<192x32xi1>, vector<192x32xf32>
    %cst_35 = arith.constant dense<0.000000e+00> : vector<64x32xf32>
    %60 = tpu.matmul %39, %16, %cst_35 {dimension_numbers = #tpu.dot_dimension_numbers<[1], [0], [0], [1], [0, 0, 1, 1], [], []>} : vector<64x32xf32>, vector<32x32xf32>, vector<64x32xf32> -> vector<64x32xf32>
    %cst_36 = arith.constant dense<0.000000e+00> : vector<64x32xf32>
    %61 = tpu.matmul %39, %18, %cst_36 {dimension_numbers = #tpu.dot_dimension_numbers<[1], [0], [0], [1], [0, 0, 1, 1], [], []>} : vector<64x32xf32>, vector<32x32xf32>, vector<64x32xf32> -> vector<64x32xf32>
    %cst_37 = arith.constant dense<0.000000e+00> : vector<128x32xf32>
    %62 = tpu.matmul %49, %12, %cst_37 {dimension_numbers = #tpu.dot_dimension_numbers<[1], [0], [0], [1], [0, 0, 1, 1], [], []>} : vector<128x32xf32>, vector<32x32xf32>, vector<128x32xf32> -> vector<128x32xf32>
    %63 = vector.shape_cast %62 : vector<128x32xf32> to vector<2x64x32xf32>
    %cst_38 = arith.constant dense<0.000000e+00> : vector<128x32xf32>
    %64 = tpu.matmul %49, %20, %cst_38 {dimension_numbers = #tpu.dot_dimension_numbers<[1], [0], [0], [1], [0, 0, 1, 1], [], []>} : vector<128x32xf32>, vector<32x32xf32>, vector<128x32xf32> -> vector<128x32xf32>
    %65 = vector.broadcast %24 : vector<1x32xf32> to vector<128x32xf32>
    %66 = arith.addf %64, %65 : vector<128x32xf32>
    %cst_39 = arith.constant 0.000000e+00 : f32
    %67 = vector.broadcast %cst_39 : f32 to vector<128x32xf32>
    %68 = arith.cmpf ogt, %66, %67 : vector<128x32xf32>
    %cst_40 = arith.constant 0.00999999977 : f32
    %69 = vector.broadcast %cst_40 : f32 to vector<128x32xf32>
    %70 = arith.mulf %69, %66 : vector<128x32xf32>
    %71 = arith.select %68, %66, %70 : vector<128x32xi1>, vector<128x32xf32>
    %72 = vector.shape_cast %71 : vector<128x32xf32> to vector<2x64x32xf32>
    %cst_41 = arith.constant dense<0.000000e+00> : vector<192x32xf32>
    %73 = tpu.matmul %59, %14, %cst_41 {dimension_numbers = #tpu.dot_dimension_numbers<[1], [0], [0], [1], [0, 0, 1, 1], [], []>} : vector<192x32xf32>, vector<32x32xf32>, vector<192x32xf32> -> vector<192x32xf32>
    %74 = vector.shape_cast %73 : vector<192x32xf32> to vector<3x64x32xf32>
    %cst_42 = arith.constant dense<0.000000e+00> : vector<192x32xf32>
    %75 = tpu.matmul %59, %22, %cst_42 {dimension_numbers = #tpu.dot_dimension_numbers<[1], [0], [0], [1], [0, 0, 1, 1], [], []>} : vector<192x32xf32>, vector<32x32xf32>, vector<192x32xf32> -> vector<192x32xf32>
    %76 = vector.broadcast %25 : vector<1x32xf32> to vector<192x32xf32>
    %77 = arith.addf %75, %76 : vector<192x32xf32>
    %cst_43 = arith.constant 0.000000e+00 : f32
    %78 = vector.broadcast %cst_43 : f32 to vector<192x32xf32>
    %79 = arith.cmpf ogt, %77, %78 : vector<192x32xf32>
    %cst_44 = arith.constant 0.00999999977 : f32
    %80 = vector.broadcast %cst_44 : f32 to vector<192x32xf32>
    %81 = arith.mulf %80, %77 : vector<192x32xf32>
    %82 = arith.select %79, %77, %81 : vector<192x32xi1>, vector<192x32xf32>
    %83 = vector.shape_cast %82 : vector<192x32xf32> to vector<3x64x32xf32>
    %84 = vector.shape_cast %60 : vector<64x32xf32> to vector<1x64x32xf32>
    %85 = vector.broadcast %84 : vector<1x64x32xf32> to vector<2x64x32xf32>
    %86 = arith.mulf %85, %63 : vector<2x64x32xf32>
    %cst_45 = arith.constant dense<0.000000e+00> : vector<2x64xf32>
    %87 = vector.multi_reduction <add>, %86, %cst_45 [2] : vector<2x64x32xf32> to vector<2x64xf32>
    %88 = vector.shape_cast %87 : vector<2x64xf32> to vector<2x64x1xf32>
    %cst_46 = arith.constant 0.176776692 : f32
    %89 = vector.broadcast %cst_46 : f32 to vector<2x64x1xf32>
    %90 = arith.mulf %88, %89 : vector<2x64x1xf32>
    %cst_47 = arith.constant dense<0xFF800000> : vector<64x1xf32>
    %91 = vector.multi_reduction <maximumf>, %90, %cst_47 [0] : vector<2x64x1xf32> to vector<64x1xf32>
    %92 = vector.shape_cast %91 : vector<64x1xf32> to vector<1x64x1xf32>
    %93 = vector.broadcast %92 : vector<1x64x1xf32> to vector<2x64x1xf32>
    %94 = arith.subf %90, %93 : vector<2x64x1xf32>
    %95 = math.exp %94 : vector<2x64x1xf32>
    %cst_48 = arith.constant dense<0.000000e+00> : vector<64x1xf32>
    %96 = vector.multi_reduction <add>, %95, %cst_48 [0] : vector<2x64x1xf32> to vector<64x1xf32>
    %97 = vector.shape_cast %96 : vector<64x1xf32> to vector<1x64x1xf32>
    %98 = tpu.reciprocal %97 : vector<1x64x1xf32> -> vector<1x64x1xf32>
    %99 = vector.broadcast %98 : vector<1x64x1xf32> to vector<2x64x1xf32>
    %100 = arith.mulf %95, %99 : vector<2x64x1xf32>
    %101 = vector.broadcast %100 : vector<2x64x1xf32> to vector<2x64x32xf32>
    %102 = arith.mulf %101, %72 : vector<2x64x32xf32>
    %cst_49 = arith.constant dense<0.000000e+00> : vector<64x32xf32>
    %103 = vector.multi_reduction <add>, %102, %cst_49 [0] : vector<2x64x32xf32> to vector<64x32xf32>
    %104 = vector.shape_cast %61 : vector<64x32xf32> to vector<1x64x32xf32>
    %105 = vector.broadcast %104 : vector<1x64x32xf32> to vector<3x64x32xf32>
    %106 = arith.mulf %105, %74 : vector<3x64x32xf32>
    %cst_50 = arith.constant dense<0.000000e+00> : vector<3x64xf32>
    %107 = vector.multi_reduction <add>, %106, %cst_50 [2] : vector<3x64x32xf32> to vector<3x64xf32>
    %108 = vector.shape_cast %107 : vector<3x64xf32> to vector<3x64x1xf32>
    %cst_51 = arith.constant 0.176776692 : f32
    %109 = vector.broadcast %cst_51 : f32 to vector<3x64x1xf32>
    %110 = arith.mulf %108, %109 : vector<3x64x1xf32>
    %cst_52 = arith.constant dense<0xFF800000> : vector<64x1xf32>
    %111 = vector.multi_reduction <maximumf>, %110, %cst_52 [0] : vector<3x64x1xf32> to vector<64x1xf32>
    %112 = vector.shape_cast %111 : vector<64x1xf32> to vector<1x64x1xf32>
    %113 = vector.broadcast %112 : vector<1x64x1xf32> to vector<3x64x1xf32>
    %114 = arith.subf %110, %113 : vector<3x64x1xf32>
    %115 = math.exp %114 : vector<3x64x1xf32>
    %cst_53 = arith.constant dense<0.000000e+00> : vector<64x1xf32>
    %116 = vector.multi_reduction <add>, %115, %cst_53 [0] : vector<3x64x1xf32> to vector<64x1xf32>
    %117 = vector.shape_cast %116 : vector<64x1xf32> to vector<1x64x1xf32>
    %118 = tpu.reciprocal %117 : vector<1x64x1xf32> -> vector<1x64x1xf32>
    %119 = vector.broadcast %118 : vector<1x64x1xf32> to vector<3x64x1xf32>
    %120 = arith.mulf %115, %119 : vector<3x64x1xf32>
    %121 = vector.broadcast %120 : vector<3x64x1xf32> to vector<3x64x32xf32>
    %122 = arith.mulf %121, %83 : vector<3x64x32xf32>
    %cst_54 = arith.constant dense<0.000000e+00> : vector<64x32xf32>
    %123 = vector.multi_reduction <add>, %122, %cst_54 [0] : vector<3x64x32xf32> to vector<64x32xf32>
    %124 = vector.extract_strided_slice %27 {offsets = [0, 0], sizes = [32, 2], strides = [1, 1]} : vector<96x2xf32> to vector<32x2xf32>
    %cst_55 = arith.constant dense<0.000000e+00> : vector<64x2xf32>
    %125 = tpu.matmul %39, %124, %cst_55 {dimension_numbers = #tpu.dot_dimension_numbers<[1], [0], [0], [1], [0, 0, 1, 1], [], []>} : vector<64x32xf32>, vector<32x2xf32>, vector<64x2xf32> -> vector<64x2xf32>
    %126 = vector.extract_strided_slice %27 {offsets = [32, 0], sizes = [32, 2], strides = [1, 1]} : vector<96x2xf32> to vector<32x2xf32>
    %cst_56 = arith.constant dense<0.000000e+00> : vector<64x2xf32>
    %127 = tpu.matmul %103, %126, %cst_56 {dimension_numbers = #tpu.dot_dimension_numbers<[1], [0], [0], [1], [0, 0, 1, 1], [], []>} : vector<64x32xf32>, vector<32x2xf32>, vector<64x2xf32> -> vector<64x2xf32>
    %128 = arith.addf %125, %127 : vector<64x2xf32>
    %129 = vector.extract_strided_slice %27 {offsets = [64, 0], sizes = [32, 2], strides = [1, 1]} : vector<96x2xf32> to vector<32x2xf32>
    %cst_57 = arith.constant dense<0.000000e+00> : vector<64x2xf32>
    %130 = tpu.matmul %123, %129, %cst_57 {dimension_numbers = #tpu.dot_dimension_numbers<[1], [0], [0], [1], [0, 0, 1, 1], [], []>} : vector<64x32xf32>, vector<32x2xf32>, vector<64x2xf32> -> vector<64x2xf32>
    %131 = arith.addf %128, %130 : vector<64x2xf32>
    %132 = vector.broadcast %29 : vector<1x2xf32> to vector<64x2xf32>
    %133 = arith.addf %131, %132 : vector<64x2xf32>
    %134 = math.tanh %133 : vector<64x2xf32>
    %135 = vector.shape_cast %134 : vector<64x2xf32> to vector<1x64x2xf32>
    %c0_58 = arith.constant 0 : index
    %c0_59 = arith.constant 0 : index
    %c0_60 = arith.constant 0 : index
    %136 = vector.load %arg11[%c0_58, %c0_59, %c0_60] : memref<1x64x2xf32, #tpu.memory_space<vmem>>, vector<1x64x2xf32>
    tpu.vector_store %arg11[%c0_58, %c0_59, %c0_60], %135 {strides = array<i32>} : memref<1x64x2xf32, #tpu.memory_space<vmem>>, vector<1x64x2xf32>,
    return
  }
  func.func @transform_0(%arg0: i32, %arg1: i32) -> (i32, i32, i32) {
    %c0_i32 = arith.constant 0 : i32
    %c0_i32_0 = arith.constant 0 : i32
    return %arg0, %arg1, %c0_i32 : i32, i32, i32
  }
  func.func @transform_1(%arg0: i32, %arg1: i32) -> (i32, i32, i32, i32) {
    %c0_i32 = arith.constant 0 : i32
    %c0_i32_0 = arith.constant 0 : i32
    %c0_i32_1 = arith.constant 0 : i32
    return %arg0, %c0_i32, %arg1, %c0_i32_0 : i32, i32, i32, i32
  }
  func.func @transform_2(%arg0: i32, %arg1: i32) -> (i32, i32, i32, i32) {
    %c0_i32 = arith.constant 0 : i32
    %c0_i32_0 = arith.constant 0 : i32
    %c0_i32_1 = arith.constant 0 : i32
    return %arg0, %c0_i32, %arg1, %c0_i32_0 : i32, i32, i32, i32
  }
  func.func @transform_3(%arg0: i32, %arg1: i32) -> (i32, i32, i32) {
    %c0_i32 = arith.constant 0 : i32
    %c0_i32_0 = arith.constant 0 : i32
    %c0_i32_1 = arith.constant 0 : i32
    return %arg0, %c0_i32, %c0_i32_0 : i32, i32, i32
  }
  func.func @transform_4(%arg0: i32, %arg1: i32) -> (i32, i32, i32) {
    %c0_i32 = arith.constant 0 : i32
    %c0_i32_0 = arith.constant 0 : i32
    %c0_i32_1 = arith.constant 0 : i32
    return %arg0, %c0_i32, %c0_i32_0 : i32, i32, i32
  }
  func.func @transform_5(%arg0: i32, %arg1: i32) -> (i32, i32, i32) {
    %c0_i32 = arith.constant 0 : i32
    %c0_i32_0 = arith.constant 0 : i32
    %c0_i32_1 = arith.constant 0 : i32
    %c0_i32_2 = arith.constant 0 : i32
    return %c0_i32, %c0_i32_0, %c0_i32_1 : i32, i32, i32
  }
  func.func @transform_6(%arg0: i32, %arg1: i32) -> (i32, i32) {
    %c0_i32 = arith.constant 0 : i32
    %c0_i32_0 = arith.constant 0 : i32
    %c0_i32_1 = arith.constant 0 : i32
    return %c0_i32, %c0_i32_0 : i32, i32
  }
  func.func @transform_7(%arg0: i32, %arg1: i32) -> (i32, i32, i32) {
    %c0_i32 = arith.constant 0 : i32
    %c0_i32_0 = arith.constant 0 : i32
    %c0_i32_1 = arith.constant 0 : i32
    return %arg0, %c0_i32, %c0_i32_0 : i32, i32, i32
  }
  func.func @transform_8(%arg0: i32, %arg1: i32) -> (i32, i32, i32) {
    %c0_i32 = arith.constant 0 : i32
    %c0_i32_0 = arith.constant 0 : i32
    %c0_i32_1 = arith.constant 0 : i32
    return %arg0, %c0_i32, %c0_i32_0 : i32, i32, i32
  }
  func.func @transform_9(%arg0: i32, %arg1: i32) -> (i32, i32, i32) {
    %c0_i32 = arith.constant 0 : i32
    %c0_i32_0 = arith.constant 0 : i32
    return %arg0, %arg1, %c0_i32 : i32, i32, i32
  }
}

</mosaic_0001>

<llo_original>
// kernel: attention_actor_forward.1
$region0: #{attention_actor_forward.1}
  #allocation0 [shape = 'u32[]', space=smem, size = 0x4, offset = 0x4, fixed_abs, tag = 'smem constant byte address 0x4 - core index']
  #allocation1 [shape = 'u32[144,128]{1,0:T(1,128)}', space=vmem, size = 0x12000, scoped, tag = 'internal scratch']
  %s0 = inlined_call_operand.vmem [shape: f32[3,64,4], index: 0, kind: input, shape index: {}]
  %s1 = inlined_call_operand.vmem [shape: f32[3,2,64,4], index: 1, kind: input, shape index: {}]
  %s2 = inlined_call_operand.vmem [shape: f32[3,3,64,2], index: 2, kind: input, shape index: {}]
  %s3 = inlined_call_operand.vmem [shape: f32[3,10,32], index: 3, kind: input, shape index: {}]
  %s4 = inlined_call_operand.vmem [shape: f32[3,3,32], index: 4, kind: input, shape index: {}]
  %s5 = inlined_call_operand.vmem [shape: f32[6,32,32], index: 5, kind: input, shape index: {}]
  %s6 = inlined_call_operand.vmem [shape: f32[2,32], index: 6, kind: input, shape index: {}]
  %s7 = inlined_call_operand.vmem [shape: f32[3,96,2], index: 7, kind: input, shape index: {}]
  %s8 = inlined_call_operand.vmem [shape: f32[3,1,2], index: 8, kind: input, shape index: {}]
  %s9 = inlined_call_operand.vmem [shape: f32[3,64,2], index: 9, kind: output, shape index: {}]
  %s10 = sld [smem:[#allocation0]]
  $region69: #{attention_actor_forward.1} parent=0
    _
  %s12 = ssub.s32 1, %s10
  %s13 = scalar_select 0, %s12, %s10
  loop: start=0, step=1, limit=5
  $region2: #{attention_actor_forward.1} parent=0 // loop_pre_header
    _
  $region3: #{attention_actor_forward.1} parent=0 // loop_header
    %s15 = sphi 0, %s19
    %p16 = scmp.ge.s32.totalorder %s15, 5
    %s22 = sphi 0, %s34
    %s23 = sphi 0, %s30
    %s24 = sphi 0, %s22
    %s25 = sphi 0, %s23
    %s26 = sphi 0, %s24
    %s27 = sphi 0, %s25
    %s39 = sphi 0, %s41
    %s42 = sphi 0, %s39
    %s43 = sphi 0, %s42
    %s59 = sphi 0, %s43
    %s67 = sphi 0, %s69
    %s70 = sphi 0, %s67
    %s71 = sphi 0, %s70
    %s87 = sphi 0, %s71
    %s95 = sphi 0, %s97
    %s98 = sphi 0, %s95
    %s99 = sphi 0, %s98
    %s115 = sphi 0, %s99
    %s121 = sphi 0, %s123
    %s124 = sphi 0, %s121
    %s125 = sphi 0, %s124
    %s141 = sphi 0, %s125
    %s147 = sphi 0, %s149
    %s150 = sphi 0, %s147
    %s151 = sphi 0, %s150
    %s167 = sphi 0, %s151
    %s171 = sphi 0, %s171
    %s173 = sphi 0, %s171
    %s174 = sphi 0, %s173
    %s188 = sphi 0, %s174
    %s192 = sphi 0, %s192
    %s194 = sphi 0, %s192
    %s195 = sphi 0, %s194
    %s209 = sphi 0, %s195
    %s215 = sphi 0, %s217
    %s218 = sphi 0, %s215
    %s219 = sphi 0, %s218
    %s235 = sphi 0, %s219
    %s241 = sphi 0, %s243
    %s244 = sphi 0, %s241
    %s245 = sphi 0, %s244
    %s261 = sphi 0, %s245
    %s269 = sphi 0, %s271
    %s272 = sphi 0, %s269
    %s273 = sphi 0, %s272
    %s289 = sphi 0, %s273
  $region4: #{attention_actor_forward.1} parent=0 // loop_header_branch
    %18 = sbr.rel (%p16) target = $region8
  $region5: #{attention_actor_forward.1} parent=0 // loop_body
    %s20 = ssub.s32 %s15, 1
    %s21 = ssub.s32 %s15, 2
    %s28 = sadd.s32 1, %s23
    %p29 = scmp.ge.s32.totalorder %s28, 1
    %s30 = scalar_select %p29, 0, %s28
    %s31 = sadd.s32 1, %s22
    %s32 = scalar_select %p29, %s31, %s22
    %p33 = scmp.ge.s32.totalorder %s32, 3
    %s34 = scalar_select %p33, 0, %s32
    %s35 = ssub.s32 %s22, %s34
    %s36 = ssub.s32 %s23, %s30
    %s37 = sor.u32 %s35, %s36
    %p38 = scmp.eq.s32.totalorder %s37, 0
    %s40 = sadd.s32 %s39, 1
    %s41 = scalar_select %p38, %s39, %s40
    %p44 = pneg %p38
    %p45 = scmp.eq.s32.totalorder %s15, 2
    %p46 = por %p44, %p45
    %p47 = scmp.ne.s32.totalorder %s39, %s42
    %p48 = scmp.eq.s32.totalorder %s15, 0
    %p49 = por %p47, %p48
    %p50 = scmp.ne.s32.totalorder %s39, %s42
    %p51 = scmp.eq.s32.totalorder %s20, 2
    %p52 = por %p50, %p51
    %p53 = scmp.ne.s32.totalorder %s42, %s43
    %p54 = scmp.eq.s32.totalorder %s20, 0
    %p55 = por %p53, %p54
    %p56 = scmp.ne.s32.totalorder %s42, %s43
    %p57 = scmp.eq.s32.totalorder %s21, 2
    %p58 = por %p56, %p57
    %p60 = scmp.ne.s32.totalorder %s43, %s59
    %p61 = scmp.eq.s32.totalorder %s21, 0
    %p62 = por %p60, %p61
    %s63 = ssub.s32 %s22, %s34
    %s64 = ssub.s32 %s23, %s30
    %s65 = sor.u32 %s63, %s64
    %p66 = scmp.eq.s32.totalorder %s65, 0
    %s68 = sadd.s32 %s67, 1
    %s69 = scalar_select %p66, %s67, %s68
    %p72 = pneg %p66
    %p73 = scmp.eq.s32.totalorder %s15, 2
    %p74 = por %p72, %p73
    %p75 = scmp.ne.s32.totalorder %s67, %s70
    %p76 = scmp.eq.s32.totalorder %s15, 0
    %p77 = por %p75, %p76
    %p78 = scmp.ne.s32.totalorder %s67, %s70
    %p79 = scmp.eq.s32.totalorder %s20, 2
    %p80 = por %p78, %p79
    %p81 = scmp.ne.s32.totalorder %s70, %s71
    %p82 = scmp.eq.s32.totalorder %s20, 0
    %p83 = por %p81, %p82
    %p84 = scmp.ne.s32.totalorder %s70, %s71
    %p85 = scmp.eq.s32.totalorder %s21, 2
    %p86 = por %p84, %p85
    %p88 = scmp.ne.s32.totalorder %s71, %s87
    %p89 = scmp.eq.s32.totalorder %s21, 0
    %p90 = por %p88, %p89
    %s91 = ssub.s32 %s22, %s34
    %s92 = ssub.s32 %s23, %s30
    %s93 = sor.u32 %s91, %s92
    %p94 = scmp.eq.s32.totalorder %s93, 0
    %s96 = sadd.s32 %s95, 1
    %s97 = scalar_select %p94, %s95, %s96
    %p100 = pneg %p94
    %p101 = scmp.eq.s32.totalorder %s15, 2
    %p102 = por %p100, %p101
    %p103 = scmp.ne.s32.totalorder %s95, %s98
    %p104 = scmp.eq.s32.totalorder %s15, 0
    %p105 = por %p103, %p104
    %p106 = scmp.ne.s32.totalorder %s95, %s98
    %p107 = scmp.eq.s32.totalorder %s20, 2
    %p108 = por %p106, %p107
    %p109 = scmp.ne.s32.totalorder %s98, %s99
    %p110 = scmp.eq.s32.totalorder %s20, 0
    %p111 = por %p109, %p110
    %p112 = scmp.ne.s32.totalorder %s98, %s99
    %p113 = scmp.eq.s32.totalorder %s21, 2
    %p114 = por %p112, %p113
    %p116 = scmp.ne.s32.totalorder %s99, %s115
    %p117 = scmp.eq.s32.totalorder %s21, 0
    %p118 = por %p116, %p117
    %s119 = ssub.s32 %s22, %s34
    %p120 = scmp.eq.s32.totalorder %s119, 0
    %s122 = sadd.s32 %s121, 1
    %s123 = scalar_select %p120, %s121, %s122
    %p126 = pneg %p120
    %p127 = scmp.eq.s32.totalorder %s15, 2
    %p128 = por %p126, %p127
    %p129 = scmp.ne.s32.totalorder %s121, %s124
    %p130 = scmp.eq.s32.totalorder %s15, 0
    %p131 = por %p129, %p130
    %p132 = scmp.ne.s32.totalorder %s121, %s124
    %p133 = scmp.eq.s32.totalorder %s20, 2
    %p134 = por %p132, %p133
    %p135 = scmp.ne.s32.totalorder %s124, %s125
    %p136 = scmp.eq.s32.totalorder %s20, 0
    %p137 = por %p135, %p136
    %p138 = scmp.ne.s32.totalorder %s124, %s125
    %p139 = scmp.eq.s32.totalorder %s21, 2
    %p140 = por %p138, %p139
    %p142 = scmp.ne.s32.totalorder %s125, %s141
    %p143 = scmp.eq.s32.totalorder %s21, 0
    %p144 = por %p142, %p143
    %s145 = ssub.s32 %s22, %s34
    %p146 = scmp.eq.s32.totalorder %s145, 0
    %s148 = sadd.s32 %s147, 1
    %s149 = scalar_select %p146, %s147, %s148
    %p152 = pneg %p146
    %p153 = scmp.eq.s32.totalorder %s15, 2
    %p154 = por %p152, %p153
    %p155 = scmp.ne.s32.totalorder %s147, %s150
    %p156 = scmp.eq.s32.totalorder %s15, 0
    %p157 = por %p155, %p156
    %p158 = scmp.ne.s32.totalorder %s147, %s150
    %p159 = scmp.eq.s32.totalorder %s20, 2
    %p160 = por %p158, %p159
    %p161 = scmp.ne.s32.totalorder %s150, %s151
    %p162 = scmp.eq.s32.totalorder %s20, 0
    %p163 = por %p161, %p162
    %p164 = scmp.ne.s32.totalorder %s150, %s151
    %p165 = scmp.eq.s32.totalorder %s21, 2
    %p166 = por %p164, %p165
    %p168 = scmp.ne.s32.totalorder %s151, %s167
    %p169 = scmp.eq.s32.totalorder %s21, 0
    %p170 = por %p168, %p169
    %s172 = sadd.s32 %s171, 1
    %p175 = scmp.eq.s32.totalorder %s15, 2
    %p176 = scmp.ne.s32.totalorder %s171, %s173
    %p177 = scmp.eq.s32.totalorder %s15, 0
    %p178 = por %p176, %p177
    %p179 = scmp.ne.s32.totalorder %s171, %s173
    %p180 = scmp.eq.s32.totalorder %s20, 2
    %p181 = por %p179, %p180
    %p182 = scmp.ne.s32.totalorder %s173, %s174
    %p183 = scmp.eq.s32.totalorder %s20, 0
    %p184 = por %p182, %p183
    %p185 = scmp.ne.s32.totalorder %s173, %s174
    %p186 = scmp.eq.s32.totalorder %s21, 2
    %p187 = por %p185, %p186
    %p189 = scmp.ne.s32.totalorder %s174, %s188
    %p190 = scmp.eq.s32.totalorder %s21, 0
    %p191 = por %p189, %p190
    %s193 = sadd.s32 %s192, 1
    %p196 = scmp.eq.s32.totalorder %s15, 2
    %p197 = scmp.ne.s32.totalorder %s192, %s194
    %p198 = scmp.eq.s32.totalorder %s15, 0
    %p199 = por %p197, %p198
    %p200 = scmp.ne.s32.totalorder %s192, %s194
    %p201 = scmp.eq.s32.totalorder %s20, 2
    %p202 = por %p200, %p201
    %p203 = scmp.ne.s32.totalorder %s194, %s195
    %p204 = scmp.eq.s32.totalorder %s20, 0
    %p205 = por %p203, %p204
    %p206 = scmp.ne.s32.totalorder %s194, %s195
    %p207 = scmp.eq.s32.totalorder %s21, 2
    %p208 = por %p206, %p207
    %p210 = scmp.ne.s32.totalorder %s195, %s209
    %p211 = scmp.eq.s32.totalorder %s21, 0
    %p212 = por %p210, %p211
    %s213 = ssub.s32 %s22, %s34
    %p214 = scmp.eq.s32.totalorder %s213, 0
    %s216 = sadd.s32 %s215, 1
    %s217 = scalar_select %p214, %s215, %s216
    %p220 = pneg %p214
    %p221 = scmp.eq.s32.totalorder %s15, 2
    %p222 = por %p220, %p221
    %p223 = scmp.ne.s32.totalorder %s215, %s218
    %p224 = scmp.eq.s32.totalorder %s15, 0
    %p225 = por %p223, %p224
    %p226 = scmp.ne.s32.totalorder %s215, %s218
    %p227 = scmp.eq.s32.totalorder %s20, 2
    %p228 = por %p226, %p227
    %p229 = scmp.ne.s32.totalorder %s218, %s219
    %p230 = scmp.eq.s32.totalorder %s20, 0
    %p231 = por %p229, %p230
    %p232 = scmp.ne.s32.totalorder %s218, %s219
    %p233 = scmp.eq.s32.totalorder %s21, 2
    %p234 = por %p232, %p233
    %p236 = scmp.ne.s32.totalorder %s219, %s235
    %p237 = scmp.eq.s32.totalorder %s21, 0
    %p238 = por %p236, %p237
    %s239 = ssub.s32 %s22, %s34
    %p240 = scmp.eq.s32.totalorder %s239, 0
    %s242 = sadd.s32 %s241, 1
    %s243 = scalar_select %p240, %s241, %s242
    %p246 = pneg %p240
    %p247 = scmp.eq.s32.totalorder %s15, 2
    %p248 = por %p246, %p247
    %p249 = scmp.ne.s32.totalorder %s241, %s244
    %p250 = scmp.eq.s32.totalorder %s15, 0
    %p251 = por %p249, %p250
    %p252 = scmp.ne.s32.totalorder %s241, %s244
    %p253 = scmp.eq.s32.totalorder %s20, 2
    %p254 = por %p252, %p253
    %p255 = scmp.ne.s32.totalorder %s244, %s245
    %p256 = scmp.eq.s32.totalorder %s20, 0
    %p257 = por %p255, %p256
    %p258 = scmp.ne.s32.totalorder %s244, %s245
    %p259 = scmp.eq.s32.totalorder %s21, 2
    %p260 = por %p258, %p259
    %p262 = scmp.ne.s32.totalorder %s245, %s261
    %p263 = scmp.eq.s32.totalorder %s21, 0
    %p264 = por %p262, %p263
    %s265 = ssub.s32 %s22, %s34
    %s266 = ssub.s32 %s23, %s30
    %s267 = sor.u32 %s265, %s266
    %p268 = scmp.eq.s32.totalorder %s267, 0
    %s270 = sadd.s32 %s269, 1
    %s271 = scalar_select %p268, %s269, %s270
    %p274 = pneg %p268
    %p275 = scmp.eq.s32.totalorder %s15, 2
    %p276 = por %p274, %p275
    %p277 = scmp.ne.s32.totalorder %s269, %s272
    %p278 = scmp.eq.s32.totalorder %s15, 0
    %p279 = por %p277, %p278
    %p280 = scmp.ne.s32.totalorder %s269, %s272
    %p281 = scmp.eq.s32.totalorder %s20, 2
    %p282 = por %p280, %p281
    %p283 = scmp.ne.s32.totalorder %s272, %s273
    %p284 = scmp.eq.s32.totalorder %s20, 0
    %p285 = por %p283, %p284
    %p286 = scmp.ne.s32.totalorder %s272, %s273
    %p287 = scmp.eq.s32.totalorder %s21, 2
    %p288 = por %p286, %p287
    %p290 = scmp.ne.s32.totalorder %s273, %s289
    %p291 = scmp.eq.s32.totalorder %s21, 0
    %p292 = por %p290, %p291
    %p293 = scmp.le.s32.totalorder 1, %s15
    %p294 = scmp.lt.s32.totalorder %s15, 4
    %p295 = pnand %p293, %p294
    %p296 = pneg %p295
    // Predicated region
    $region9: #{attention_actor_forward.1} parent=5 // pred_check
      _
    $region10: #{attention_actor_forward.1} parent=5 // pred_check_branch
      %298 = sbr.rel (%p295) target = $region12
    $region11: #{attention_actor_forward.1} parent=5 // pred_region
      %s299 = ssub.s32 %s15, 1
      // Predicated region
      $region13: #{attention_actor_forward.1} parent=11 // pred_check
        %p300 = pneg %p184
      $region14: #{attention_actor_forward.1} parent=11 // pred_check_branch
        %302 = sbr.rel (%p300) target = $region16
      $region15: #{attention_actor_forward.1} parent=11 // pred_region
        _
      $region16: #{attention_actor_forward.1} parent=11 // pred_fallthru
        _
      // Predicated region
      $region17: #{attention_actor_forward.1} parent=11 // pred_check
        %p303 = pneg %p205
      $region18: #{attention_actor_forward.1} parent=11 // pred_check_branch
        %305 = sbr.rel (%p303) target = $region20
      $region19: #{attention_actor_forward.1} parent=11 // pred_region
        _
      $region20: #{attention_actor_forward.1} parent=11 // pred_fallthru
        _
    $region12: #{attention_actor_forward.1} parent=5 // pred_fallthru
      _
    %p306 = scmp.lt.s32.totalorder %s15, 3
    // Predicated region
    $region21: #{attention_actor_forward.1} parent=5 // pred_check
      %p307 = pneg %p306
    $region22: #{attention_actor_forward.1} parent=5 // pred_check_branch
      %309 = sbr.rel (%p307) target = $region24
    $region23: #{attention_actor_forward.1} parent=5 // pred_region
      // Predicated region
      $region25: #{attention_actor_forward.1} parent=23 // pred_check
        %p310 = pneg %p49
      $region26: #{attention_actor_forward.1} parent=23 // pred_check_branch
        %312 = sbr.rel (%p310) target = $region28
      $region27: #{attention_actor_forward.1} parent=23 // pred_region
        %s313 = smul.u32 8, %s23
        %p314 = scmp.lt.s32.totalorder %s22, 2
        %s315 = scalar_select %p314, %s22, 2
        %p316 = scmp.lt.s32.totalorder %s313, 7
        %s317 = scalar_select %p316, %s313, 7
        %s318 = smul.addr %s315, 8
        %s319 = sadd.s32 %s317, %s318
        %s320 = smul.addr %s319, 8
        %s321 = scalar_lea.vmem %s0, %s320
        %s322 = smul.u32 8, %s23
      $region28: #{attention_actor_forward.1} parent=23 // pred_fallthru
        _
      // Predicated region
      $region29: #{attention_actor_forward.1} parent=23 // pred_check
        %p323 = pneg %p77
      $region30: #{attention_actor_forward.1} parent=23 // pred_check_branch
        %325 = sbr.rel (%p323) target = $region32
      $region31: #{attention_actor_forward.1} parent=23 // pred_region
        %s326 = smul.u32 8, %s23
        %p327 = scmp.lt.s32.totalorder %s22, 2
        %s328 = scalar_select %p327, %s22, 2
        %p329 = scmp.lt.s32.totalorder %s326, 7
        %s330 = scalar_select %p329, %s326, 7
        %s331 = smul.addr %s328, 16
        %s332 = sadd.s32 %s330, %s331
        %s333 = smul.addr %s332, 8
        %s334 = scalar_lea.vmem %s1, %s333
        %s335 = smul.u32 8, %s23
      $region32: #{attention_actor_forward.1} parent=23 // pred_fallthru
        _
      // Predicated region
      $region33: #{attention_actor_forward.1} parent=23 // pred_check
        %p336 = pneg %p105
      $region34: #{attention_actor_forward.1} parent=23 // pred_check_branch
        %338 = sbr.rel (%p336) target = $region36
      $region35: #{attention_actor_forward.1} parent=23 // pred_region
        %s339 = smul.u32 8, %s23
        %p340 = scmp.lt.s32.totalorder %s22, 2
        %s341 = scalar_select %p340, %s22, 2
        %p342 = scmp.lt.s32.totalorder %s339, 7
        %s343 = scalar_select %p342, %s339, 7
        %s344 = smul.addr %s341, 24
        %s345 = sadd.s32 %s343, %s344
        %s346 = smul.addr %s345, 8
        %s347 = scalar_lea.vmem %s2, %s346
        %s348 = smul.u32 8, %s23
      $region36: #{attention_actor_forward.1} parent=23 // pred_fallthru
        _
      // Predicated region
      $region37: #{attention_actor_forward.1} parent=23 // pred_check
        %p349 = pneg %p131
      $region38: #{attention_actor_forward.1} parent=23 // pred_check_branch
        %351 = sbr.rel (%p349) target = $region40
      $region39: #{attention_actor_forward.1} parent=23 // pred_region
        %p352 = scmp.lt.s32.totalorder %s22, 2
        %s353 = scalar_select %p352, %s22, 2
        %s354 = smul.addr %s353, 2
        %s355 = smul.addr %s354, 8
        %s356 = scalar_lea.vmem %s3, %s355
      $region40: #{attention_actor_forward.1} parent=23 // pred_fallthru
        _
      // Predicated region
      $region41: #{attention_actor_forward.1} parent=23 // pred_check
        %p357 = pneg %p157
      $region42: #{attention_actor_forward.1} parent=23 // pred_check_branch
        %359 = sbr.rel (%p357) target = $region44
      $region43: #{attention_actor_forward.1} parent=23 // pred_region
        %p360 = scmp.lt.s32.totalorder %s22, 2
        %s361 = scalar_select %p360, %s22, 2
        %s362 = smul.addr %s361, 4
        %s363 = scalar_lea.vmem %s4, %s362
      $region44: #{attention_actor_forward.1} parent=23 // pred_fallthru
        _
      // Predicated region
      $region45: #{attention_actor_forward.1} parent=23 // pred_check
        %p364 = pneg %p225
      $region46: #{attention_actor_forward.1} parent=23 // pred_check_branch
        %366 = sbr.rel (%p364) target = $region48
      $region47: #{attention_actor_forward.1} parent=23 // pred_region
        %p367 = scmp.lt.s32.totalorder %s22, 2
        %s368 = scalar_select %p367, %s22, 2
        %s369 = smul.addr %s368, 12
        %s370 = smul.addr %s369, 8
        %s371 = scalar_lea.vmem %s7, %s370
      $region48: #{attention_actor_forward.1} parent=23 // pred_fallthru
        _
      // Predicated region
      $region49: #{attention_actor_forward.1} parent=23 // pred_check
        %p372 = pneg %p251
      $region50: #{attention_actor_forward.1} parent=23 // pred_check_branch
        %374 = sbr.rel (%p372) target = $region52
      $region51: #{attention_actor_forward.1} parent=23 // pred_region
        %p375 = scmp.lt.s32.totalorder %s22, 2
        %s376 = scalar_select %p375, %s22, 2
        %s377 = scalar_lea.vmem %s8, %s376
      $region52: #{attention_actor_forward.1} parent=23 // pred_fallthru
        _
    $region24: #{attention_actor_forward.1} parent=5 // pred_fallthru
      _
    %p378 = scmp.le.s32.totalorder 1, %s15
    %p379 = scmp.lt.s32.totalorder %s15, 4
    %p380 = pnand %p378, %p379
    %p381 = pneg %p380
    // Predicated region
    $region53: #{attention_actor_forward.1} parent=5 // pred_check
      _
    $region54: #{attention_actor_forward.1} parent=5 // pred_check_branch
      %383 = sbr.rel (%p380) target = $region56
    $region55: #{attention_actor_forward.1} parent=5 // pred_region
      %s384 = ssub.s32 %s15, 1
      %s385 = smul.u32 8, %s25
      %p386 = scmp.lt.s32.totalorder %s24, 2
      %s387 = scalar_select %p386, %s24, 2
      %p388 = scmp.lt.s32.totalorder %s385, 7
      %s389 = scalar_select %p388, %s385, 7
      %s390 = smul.addr %s387, 8
      %s391 = sadd.s32 %s389, %s390
      %s392 = smul.addr %s391, 8
      %s393 = scalar_lea.vmem %s0, %s392
      %p394 = pneg %p55
      %p395 = pneg %p52
      %s396 = smul.u32 8, %s25
      %p397 = scmp.lt.s32.totalorder %s24, 2
      %s398 = scalar_select %p397, %s24, 2
      %p399 = scmp.lt.s32.totalorder %s396, 7
      %s400 = scalar_select %p399, %s396, 7
      %s401 = smul.addr %s398, 16
      %s402 = sadd.s32 %s400, %s401
      %s403 = smul.addr %s402, 8
      %s404 = scalar_lea.vmem %s1, %s403
      %p405 = pneg %p83
      %p406 = pneg %p80
      %s407 = smul.u32 8, %s25
      %p408 = scmp.lt.s32.totalorder %s24, 2
      %s409 = scalar_select %p408, %s24, 2
      %p410 = scmp.lt.s32.totalorder %s407, 7
      %s411 = scalar_select %p410, %s407, 7
      %s412 = smul.addr %s409, 24
      %s413 = sadd.s32 %s411, %s412
      %s414 = smul.addr %s413, 8
      %s415 = scalar_lea.vmem %s2, %s414
      %p416 = pneg %p111
      %p417 = pneg %p108
      %p418 = scmp.lt.s32.totalorder %s24, 2
      %s419 = scalar_select %p418, %s24, 2
      %s420 = smul.addr %s419, 2
      %s421 = smul.addr %s420, 8
      %s422 = scalar_lea.vmem %s3, %s421
      %p423 = pneg %p137
      %p424 = pneg %p134
      %p425 = scmp.lt.s32.totalorder %s24, 2
      %s426 = scalar_select %p425, %s24, 2
      %s427 = smul.addr %s426, 4
      %s428 = scalar_lea.vmem %s4, %s427
      %p429 = pneg %p163
      %p430 = pneg %p160
      %p431 = pneg %p184
      %p432 = pneg %p181
      %p433 = pneg %p205
      %p434 = pneg %p202
      %p435 = scmp.lt.s32.totalorder %s24, 2
      %s436 = scalar_select %p435, %s24, 2
      %s437 = smul.addr %s436, 12
      %s438 = smul.addr %s437, 8
      %s439 = scalar_lea.vmem %s7, %s438
      %p440 = pneg %p231
      %p441 = pneg %p228
      %p442 = scmp.lt.s32.totalorder %s24, 2
      %s443 = scalar_select %p442, %s24, 2
      %s444 = scalar_lea.vmem %s8, %s443
      %p445 = pneg %p257
      %p446 = pneg %p254
      %p447 = pneg %p285
      %p448 = pneg %p282
      %s449 = smul.u32 8, %s25
      %p450 = scmp.lt.s32.totalorder %s24, 2
      %s451 = scalar_select %p450, %s24, 2
      %p452 = scmp.lt.s32.totalorder %s449, 7
      %s453 = scalar_select %p452, %s449, 7
      %s454 = smul.addr %s451, 8
      %s455 = sadd.s32 %s453, %s454
      %s456 = smul.addr %s455, 8
      %s457 = scalar_lea.vmem %s9, %s456
      %s458 = smul.u32 8, %s25
      %p459 = scmp.lt.s32.totalorder %s24, 2
      %s460 = scalar_select %p459, %s24, 2
      %p461 = scmp.lt.s32.totalorder %s458, 7
      %s462 = scalar_select %p461, %s458, 7
      %s463 = smul.addr %s460, 8
      %s464 = sadd.s32 %s462, %s463
      %s465 = smul.addr %s464, 8
      %s466 = scalar_lea.vmem %s0, %s465
      %s467 = smul.u32 8, %s25
      %s468 = smul.u32 8, %s25
      %p469 = scmp.lt.s32.totalorder %s24, 2
      %s470 = scalar_select %p469, %s24, 2
      %p471 = scmp.lt.s32.totalorder %s468, 7
      %s472 = scalar_select %p471, %s468, 7
      %s473 = smul.addr %s470, 16
      %s474 = sadd.s32 %s472, %s473
      %s475 = smul.addr %s474, 8
      %s476 = scalar_lea.vmem %s1, %s475
      %s477 = smul.u32 8, %s25
      %s478 = smul.u32 8, %s25
      %p479 = scmp.lt.s32.totalorder %s24, 2
      %s480 = scalar_select %p479, %s24, 2
      %p481 = scmp.lt.s32.totalorder %s478, 7
      %s482 = scalar_select %p481, %s478, 7
      %s483 = smul.addr %s480, 24
      %s484 = sadd.s32 %s482, %s483
      %s485 = smul.addr %s484, 8
      %s486 = scalar_lea.vmem %s2, %s485
      %s487 = smul.u32 8, %s25
      %p488 = scmp.lt.s32.totalorder %s24, 2
      %s489 = scalar_select %p488, %s24, 2
      %s490 = smul.addr %s489, 2
      %s491 = smul.addr %s490, 8
      %s492 = scalar_lea.vmem %s3, %s491
      %p493 = scmp.lt.s32.totalorder %s24, 2
      %s494 = scalar_select %p493, %s24, 2
      %s495 = smul.addr %s494, 4
      %s496 = scalar_lea.vmem %s4, %s495
      %p497 = scmp.lt.s32.totalorder %s24, 2
      %s498 = scalar_select %p497, %s24, 2
      %s499 = smul.addr %s498, 12
      %s500 = smul.addr %s499, 8
      %s501 = scalar_lea.vmem %s7, %s500
      %p502 = scmp.lt.s32.totalorder %s24, 2
      %s503 = scalar_select %p502, %s24, 2
      %s504 = scalar_lea.vmem %s8, %s503
      %s505 = smul.u32 8, %s25
      %p506 = scmp.lt.s32.totalorder %s24, 2
      %s507 = scalar_select %p506, %s24, 2
      %p508 = scmp.lt.s32.totalorder %s505, 7
      %s509 = scalar_select %p508, %s505, 7
      %s510 = smul.addr %s507, 8
      %s511 = sadd.s32 %s509, %s510
      %s512 = smul.addr %s511, 8
      %s513 = scalar_lea.vmem %s9, %s512
      %s514 = smul.u32 8, %s25
      %v515 = vld [vmem:[%s492] sm:$0xff]
      %v516 = vld [vmem:[%s492 + $0x8] sm:$0x3]
      %v517 = vld [vmem:[%s496] sm:$0x7]
      %v518 = vld [vmem:[%s5] sm:$0xff]
      %v519 = vld [vmem:[%s5 + $0x8] sm:$0xff]
      %v520 = vld [vmem:[%s5 + $0x10] sm:$0xff]
      %v521 = vld [vmem:[%s5 + $0x18] sm:$0xff]
      %v522 = vld [vmem:[%s5 + $0x20] sm:$0xff]
      %v523 = vld [vmem:[%s5 + $0x28] sm:$0xff]
      %v524 = vld [vmem:[%s5 + $0x30] sm:$0xff]
      %v525 = vld [vmem:[%s5 + $0x38] sm:$0xff]
      %v526 = vld [vmem:[%s5 + $0x40] sm:$0xff]
      %v527 = vld [vmem:[%s5 + $0x48] sm:$0xff]
      %v528 = vld [vmem:[%s5 + $0x50] sm:$0xff]
      %v529 = vld [vmem:[%s5 + $0x58] sm:$0xff]
      %v530 = vld [vmem:[%s5 + $0x60] sm:$0xff]
      %v531 = vld [vmem:[%s5 + $0x68] sm:$0xff]
      %v532 = vld [vmem:[%s5 + $0x70] sm:$0xff]
      %v533 = vld [vmem:[%s5 + $0x78] sm:$0xff]
      %v534 = vld [vmem:[%s5 + $0x80] sm:$0xff]
      %v535 = vld [vmem:[%s5 + $0x88] sm:$0xff]
      %v536 = vld [vmem:[%s5 + $0x90] sm:$0xff]
      %v537 = vld [vmem:[%s5 + $0x98] sm:$0xff]
      %v538 = vld [vmem:[%s5 + $0xa0] sm:$0xff]
      %v539 = vld [vmem:[%s5 + $0xa8] sm:$0xff]
      %v540 = vld [vmem:[%s5 + $0xb0] sm:$0xff]
      %v541 = vld [vmem:[%s5 + $0xb8] sm:$0xff]
      %v542 = vld [vmem:[%s6] sm:$0x3]
      %v543 = vld [vmem:[%s501] sm:$0xff]
      %v544 = vld [vmem:[%s501 + $0x8] sm:$0xff]
      %v545 = vld [vmem:[%s501 + $0x10] sm:$0xff]
      %v546 = vld [vmem:[%s501 + $0x18] sm:$0xff]
      %v547 = vld [vmem:[%s501 + $0x20] sm:$0xff]
      %v548 = vld [vmem:[%s501 + $0x28] sm:$0xff]
      %v549 = vld [vmem:[%s501 + $0x30] sm:$0xff]
      %v550 = vld [vmem:[%s501 + $0x38] sm:$0xff]
      %v551 = vld [vmem:[%s501 + $0x40] sm:$0xff]
      %v552 = vld [vmem:[%s501 + $0x48] sm:$0xff]
      %v553 = vld [vmem:[%s501 + $0x50] sm:$0xff]
      %v554 = vld [vmem:[%s501 + $0x58] sm:$0xff]
      %v555 = vld [vmem:[%s504] sm:$0x1]
      %v556 = vld [vmem:[%s466] sm:$0xff]
      %v557 = vld [vmem:[%s466 + $0x8] sm:$0xff]
      %v558 = vld [vmem:[%s466 + $0x10] sm:$0xff]
      %v559 = vld [vmem:[%s466 + $0x18] sm:$0xff]
      %v560 = vld [vmem:[%s466 + $0x20] sm:$0xff]
      %v561 = vld [vmem:[%s466 + $0x28] sm:$0xff]
      %v562 = vld [vmem:[%s466 + $0x30] sm:$0xff]
      %v563 = vld [vmem:[%s466 + $0x38] sm:$0xff]
      %v564 = vlaneseq
      %v565 = vshrl.u32 %v564, 7
      %v566 = vsub.s32 0, %v565
      %v567 = vrot.slane %v517, %v566
      %vm568 = vcmask 31744
      %v570 = vsel %vm568, %v556, 0
      %v573 = vsel %vm568, %v557, 0
      %v576 = vsel %vm568, %v558, 0
      %v579 = vsel %vm568, %v559, 0
      %v582 = vsel %vm568, %v560, 0
      %v585 = vsel %vm568, %v561, 0
      %v588 = vsel %vm568, %v562, 0
      %v591 = vsel %vm568, %v563, 0
      %vm593 = vcmask 1043456
      %v595 = vsel %vm593, %v515, 0
      %597 = vmatprep.subr.mxu0 0.0
      %598 = vmatpush1.msra.mxu0 %v595
      %599 = vmatprep.subr.mxu0 0.0
      %600 = vmatpush1.msra.mxu0 0.0
      %601 = vmatprep.subr.mxu0 0.0
      %602 = vmatpush1.msra.mxu0 0.0
      %603 = vmatprep.subr.mxu0 0.0
      %604 = vmatpush1.msra.mxu0 0.0
      %605 = vmatprep.subr.mxu0 0.0
      %606 = vmatpush1.msra.mxu0 0.0
      %607 = vmatprep.subr.mxu0 0.0
      %608 = vmatpush1.msra.mxu0 0.0
      %609 = vmatprep.subr.mxu0 0.0
      %610 = vmatpush1.msra.mxu0 0.0
      %611 = vmatprep.subr.mxu0 0.0
      %612 = vmatpush1.msra.mxu0 0.0
      %613 = vmatprep.subr.mxu0 0.0
      %614 = vmatpush1.msra.mxu0 0.0
      %615 = vmatprep.subr.mxu0 0.0
      %616 = vmatpush1.msra.mxu0 0.0
      %617 = vmatprep.subr.mxu0 0.0
      %618 = vmatpush1.msra.mxu0 0.0
      %619 = vmatprep.subr.mxu0 0.0
      %620 = vmatpush1.msra.mxu0 0.0
      %621 = vmatprep.subr.mxu0 0.0
      %622 = vmatpush1.msra.mxu0 0.0
      %623 = vmatprep.subr.mxu0 0.0
      %624 = vmatpush1.msra.mxu0 0.0
      %625 = vmatprep.subr.mxu0 0.0
      %626 = vmatpush1.msra.mxu0 0.0
      %627 = vmatprep.subr.mxu0 0.0
      %628 = vmatpush1.msra.mxu0 0.0
      %629 = vmatprep.subr.mxu0 0.0
      %630 = vmatpush1.msra.mxu0 0.0
      %631 = vmatprep.subr.mxu0 0.0
      %632 = vmatpush1.msra.mxu0 0.0
      %633 = vmatprep.subr.mxu0 0.0
      %634 = vmatpush1.msra.mxu0 0.0
      %635 = vmatprep.subr.mxu0 0.0
      %636 = vmatpush1.msra.mxu0 0.0
      %637 = vmatprep.subr.mxu0 0.0
      %638 = vmatpush1.msra.mxu0 0.0
      %639 = vmatprep.subr.mxu0 0.0
      %640 = vmatpush1.msra.mxu0 0.0
      %641 = vmatprep.subr.mxu0 0.0
      %642 = vmatpush1.msra.mxu0 0.0
      %643 = vmatprep.subr.mxu0 0.0
      %644 = vmatpush1.msra.mxu0 0.0
      %645 = vmatprep.subr.mxu0 0.0
      %646 = vmatpush1.msra.mxu0 0.0
      %647 = vmatprep.subr.mxu0 0.0
      %648 = vmatpush1.msra.mxu0 0.0
      %649 = vmatprep.subr.mxu0 0.0
      %650 = vmatpush1.msra.mxu0 0.0
      %651 = vmatprep.subr.mxu0 0.0
      %652 = vmatpush1.msra.mxu0 0.0
      %653 = vmatprep.subr.mxu0 0.0
      %654 = vmatpush1.msra.mxu0 0.0
      %655 = vmatprep.subr.mxu0 0.0
      %656 = vmatpush1.msra.mxu0 0.0
      %657 = vmatprep.subr.mxu0 0.0
      %658 = vmatpush1.msra.mxu0 0.0
      %659 = vmatprep.subr.mxu0 0.0
      %660 = vmatpush1.msra.mxu0 0.0
      %661 = vmatprep.mubr.f32.mxu0 0.0
      %662 = vmatmul.mubr.f32.gmra.mrb[0].mxu0 %v570
      %v663 = vpop.f32.mrb[0].mxu0
      %v664 = vadd.f32 %v567, %v663
      %v665 = vpop.f32.mrb[0].mxu0
      %666 = vmatprep.mubr.f32.mxu0 0.0
      %667 = vmatmul.mubr.f32.gmra.mrb[0].mxu0 %v573
      %v668 = vpop.f32.mrb[0].mxu0
      %v669 = vadd.f32 %v567, %v668
      %v670 = vpop.f32.mrb[0].mxu0
      %671 = vmatprep.mubr.f32.mxu0 0.0
      %672 = vmatmul.mubr.f32.gmra.mrb[0].mxu0 %v576
      %v673 = vpop.f32.mrb[0].mxu0
      %v674 = vadd.f32 %v567, %v673
      %v675 = vpop.f32.mrb[0].mxu0
      %676 = vmatprep.mubr.f32.mxu0 0.0
      %677 = vmatmul.mubr.f32.gmra.mrb[0].mxu0 %v579
      %v678 = vpop.f32.mrb[0].mxu0
      %v679 = vadd.f32 %v567, %v678
      %v680 = vpop.f32.mrb[0].mxu0
      %681 = vmatprep.mubr.f32.mxu0 0.0
      %682 = vmatmul.mubr.f32.gmra.mrb[0].mxu0 %v582
      %v683 = vpop.f32.mrb[0].mxu0
      %v684 = vadd.f32 %v567, %v683
      %v685 = vpop.f32.mrb[0].mxu0
      %686 = vmatprep.mubr.f32.mxu0 0.0
      %687 = vmatmul.mubr.f32.gmra.mrb[0].mxu0 %v585
      %v688 = vpop.f32.mrb[0].mxu0
      %v689 = vadd.f32 %v567, %v688
      %v690 = vpop.f32.mrb[0].mxu0
      %691 = vmatprep.mubr.f32.mxu0 0.0
      %692 = vmatmul.mubr.f32.gmra.mrb[0].mxu0 %v588
      %v693 = vpop.f32.mrb[0].mxu0
      %v694 = vadd.f32 %v567, %v693
      %v695 = vpop.f32.mrb[0].mxu0
      %696 = vmatprep.mubr.f32.mxu0 0.0
      %697 = vmatmul.mubr.f32.gmra.mrb[0].mxu0 %v591
      %v698 = vpop.f32.mrb[0].mxu0
      %v699 = vadd.f32 %v567, %v698
      %v700 = vpop.f32.mrb[0].mxu0
      %701 = vdwg.mxu0
      %vm702 = vcmp.gt.f32.partialorder %v664, 0.0
      %vm703 = vcmp.gt.f32.partialorder %v669, 0.0
      %vm704 = vcmp.gt.f32.partialorder %v674, 0.0
      %vm705 = vcmp.gt.f32.partialorder %v679, 0.0
      %vm706 = vcmp.gt.f32.partialorder %v684, 0.0
      %vm707 = vcmp.gt.f32.partialorder %v689, 0.0
      %vm708 = vcmp.gt.f32.partialorder %v694, 0.0
      %vm709 = vcmp.gt.f32.partialorder %v699, 0.0
      %v710 = vmul.f32 %v664, 0.01
      %v711 = vmul.f32 %v669, 0.01
      %v712 = vmul.f32 %v674, 0.01
      %v713 = vmul.f32 %v679, 0.01
      %v714 = vmul.f32 %v684, 0.01
      %v715 = vmul.f32 %v689, 0.01
      %v716 = vmul.f32 %v694, 0.01
      %v717 = vmul.f32 %v699, 0.01
      %v718 = vsel %vm702, %v664, %v710
      %v719 = vsel %vm703, %v669, %v711
      %v720 = vsel %vm704, %v674, %v712
      %v721 = vsel %vm705, %v679, %v713
      %v722 = vsel %vm706, %v684, %v714
      %v723 = vsel %vm707, %v689, %v715
      %v724 = vsel %vm708, %v694, %v716
      %v725 = vsel %vm709, %v699, %v717
      %v726 = vld [vmem:[%s476] sm:$0xff]
      %v727 = vld [vmem:[%s476 + $0x8] sm:$0xff]
      %v728 = vld [vmem:[%s476 + $0x10] sm:$0xff]
      %v729 = vld [vmem:[%s476 + $0x18] sm:$0xff]
      %v730 = vld [vmem:[%s476 + $0x20] sm:$0xff]
      %v731 = vld [vmem:[%s476 + $0x28] sm:$0xff]
      %v732 = vld [vmem:[%s476 + $0x30] sm:$0xff]
      %v733 = vld [vmem:[%s476 + $0x38] sm:$0xff]
      %v734 = vld [vmem:[%s476 + $0x40] sm:$0xff]
      %v735 = vld [vmem:[%s476 + $0x48] sm:$0xff]
      %v736 = vld [vmem:[%s476 + $0x50] sm:$0xff]
      %v737 = vld [vmem:[%s476 + $0x58] sm:$0xff]
      %v738 = vld [vmem:[%s476 + $0x60] sm:$0xff]
      %v739 = vld [vmem:[%s476 + $0x68] sm:$0xff]
      %v740 = vld [vmem:[%s476 + $0x70] sm:$0xff]
      %v741 = vld [vmem:[%s476 + $0x78] sm:$0xff]
      %v742 = vlaneseq
      %v743 = vshrl.u32 %v742, 7
      %v744 = vsub.s32 1, %v743
      %v745 = vrot.slane %v517, %v744
      %v746 = vrot.slane %v515, 4
      %v748 = vsel %vm568, %v726, 0
      %v751 = vsel %vm568, %v727, 0
      %v754 = vsel %vm568, %v728, 0
      %v757 = vsel %vm568, %v729, 0
      %v760 = vsel %vm568, %v730, 0
      %v763 = vsel %vm568, %v731, 0
      %v766 = vsel %vm568, %v732, 0
      %v769 = vsel %vm568, %v733, 0
      %v772 = vsel %vm568, %v734, 0
      %v775 = vsel %vm568, %v735, 0
      %v778 = vsel %vm568, %v736, 0
      %v781 = vsel %vm568, %v737, 0
      %v784 = vsel %vm568, %v738, 0
      %v787 = vsel %vm568, %v739, 0
      %v790 = vsel %vm568, %v740, 0
      %v793 = vsel %vm568, %v741, 0
      %v795 = vsel %vm593, %v746, 0
      %797 = vmatprep.subr.mxu0 0.0
      %798 = vmatpush1.msra.mxu0 %v795
      %799 = vmatprep.subr.mxu0 0.0
      %800 = vmatpush1.msra.mxu0 0.0
      %801 = vmatprep.subr.mxu0 0.0
      %802 = vmatpush1.msra.mxu0 0.0
      %803 = vmatprep.subr.mxu0 0.0
      %804 = vmatpush1.msra.mxu0 0.0
      %805 = vmatprep.subr.mxu0 0.0
      %806 = vmatpush1.msra.mxu0 0.0
      %807 = vmatprep.subr.mxu0 0.0
      %808 = vmatpush1.msra.mxu0 0.0
      %809 = vmatprep.subr.mxu0 0.0
      %810 = vmatpush1.msra.mxu0 0.0
      %811 = vmatprep.subr.mxu0 0.0
      %812 = vmatpush1.msra.mxu0 0.0
      %813 = vmatprep.subr.mxu0 0.0
      %814 = vmatpush1.msra.mxu0 0.0
      %815 = vmatprep.subr.mxu0 0.0
      %816 = vmatpush1.msra.mxu0 0.0
      %817 = vmatprep.subr.mxu0 0.0
      %818 = vmatpush1.msra.mxu0 0.0
      %819 = vmatprep.subr.mxu0 0.0
      %820 = vmatpush1.msra.mxu0 0.0
      %821 = vmatprep.subr.mxu0 0.0
      %822 = vmatpush1.msra.mxu0 0.0
      %823 = vmatprep.subr.mxu0 0.0
      %824 = vmatpush1.msra.mxu0 0.0
      %825 = vmatprep.subr.mxu0 0.0
      %826 = vmatpush1.msra.mxu0 0.0
      %827 = vmatprep.subr.mxu0 0.0
      %828 = vmatpush1.msra.mxu0 0.0
      %829 = vmatprep.subr.mxu0 0.0
      %830 = vmatpush1.msra.mxu0 0.0
      %831 = vmatprep.subr.mxu0 0.0
      %832 = vmatpush1.msra.mxu0 0.0
      %833 = vmatprep.subr.mxu0 0.0
      %834 = vmatpush1.msra.mxu0 0.0
      %835 = vmatprep.subr.mxu0 0.0
      %836 = vmatpush1.msra.mxu0 0.0
      %837 = vmatprep.subr.mxu0 0.0
      %838 = vmatpush1.msra.mxu0 0.0
      %839 = vmatprep.subr.mxu0 0.0
      %840 = vmatpush1.msra.mxu0 0.0
      %841 = vmatprep.subr.mxu0 0.0
      %842 = vmatpush1.msra.mxu0 0.0
      %843 = vmatprep.subr.mxu0 0.0
      %844 = vmatpush1.msra.mxu0 0.0
      %845 = vmatprep.subr.mxu0 0.0
      %846 = vmatpush1.msra.mxu0 0.0
      %847 = vmatprep.subr.mxu0 0.0
      %848 = vmatpush1.msra.mxu0 0.0
      %849 = vmatprep.subr.mxu0 0.0
      %850 = vmatpush1.msra.mxu0 0.0
      %851 = vmatprep.subr.mxu0 0.0
      %852 = vmatpush1.msra.mxu0 0.0
      %853 = vmatprep.subr.mxu0 0.0
      %854 = vmatpush1.msra.mxu0 0.0
      %855 = vmatprep.subr.mxu0 0.0
      %856 = vmatpush1.msra.mxu0 0.0
      %857 = vmatprep.subr.mxu0 0.0
      %858 = vmatpush1.msra.mxu0 0.0
      %859 = vmatprep.subr.mxu0 0.0
      %860 = vmatpush1.msra.mxu0 0.0
      %861 = vmatprep.mubr.f32.mxu0 0.0
      %862 = vmatmul.mubr.f32.gmra.mrb[0].mxu0 %v748
      %v863 = vpop.f32.mrb[0].mxu0
      %v864 = vadd.f32 %v745, %v863
      %v865 = vpop.f32.mrb[0].mxu0
      %866 = vmatprep.mubr.f32.mxu0 0.0
      %867 = vmatmul.mubr.f32.gmra.mrb[0].mxu0 %v751
      %v868 = vpop.f32.mrb[0].mxu0
      %v869 = vadd.f32 %v745, %v868
      %v870 = vpop.f32.mrb[0].mxu0
      %871 = vmatprep.mubr.f32.mxu0 0.0
      %872 = vmatmul.mubr.f32.gmra.mrb[0].mxu0 %v754
      %v873 = vpop.f32.mrb[0].mxu0
      %v874 = vadd.f32 %v745, %v873
      %v875 = vpop.f32.mrb[0].mxu0
      %876 = vmatprep.mubr.f32.mxu0 0.0
      %877 = vmatmul.mubr.f32.gmra.mrb[0].mxu0 %v757
      %v878 = vpop.f32.mrb[0].mxu0
      %v879 = vadd.f32 %v745, %v878
      %v880 = vpop.f32.mrb[0].mxu0
      %881 = vmatprep.mubr.f32.mxu0 0.0
      %882 = vmatmul.mubr.f32.gmra.mrb[0].mxu0 %v760
      %v883 = vpop.f32.mrb[0].mxu0
      %v884 = vadd.f32 %v745, %v883
      %v885 = vpop.f32.mrb[0].mxu0
      %886 = vmatprep.mubr.f32.mxu0 0.0
      %887 = vmatmul.mubr.f32.gmra.mrb[0].mxu0 %v763
      %v888 = vpop.f32.mrb[0].mxu0
      %v889 = vadd.f32 %v745, %v888
      %v890 = vpop.f32.mrb[0].mxu0
      %891 = vmatprep.mubr.f32.mxu0 0.0
      %892 = vmatmul.mubr.f32.gmra.mrb[0].mxu0 %v766
      %v893 = vpop.f32.mrb[0].mxu0
      %v894 = vadd.f32 %v745, %v893
      %v895 = vpop.f32.mrb[0].mxu0
      %896 = vmatprep.mubr.f32.mxu0 0.0
      %897 = vmatmul.mubr.f32.gmra.mrb[0].mxu0 %v769
      %v898 = vpop.f32.mrb[0].mxu0
      %v899 = vadd.f32 %v745, %v898
      %v900 = vpop.f32.mrb[0].mxu0
      %901 = vmatprep.mubr.f32.mxu0 0.0
      %902 = vmatmul.mubr.f32.gmra.mrb[0].mxu0 %v772
      %v903 = vpop.f32.mrb[0].mxu0
      %v904 = vadd.f32 %v745, %v903
      %v905 = vpop.f32.mrb[0].mxu0
      %906 = vmatprep.mubr.f32.mxu0 0.0
      %907 = vmatmul.mubr.f32.gmra.mrb[0].mxu0 %v775
      %v908 = vpop.f32.mrb[0].mxu0
      %v909 = vadd.f32 %v745, %v908
      %v910 = vpop.f32.mrb[0].mxu0
      %911 = vmatprep.mubr.f32.mxu0 0.0
      %912 = vmatmul.mubr.f32.gmra.mrb[0].mxu0 %v778
      %v913 = vpop.f32.mrb[0].mxu0
      %v914 = vadd.f32 %v745, %v913
      %v915 = vpop.f32.mrb[0].mxu0
      %916 = vmatprep.mubr.f32.mxu0 0.0
      %917 = vmatmul.mubr.f32.gmra.mrb[0].mxu0 %v781
      %v918 = vpop.f32.mrb[0].mxu0
      %v919 = vadd.f32 %v745, %v918
      %v920 = vpop.f32.mrb[0].mxu0
      %921 = vmatprep.mubr.f32.mxu0 0.0
      %922 = vmatmul.mubr.f32.gmra.mrb[0].mxu0 %v784
      %v923 = vpop.f32.mrb[0].mxu0
      %v924 = vadd.f32 %v745, %v923
      %v925 = vpop.f32.mrb[0].mxu0
      %926 = vmatprep.mubr.f32.mxu0 0.0
      %927 = vmatmul.mubr.f32.gmra.mrb[0].mxu0 %v787
      %v928 = vpop.f32.mrb[0].mxu0
      %v929 = vadd.f32 %v745, %v928
      %v930 = vpop.f32.mrb[0].mxu0
      %931 = vmatprep.mubr.f32.mxu0 0.0
      %932 = vmatmul.mubr.f32.gmra.mrb[0].mxu0 %v790
      %v933 = vpop.f32.mrb[0].mxu0
      %v934 = vadd.f32 %v745, %v933
      %v935 = vpop.f32.mrb[0].mxu0
      %936 = vmatprep.mubr.f32.mxu0 0.0
      %937 = vmatmul.mubr.f32.gmra.mrb[0].mxu0 %v793
      %v938 = vpop.f32.mrb[0].mxu0
      %v939 = vadd.f32 %v745, %v938
      %v940 = vpop.f32.mrb[0].mxu0
      %941 = vdwg.mxu0
      %vm942 = vcmp.gt.f32.partialorder %v864, 0.0
      %vm943 = vcmp.gt.f32.partialorder %v869, 0.0
      %vm944 = vcmp.gt.f32.partialorder %v874, 0.0
      %vm945 = vcmp.gt.f32.partialorder %v879, 0.0
      %vm946 = vcmp.gt.f32.partialorder %v884, 0.0
      %vm947 = vcmp.gt.f32.partialorder %v889, 0.0
      %vm948 = vcmp.gt.f32.partialorder %v894, 0.0
      %vm949 = vcmp.gt.f32.partialorder %v899, 0.0
      %vm950 = vcmp.gt.f32.partialorder %v904, 0.0
      %vm951 = vcmp.gt.f32.partialorder %v909, 0.0
      %vm952 = vcmp.gt.f32.partialorder %v914, 0.0
      %vm953 = vcmp.gt.f32.partialorder %v919, 0.0
      %vm954 = vcmp.gt.f32.partialorder %v924, 0.0
      %vm955 = vcmp.gt.f32.partialorder %v929, 0.0
      %vm956 = vcmp.gt.f32.partialorder %v934, 0.0
      %vm957 = vcmp.gt.f32.partialorder %v939, 0.0
      %v958 = vmul.f32 %v864, 0.01
      %v959 = vmul.f32 %v869, 0.01
      %v960 = vmul.f32 %v874, 0.01
      %v961 = vmul.f32 %v879, 0.01
      %v962 = vmul.f32 %v884, 0.01
      %v963 = vmul.f32 %v889, 0.01
      %v964 = vmul.f32 %v894, 0.01
      %v965 = vmul.f32 %v899, 0.01
      %v966 = vmul.f32 %v904, 0.01
      %v967 = vmul.f32 %v909, 0.01
      %v968 = vmul.f32 %v914, 0.01
      %v969 = vmul.f32 %v919, 0.01
      %v970 = vmul.f32 %v924, 0.01
      %v971 = vmul.f32 %v929, 0.01
      %v972 = vmul.f32 %v934, 0.01
      %v973 = vmul.f32 %v939, 0.01
      %v974 = vsel %vm942, %v864, %v958
      %v975 = vsel %vm943, %v869, %v959
      %v976 = vsel %vm944, %v874, %v960
      %v977 = vsel %vm945, %v879, %v961
      %v978 = vsel %vm946, %v884, %v962
      %v979 = vsel %vm947, %v889, %v963
      %v980 = vsel %vm948, %v894, %v964
      %v981 = vsel %vm949, %v899, %v965
      %v982 = vsel %vm950, %v904, %v966
      %v983 = vsel %vm951, %v909, %v967
      %v984 = vsel %vm952, %v914, %v968
      %v985 = vsel %vm953, %v919, %v969
      %v986 = vsel %vm954, %v924, %v970
      %v987 = vsel %vm955, %v929, %v971
      %v988 = vsel %vm956, %v934, %v972
      %v989 = vsel %vm957, %v939, %v973
      %v990 = vld [vmem:[%s486] sm:$0xff]
      %v991 = vld [vmem:[%s486 + $0x8] sm:$0xff]
      %v992 = vld [vmem:[%s486 + $0x10] sm:$0xff]
      %v993 = vld [vmem:[%s486 + $0x18] sm:$0xff]
      %v994 = vld [vmem:[%s486 + $0x20] sm:$0xff]
      %v995 = vld [vmem:[%s486 + $0x28] sm:$0xff]
      %v996 = vld [vmem:[%s486 + $0x30] sm:$0xff]
      %v997 = vld [vmem:[%s486 + $0x38] sm:$0xff]
      %v998 = vld [vmem:[%s486 + $0x40] sm:$0xff]
      %v999 = vld [vmem:[%s486 + $0x48] sm:$0xff]
      %v1000 = vld [vmem:[%s486 + $0x50] sm:$0xff]
      %v1001 = vld [vmem:[%s486 + $0x58] sm:$0xff]
      %v1002 = vld [vmem:[%s486 + $0x60] sm:$0xff]
      %v1003 = vld [vmem:[%s486 + $0x68] sm:$0xff]
      %v1004 = vld [vmem:[%s486 + $0x70] sm:$0xff]
      %v1005 = vld [vmem:[%s486 + $0x78] sm:$0xff]
      %v1006 = vld [vmem:[%s486 + $0x80] sm:$0xff]
      %v1007 = vld [vmem:[%s486 + $0x88] sm:$0xff]
      %v1008 = vld [vmem:[%s486 + $0x90] sm:$0xff]
      %v1009 = vld [vmem:[%s486 + $0x98] sm:$0xff]
      %v1010 = vld [vmem:[%s486 + $0xa0] sm:$0xff]
      %v1011 = vld [vmem:[%s486 + $0xa8] sm:$0xff]
      %v1012 = vld [vmem:[%s486 + $0xb0] sm:$0xff]
      %v1013 = vld [vmem:[%s486 + $0xb8] sm:$0xff]
      %v1014 = vlaneseq
      %v1015 = vshrl.u32 %v1014, 7
      %v1016 = vsub.s32 2, %v1015
      %v1017 = vrot.slane %v517, %v1016
      %vm1018 = vcmask 15360
      %v1020 = vsel %vm1018, %v990, 0
      %v1023 = vsel %vm1018, %v991, 0
      %v1026 = vsel %vm1018, %v992, 0
      %v1029 = vsel %vm1018, %v993, 0
      %v1032 = vsel %vm1018, %v994, 0
      %v1035 = vsel %vm1018, %v995, 0
      %v1038 = vsel %vm1018, %v996, 0
      %v1041 = vsel %vm1018, %v997, 0
      %v1044 = vsel %vm1018, %v998, 0
      %v1047 = vsel %vm1018, %v999, 0
      %v1050 = vsel %vm1018, %v1000, 0
      %v1053 = vsel %vm1018, %v1001, 0
      %v1056 = vsel %vm1018, %v1002, 0
      %v1059 = vsel %vm1018, %v1003, 0
      %v1062 = vsel %vm1018, %v1004, 0
      %v1065 = vsel %vm1018, %v1005, 0
      %v1068 = vsel %vm1018, %v1006, 0
      %v1071 = vsel %vm1018, %v1007, 0
      %v1074 = vsel %vm1018, %v1008, 0
      %v1077 = vsel %vm1018, %v1009, 0
      %v1080 = vsel %vm1018, %v1010, 0
      %v1083 = vsel %vm1018, %v1011, 0
      %v1086 = vsel %vm1018, %v1012, 0
      %v1089 = vsel %vm1018, %v1013, 0
      %vm1091 = vcmask 1041408
      %v1093 = vsel %vm1091, %v516, 0
      %1095 = vmatprep.subr.mxu0 0.0
      %1096 = vmatpush1.msra.mxu0 %v1093
      %1097 = vmatprep.subr.mxu0 0.0
      %1098 = vmatpush1.msra.mxu0 0.0
      %1099 = vmatprep.subr.mxu0 0.0
      %1100 = vmatpush1.msra.mxu0 0.0
      %1101 = vmatprep.subr.mxu0 0.0
      %1102 = vmatpush1.msra.mxu0 0.0
      %1103 = vmatprep.subr.mxu0 0.0
      %1104 = vmatpush1.msra.mxu0 0.0
      %1105 = vmatprep.subr.mxu0 0.0
      %1106 = vmatpush1.msra.mxu0 0.0
      %1107 = vmatprep.subr.mxu0 0.0
      %1108 = vmatpush1.msra.mxu0 0.0
      %1109 = vmatprep.subr.mxu0 0.0
      %1110 = vmatpush1.msra.mxu0 0.0
      %1111 = vmatprep.subr.mxu0 0.0
      %1112 = vmatpush1.msra.mxu0 0.0
      %1113 = vmatprep.subr.mxu0 0.0
      %1114 = vmatpush1.msra.mxu0 0.0
      %1115 = vmatprep.subr.mxu0 0.0
      %1116 = vmatpush1.msra.mxu0 0.0
      %1117 = vmatprep.subr.mxu0 0.0
      %1118 = vmatpush1.msra.mxu0 0.0
      %1119 = vmatprep.subr.mxu0 0.0
      %1120 = vmatpush1.msra.mxu0 0.0
      %1121 = vmatprep.subr.mxu0 0.0
      %1122 = vmatpush1.msra.mxu0 0.0
      %1123 = vmatprep.subr.mxu0 0.0
      %1124 = vmatpush1.msra.mxu0 0.0
      %1125 = vmatprep.subr.mxu0 0.0
      %1126 = vmatpush1.msra.mxu0 0.0
      %1127 = vmatprep.subr.mxu0 0.0
      %1128 = vmatpush1.msra.mxu0 0.0
      %1129 = vmatprep.subr.mxu0 0.0
      %1130 = vmatpush1.msra.mxu0 0.0
      %1131 = vmatprep.subr.mxu0 0.0
      %1132 = vmatpush1.msra.mxu0 0.0
      %1133 = vmatprep.subr.mxu0 0.0
      %1134 = vmatpush1.msra.mxu0 0.0
      %1135 = vmatprep.subr.mxu0 0.0
      %1136 = vmatpush1.msra.mxu0 0.0
      %1137 = vmatprep.subr.mxu0 0.0
      %1138 = vmatpush1.msra.mxu0 0.0
      %1139 = vmatprep.subr.mxu0 0.0
      %1140 = vmatpush1.msra.mxu0 0.0
      %1141 = vmatprep.subr.mxu0 0.0
      %1142 = vmatpush1.msra.mxu0 0.0
      %1143 = vmatprep.subr.mxu0 0.0
      %1144 = vmatpush1.msra.mxu0 0.0
      %1145 = vmatprep.subr.mxu0 0.0
      %1146 = vmatpush1.msra.mxu0 0.0
      %1147 = vmatprep.subr.mxu0 0.0
      %1148 = vmatpush1.msra.mxu0 0.0
      %1149 = vmatprep.subr.mxu0 0.0
      %1150 = vmatpush1.msra.mxu0 0.0
      %1151 = vmatprep.subr.mxu0 0.0
      %1152 = vmatpush1.msra.mxu0 0.0
      %1153 = vmatprep.subr.mxu0 0.0
      %1154 = vmatpush1.msra.mxu0 0.0
      %1155 = vmatprep.subr.mxu0 0.0
      %1156 = vmatpush1.msra.mxu0 0.0
      %1157 = vmatprep.subr.mxu0 0.0
      %1158 = vmatpush1.msra.mxu0 0.0
      %1159 = vmatprep.mubr.f32.mxu0 0.0
      %1160 = vmatmul.mubr.f32.gmra.mrb[0].mxu0 %v1020
      %v1161 = vpop.f32.mrb[0].mxu0
      %v1162 = vadd.f32 %v1017, %v1161
      %v1163 = vpop.f32.mrb[0].mxu0
      %1164 = vmatprep.mubr.f32.mxu0 0.0
      %1165 = vmatmul.mubr.f32.gmra.mrb[0].mxu0 %v1023
      %v1166 = vpop.f32.mrb[0].mxu0
      %v1167 = vadd.f32 %v1017, %v1166
      %v1168 = vpop.f32.mrb[0].mxu0
      %1169 = vmatprep.mubr.f32.mxu0 0.0
      %1170 = vmatmul.mubr.f32.gmra.mrb[0].mxu0 %v1026
      %v1171 = vpop.f32.mrb[0].mxu0
      %v1172 = vadd.f32 %v1017, %v1171
      %v1173 = vpop.f32.mrb[0].mxu0
      %1174 = vmatprep.mubr.f32.mxu0 0.0
      %1175 = vmatmul.mubr.f32.gmra.mrb[0].mxu0 %v1029
      %v1176 = vpop.f32.mrb[0].mxu0
      %v1177 = vadd.f32 %v1017, %v1176
      %v1178 = vpop.f32.mrb[0].mxu0
      %1179 = vmatprep.mubr.f32.mxu0 0.0
      %1180 = vmatmul.mubr.f32.gmra.mrb[0].mxu0 %v1032
      %v1181 = vpop.f32.mrb[0].mxu0
      %v1182 = vadd.f32 %v1017, %v1181
      %v1183 = vpop.f32.mrb[0].mxu0
      %1184 = vmatprep.mubr.f32.mxu0 0.0
      %1185 = vmatmul.mubr.f32.gmra.mrb[0].mxu0 %v1035
      %v1186 = vpop.f32.mrb[0].mxu0
      %v1187 = vadd.f32 %v1017, %v1186
      %v1188 = vpop.f32.mrb[0].mxu0
      %1189 = vmatprep.mubr.f32.mxu0 0.0
      %1190 = vmatmul.mubr.f32.gmra.mrb[0].mxu0 %v1038
      %v1191 = vpop.f32.mrb[0].mxu0
      %v1192 = vadd.f32 %v1017, %v1191
      %v1193 = vpop.f32.mrb[0].mxu0
      %1194 = vmatprep.mubr.f32.mxu0 0.0
      %1195 = vmatmul.mubr.f32.gmra.mrb[0].mxu0 %v1041
      %v1196 = vpop.f32.mrb[0].mxu0
      %v1197 = vadd.f32 %v1017, %v1196
      %v1198 = vpop.f32.mrb[0].mxu0
      %1199 = vmatprep.mubr.f32.mxu0 0.0
      %1200 = vmatmul.mubr.f32.gmra.mrb[0].mxu0 %v1044
      %v1201 = vpop.f32.mrb[0].mxu0
      %v1202 = vadd.f32 %v1017, %v1201
      %v1203 = vpop.f32.mrb[0].mxu0
      %1204 = vmatprep.mubr.f32.mxu0 0.0
      %1205 = vmatmul.mubr.f32.gmra.mrb[0].mxu0 %v1047
      %v1206 = vpop.f32.mrb[0].mxu0
      %v1207 = vadd.f32 %v1017, %v1206
      %v1208 = vpop.f32.mrb[0].mxu0
      %1209 = vmatprep.mubr.f32.mxu0 0.0
      %1210 = vmatmul.mubr.f32.gmra.mrb[0].mxu0 %v1050
      %v1211 = vpop.f32.mrb[0].mxu0
      %v1212 = vadd.f32 %v1017, %v1211
      %v1213 = vpop.f32.mrb[0].mxu0
      %1214 = vmatprep.mubr.f32.mxu0 0.0
      %1215 = vmatmul.mubr.f32.gmra.mrb[0].mxu0 %v1053
      %v1216 = vpop.f32.mrb[0].mxu0
      %v1217 = vadd.f32 %v1017, %v1216
      %v1218 = vpop.f32.mrb[0].mxu0
      %1219 = vmatprep.mubr.f32.mxu0 0.0
      %1220 = vmatmul.mubr.f32.gmra.mrb[0].mxu0 %v1056
      %v1221 = vpop.f32.mrb[0].mxu0
      %v1222 = vadd.f32 %v1017, %v1221
      %v1223 = vpop.f32.mrb[0].mxu0
      %1224 = vmatprep.mubr.f32.mxu0 0.0
      %1225 = vmatmul.mubr.f32.gmra.mrb[0].mxu0 %v1059
      %v1226 = vpop.f32.mrb[0].mxu0
      %v1227 = vadd.f32 %v1017, %v1226
      %v1228 = vpop.f32.mrb[0].mxu0
      %1229 = vmatprep.mubr.f32.mxu0 0.0
      %1230 = vmatmul.mubr.f32.gmra.mrb[0].mxu0 %v1062
      %v1231 = vpop.f32.mrb[0].mxu0
      %v1232 = vadd.f32 %v1017, %v1231
      %v1233 = vpop.f32.mrb[0].mxu0
      %1234 = vmatprep.mubr.f32.mxu0 0.0
      %1235 = vmatmul.mubr.f32.gmra.mrb[0].mxu0 %v1065
      %v1236 = vpop.f32.mrb[0].mxu0
      %v1237 = vadd.f32 %v1017, %v1236
      %v1238 = vpop.f32.mrb[0].mxu0
      %1239 = vmatprep.mubr.f32.mxu0 0.0
      %1240 = vmatmul.mubr.f32.gmra.mrb[0].mxu0 %v1068
      %v1241 = vpop.f32.mrb[0].mxu0
      %v1242 = vadd.f32 %v1017, %v1241
      %v1243 = vpop.f32.mrb[0].mxu0
      %1244 = vmatprep.mubr.f32.mxu0 0.0
      %1245 = vmatmul.mubr.f32.gmra.mrb[0].mxu0 %v1071
      %v1246 = vpop.f32.mrb[0].mxu0
      %v1247 = vadd.f32 %v1017, %v1246
      %v1248 = vpop.f32.mrb[0].mxu0
      %1249 = vmatprep.mubr.f32.mxu0 0.0
      %1250 = vmatmul.mubr.f32.gmra.mrb[0].mxu0 %v1074
      %v1251 = vpop.f32.mrb[0].mxu0
      %v1252 = vadd.f32 %v1017, %v1251
      %v1253 = vpop.f32.mrb[0].mxu0
      %1254 = vmatprep.mubr.f32.mxu0 0.0
      %1255 = vmatmul.mubr.f32.gmra.mrb[0].mxu0 %v1077
      %v1256 = vpop.f32.mrb[0].mxu0
      %v1257 = vadd.f32 %v1017, %v1256
      %v1258 = vpop.f32.mrb[0].mxu0
      %1259 = vmatprep.mubr.f32.mxu0 0.0
      %1260 = vmatmul.mubr.f32.gmra.mrb[0].mxu0 %v1080
      %v1261 = vpop.f32.mrb[0].mxu0
      %v1262 = vadd.f32 %v1017, %v1261
      %v1263 = vpop.f32.mrb[0].mxu0
      %1264 = vmatprep.mubr.f32.mxu0 0.0
      %1265 = vmatmul.mubr.f32.gmra.mrb[0].mxu0 %v1083
      %v1266 = vpop.f32.mrb[0].mxu0
      %v1267 = vadd.f32 %v1017, %v1266
      %v1268 = vpop.f32.mrb[0].mxu0
      %1269 = vmatprep.mubr.f32.mxu0 0.0
      %1270 = vmatmul.mubr.f32.gmra.mrb[0].mxu0 %v1086
      %v1271 = vpop.f32.mrb[0].mxu0
      %v1272 = vadd.f32 %v1017, %v1271
      %v1273 = vpop.f32.mrb[0].mxu0
      %1274 = vmatprep.mubr.f32.mxu0 0.0
      %1275 = vmatmul.mubr.f32.gmra.mrb[0].mxu0 %v1089
      %v1276 = vpop.f32.mrb[0].mxu0
      %v1277 = vadd.f32 %v1017, %v1276
      %v1278 = vpop.f32.mrb[0].mxu0
      %1279 = vdwg.mxu0
      %vm1280 = vcmp.gt.f32.partialorder %v1162, 0.0
      %vm1281 = vcmp.gt.f32.partialorder %v1167, 0.0
      %vm1282 = vcmp.gt.f32.partialorder %v1172, 0.0
      %vm1283 = vcmp.gt.f32.partialorder %v1177, 0.0
      %vm1284 = vcmp.gt.f32.partialorder %v1182, 0.0
      %vm1285 = vcmp.gt.f32.partialorder %v1187, 0.0
      %vm1286 = vcmp.gt.f32.partialorder %v1192, 0.0
      %vm1287 = vcmp.gt.f32.partialorder %v1197, 0.0
      %vm1288 = vcmp.gt.f32.partialorder %v1202, 0.0
      %vm1289 = vcmp.gt.f32.partialorder %v1207, 0.0
      %vm1290 = vcmp.gt.f32.partialorder %v1212, 0.0
      %vm1291 = vcmp.gt.f32.partialorder %v1217, 0.0
      %vm1292 = vcmp.gt.f32.partialorder %v1222, 0.0
      %vm1293 = vcmp.gt.f32.partialorder %v1227, 0.0
      %vm1294 = vcmp.gt.f32.partialorder %v1232, 0.0
      %vm1295 = vcmp.gt.f32.partialorder %v1237, 0.0
      %vm1296 = vcmp.gt.f32.partialorder %v1242, 0.0
      %vm1297 = vcmp.gt.f32.partialorder %v1247, 0.0
      %vm1298 = vcmp.gt.f32.partialorder %v1252, 0.0
      %vm1299 = vcmp.gt.f32.partialorder %v1257, 0.0
      %vm1300 = vcmp.gt.f32.partialorder %v1262, 0.0
      %vm1301 = vcmp.gt.f32.partialorder %v1267, 0.0
      %vm1302 = vcmp.gt.f32.partialorder %v1272, 0.0
      %vm1303 = vcmp.gt.f32.partialorder %v1277, 0.0
      %v1304 = vmul.f32 %v1162, 0.01
      %v1305 = vmul.f32 %v1167, 0.01
      %v1306 = vmul.f32 %v1172, 0.01
      %v1307 = vmul.f32 %v1177, 0.01
      %v1308 = vmul.f32 %v1182, 0.01
      %v1309 = vmul.f32 %v1187, 0.01
      %v1310 = vmul.f32 %v1192, 0.01
      %v1311 = vmul.f32 %v1197, 0.01
      %v1312 = vmul.f32 %v1202, 0.01
      %v1313 = vmul.f32 %v1207, 0.01
      %v1314 = vmul.f32 %v1212, 0.01
      %v1315 = vmul.f32 %v1217, 0.01
      %v1316 = vmul.f32 %v1222, 0.01
      %v1317 = vmul.f32 %v1227, 0.01
      %v1318 = vmul.f32 %v1232, 0.01
      %v1319 = vmul.f32 %v1237, 0.01
      %v1320 = vmul.f32 %v1242, 0.01
      %v1321 = vmul.f32 %v1247, 0.01
      %v1322 = vmul.f32 %v1252, 0.01
      %v1323 = vmul.f32 %v1257, 0.01
      %v1324 = vmul.f32 %v1262, 0.01
      %v1325 = vmul.f32 %v1267, 0.01
      %v1326 = vmul.f32 %v1272, 0.01
      %v1327 = vmul.f32 %v1277, 0.01
      %v1328 = vsel %vm1280, %v1162, %v1304
      %v1329 = vsel %vm1281, %v1167, %v1305
      %v1330 = vsel %vm1282, %v1172, %v1306
      %v1331 = vsel %vm1283, %v1177, %v1307
      %v1332 = vsel %vm1284, %v1182, %v1308
      %v1333 = vsel %vm1285, %v1187, %v1309
      %v1334 = vsel %vm1286, %v1192, %v1310
      %v1335 = vsel %vm1287, %v1197, %v1311
      %v1336 = vsel %vm1288, %v1202, %v1312
      %v1337 = vsel %vm1289, %v1207, %v1313
      %v1338 = vsel %vm1290, %v1212, %v1314
      %v1339 = vsel %vm1291, %v1217, %v1315
      %v1340 = vsel %vm1292, %v1222, %v1316
      %v1341 = vsel %vm1293, %v1227, %v1317
      %v1342 = vsel %vm1294, %v1232, %v1318
      %v1343 = vsel %vm1295, %v1237, %v1319
      %v1344 = vsel %vm1296, %v1242, %v1320
      %v1345 = vsel %vm1297, %v1247, %v1321
      %v1346 = vsel %vm1298, %v1252, %v1322
      %v1347 = vsel %vm1299, %v1257, %v1323
      %v1348 = vsel %vm1300, %v1262, %v1324
      %v1349 = vsel %vm1301, %v1267, %v1325
      %v1350 = vsel %vm1302, %v1272, %v1326
      %v1351 = vsel %vm1303, %v1277, %v1327
      %vm1352 = vcmask 261120
      %v1354 = vsel %vm1352, %v718, 0
      %v1357 = vsel %vm1352, %v719, 0
      %v1360 = vsel %vm1352, %v720, 0
      %v1363 = vsel %vm1352, %v721, 0
      %v1366 = vsel %vm1352, %v722, 0
      %v1369 = vsel %vm1352, %v723, 0
      %v1372 = vsel %vm1352, %v724, 0
      %v1375 = vsel %vm1352, %v725, 0
      %1377 = vmatprep.subr.mxu0 0.0
      %1378 = vmatpush1.msra.mxu0 %v526
      %1379 = vmatprep.subr.mxu0 0.0
      %1380 = vmatpush1.msra.mxu0 %v527
      %1381 = vmatprep.subr.mxu0 0.0
      %1382 = vmatpush1.msra.mxu0 %v528
      %1383 = vmatprep.subr.mxu0 0.0
      %1384 = vmatpush1.msra.mxu0 %v529
      %1385 = vmatprep.subr.mxu0 0.0
      %1386 = vmatpush1.msra.mxu0 0.0
      %1387 = vmatprep.subr.mxu0 0.0
      %1388 = vmatpush1.msra.mxu0 0.0
      %1389 = vmatprep.subr.mxu0 0.0
      %1390 = vmatpush1.msra.mxu0 0.0
      %1391 = vmatprep.subr.mxu0 0.0
      %1392 = vmatpush1.msra.mxu0 0.0
      %1393 = vmatprep.subr.mxu0 0.0
      %1394 = vmatpush1.msra.mxu0 0.0
      %1395 = vmatprep.subr.mxu0 0.0
      %1396 = vmatpush1.msra.mxu0 0.0
      %1397 = vmatprep.subr.mxu0 0.0
      %1398 = vmatpush1.msra.mxu0 0.0
      %1399 = vmatprep.subr.mxu0 0.0
      %1400 = vmatpush1.msra.mxu0 0.0
      %1401 = vmatprep.subr.mxu0 0.0
      %1402 = vmatpush1.msra.mxu0 0.0
      %1403 = vmatprep.subr.mxu0 0.0
      %1404 = vmatpush1.msra.mxu0 0.0
      %1405 = vmatprep.subr.mxu0 0.0
      %1406 = vmatpush1.msra.mxu0 0.0
      %1407 = vmatprep.subr.mxu0 0.0
      %1408 = vmatpush1.msra.mxu0 0.0
      %1409 = vmatprep.subr.mxu0 0.0
      %1410 = vmatpush1.msra.mxu0 0.0
      %1411 = vmatprep.subr.mxu0 0.0
      %1412 = vmatpush1.msra.mxu0 0.0
      %1413 = vmatprep.subr.mxu0 0.0
      %1414 = vmatpush1.msra.mxu0 0.0
      %1415 = vmatprep.subr.mxu0 0.0
      %1416 = vmatpush1.msra.mxu0 0.0
      %1417 = vmatprep.subr.mxu0 0.0
      %1418 = vmatpush1.msra.mxu0 0.0
      %1419 = vmatprep.subr.mxu0 0.0
      %1420 = vmatpush1.msra.mxu0 0.0
      %1421 = vmatprep.subr.mxu0 0.0
      %1422 = vmatpush1.msra.mxu0 0.0
      %1423 = vmatprep.subr.mxu0 0.0
      %1424 = vmatpush1.msra.mxu0 0.0
      %1425 = vmatprep.subr.mxu0 0.0
      %1426 = vmatpush1.msra.mxu0 0.0
      %1427 = vmatprep.subr.mxu0 0.0
      %1428 = vmatpush1.msra.mxu0 0.0
      %1429 = vmatprep.subr.mxu0 0.0
      %1430 = vmatpush1.msra.mxu0 0.0
      %1431 = vmatprep.subr.mxu0 0.0
      %1432 = vmatpush1.msra.mxu0 0.0
      %1433 = vmatprep.subr.mxu0 0.0
      %1434 = vmatpush1.msra.mxu0 0.0
      %1435 = vmatprep.subr.mxu0 0.0
      %1436 = vmatpush1.msra.mxu0 0.0
      %1437 = vmatprep.subr.mxu0 0.0
      %1438 = vmatpush1.msra.mxu0 0.0
      %1439 = vmatprep.subr.mxu0 0.0
      %1440 = vmatpush1.msra.mxu0 0.0
      %1441 = vmatprep.mubr.f32.mxu0 0.0
      %1442 = vmatmul.mubr.f32.gmra.mrb[0].mxu0 %v1354
      %v1443 = vpop.f32.mrb[0].mxu0
      %v1444 = vadd.f32 0.0, %v1443
      %v1445 = vpop.f32.mrb[0].mxu0
      %1446 = vmatprep.mubr.f32.mxu0 0.0
      %1447 = vmatmul.mubr.f32.gmra.mrb[0].mxu0 %v1357
      %v1448 = vpop.f32.mrb[0].mxu0
      %v1449 = vadd.f32 0.0, %v1448
      %v1450 = vpop.f32.mrb[0].mxu0
      %1451 = vmatprep.mubr.f32.mxu0 0.0
      %1452 = vmatmul.mubr.f32.gmra.mrb[0].mxu0 %v1360
      %v1453 = vpop.f32.mrb[0].mxu0
      %v1454 = vadd.f32 0.0, %v1453
      %v1455 = vpop.f32.mrb[0].mxu0
      %1456 = vmatprep.mubr.f32.mxu0 0.0
      %1457 = vmatmul.mubr.f32.gmra.mrb[0].mxu0 %v1363
      %v1458 = vpop.f32.mrb[0].mxu0
      %v1459 = vadd.f32 0.0, %v1458
      %v1460 = vpop.f32.mrb[0].mxu0
      %1461 = vmatprep.mubr.f32.mxu0 0.0
      %1462 = vmatmul.mubr.f32.gmra.mrb[0].mxu0 %v1366
      %v1463 = vpop.f32.mrb[0].mxu0
      %v1464 = vadd.f32 0.0, %v1463
      %v1465 = vpop.f32.mrb[0].mxu0
      %1466 = vmatprep.mubr.f32.mxu0 0.0
      %1467 = vmatmul.mubr.f32.gmra.mrb[0].mxu0 %v1369
      %v1468 = vpop.f32.mrb[0].mxu0
      %v1469 = vadd.f32 0.0, %v1468
      %v1470 = vpop.f32.mrb[0].mxu0
      %1471 = vmatprep.mubr.f32.mxu0 0.0
      %1472 = vmatmul.mubr.f32.gmra.mrb[0].mxu0 %v1372
      %v1473 = vpop.f32.mrb[0].mxu0
      %v1474 = vadd.f32 0.0, %v1473
      %v1475 = vpop.f32.mrb[0].mxu0
      %1476 = vmatprep.mubr.f32.mxu0 0.0
      %1477 = vmatmul.mubr.f32.gmra.mrb[0].mxu0 %v1375
      %v1478 = vpop.f32.mrb[0].mxu0
      %v1479 = vadd.f32 0.0, %v1478
      %v1480 = vpop.f32.mrb[0].mxu0
      %1481 = vdwg.mxu0
      %1482 = vmatprep.subr.mxu0 0.0
      %1483 = vmatpush1.msra.mxu0 %v530
      %1484 = vmatprep.subr.mxu0 0.0
      %1485 = vmatpush1.msra.mxu0 %v531
      %1486 = vmatprep.subr.mxu0 0.0
      %1487 = vmatpush1.msra.mxu0 %v532
      %1488 = vmatprep.subr.mxu0 0.0
      %1489 = vmatpush1.msra.mxu0 %v533
      %1490 = vmatprep.subr.mxu0 0.0
      %1491 = vmatpush1.msra.mxu0 0.0
      %1492 = vmatprep.subr.mxu0 0.0
      %1493 = vmatpush1.msra.mxu0 0.0
      %1494 = vmatprep.subr.mxu0 0.0
      %1495 = vmatpush1.msra.mxu0 0.0
      %1496 = vmatprep.subr.mxu0 0.0
      %1497 = vmatpush1.msra.mxu0 0.0
      %1498 = vmatprep.subr.mxu0 0.0
      %1499 = vmatpush1.msra.mxu0 0.0
      %1500 = vmatprep.subr.mxu0 0.0
      %1501 = vmatpush1.msra.mxu0 0.0
      %1502 = vmatprep.subr.mxu0 0.0
      %1503 = vmatpush1.msra.mxu0 0.0
      %1504 = vmatprep.subr.mxu0 0.0
      %1505 = vmatpush1.msra.mxu0 0.0
      %1506 = vmatprep.subr.mxu0 0.0
      %1507 = vmatpush1.msra.mxu0 0.0
      %1508 = vmatprep.subr.mxu0 0.0
      %1509 = vmatpush1.msra.mxu0 0.0
      %1510 = vmatprep.subr.mxu0 0.0
      %1511 = vmatpush1.msra.mxu0 0.0
      %1512 = vmatprep.subr.mxu0 0.0
      %1513 = vmatpush1.msra.mxu0 0.0
      %1514 = vmatprep.subr.mxu0 0.0
      %1515 = vmatpush1.msra.mxu0 0.0
      %1516 = vmatprep.subr.mxu0 0.0
      %1517 = vmatpush1.msra.mxu0 0.0
      %1518 = vmatprep.subr.mxu0 0.0
      %1519 = vmatpush1.msra.mxu0 0.0
      %1520 = vmatprep.subr.mxu0 0.0
      %1521 = vmatpush1.msra.mxu0 0.0
      %1522 = vmatprep.subr.mxu0 0.0
      %1523 = vmatpush1.msra.mxu0 0.0
      %1524 = vmatprep.subr.mxu0 0.0
      %1525 = vmatpush1.msra.mxu0 0.0
      %1526 = vmatprep.subr.mxu0 0.0
      %1527 = vmatpush1.msra.mxu0 0.0
      %1528 = vmatprep.subr.mxu0 0.0
      %1529 = vmatpush1.msra.mxu0 0.0
      %1530 = vmatprep.subr.mxu0 0.0
      %1531 = vmatpush1.msra.mxu0 0.0
      %1532 = vmatprep.subr.mxu0 0.0
      %1533 = vmatpush1.msra.mxu0 0.0
      %1534 = vmatprep.subr.mxu0 0.0
      %1535 = vmatpush1.msra.mxu0 0.0
      %1536 = vmatprep.subr.mxu0 0.0
      %1537 = vmatpush1.msra.mxu0 0.0
      %1538 = vmatprep.subr.mxu0 0.0
      %1539 = vmatpush1.msra.mxu0 0.0
      %1540 = vmatprep.subr.mxu0 0.0
      %1541 = vmatpush1.msra.mxu0 0.0
      %1542 = vmatprep.subr.mxu0 0.0
      %1543 = vmatpush1.msra.mxu0 0.0
      %1544 = vmatprep.subr.mxu0 0.0
      %1545 = vmatpush1.msra.mxu0 0.0
      %1546 = vmatprep.mubr.f32.mxu0 0.0
      %1547 = vmatmul.mubr.f32.gmra.mrb[0].mxu0 %v1354
      %v1548 = vpop.f32.mrb[0].mxu0
      %v1549 = vadd.f32 0.0, %v1548
      %v1550 = vpop.f32.mrb[0].mxu0
      %1551 = vmatprep.mubr.f32.mxu0 0.0
      %1552 = vmatmul.mubr.f32.gmra.mrb[0].mxu0 %v1357
      %v1553 = vpop.f32.mrb[0].mxu0
      %v1554 = vadd.f32 0.0, %v1553
      %v1555 = vpop.f32.mrb[0].mxu0
      %1556 = vmatprep.mubr.f32.mxu0 0.0
      %1557 = vmatmul.mubr.f32.gmra.mrb[0].mxu0 %v1360
      %v1558 = vpop.f32.mrb[0].mxu0
      %v1559 = vadd.f32 0.0, %v1558
      %v1560 = vpop.f32.mrb[0].mxu0
      %1561 = vmatprep.mubr.f32.mxu0 0.0
      %1562 = vmatmul.mubr.f32.gmra.mrb[0].mxu0 %v1363
      %v1563 = vpop.f32.mrb[0].mxu0
      %v1564 = vadd.f32 0.0, %v1563
      %v1565 = vpop.f32.mrb[0].mxu0
      %1566 = vmatprep.mubr.f32.mxu0 0.0
      %1567 = vmatmul.mubr.f32.gmra.mrb[0].mxu0 %v1366
      %v1568 = vpop.f32.mrb[0].mxu0
      %v1569 = vadd.f32 0.0, %v1568
      %v1570 = vpop.f32.mrb[0].mxu0
      %1571 = vmatprep.mubr.f32.mxu0 0.0
      %1572 = vmatmul.mubr.f32.gmra.mrb[0].mxu0 %v1369
      %v1573 = vpop.f32.mrb[0].mxu0
      %v1574 = vadd.f32 0.0, %v1573
      %v1575 = vpop.f32.mrb[0].mxu0
      %1576 = vmatprep.mubr.f32.mxu0 0.0
      %1577 = vmatmul.mubr.f32.gmra.mrb[0].mxu0 %v1372
      %v1578 = vpop.f32.mrb[0].mxu0
      %v1579 = vadd.f32 0.0, %v1578
      %v1580 = vpop.f32.mrb[0].mxu0
      %1581 = vmatprep.mubr.f32.mxu0 0.0
      %1582 = vmatmul.mubr.f32.gmra.mrb[0].mxu0 %v1375
      %v1583 = vpop.f32.mrb[0].mxu0
      %v1584 = vadd.f32 0.0, %v1583
      %v1585 = vpop.f32.mrb[0].mxu0
      %1586 = vdwg.mxu0
      %v1588 = vsel %vm1352, %v974, 0
      %v1591 = vsel %vm1352, %v975, 0
      %v1594 = vsel %vm1352, %v976, 0
      %v1597 = vsel %vm1352, %v977, 0
      %v1600 = vsel %vm1352, %v978, 0
      %v1603 = vsel %vm1352, %v979, 0
      %v1606 = vsel %vm1352, %v980, 0
      %v1609 = vsel %vm1352, %v981, 0
      %v1612 = vsel %vm1352, %v982, 0
      %v1615 = vsel %vm1352, %v983, 0
      %v1618 = vsel %vm1352, %v984, 0
      %v1621 = vsel %vm1352, %v985, 0
      %v1624 = vsel %vm1352, %v986, 0
      %v1627 = vsel %vm1352, %v987, 0
      %v1630 = vsel %vm1352, %v988, 0
      %v1633 = vsel %vm1352, %v989, 0
      %1635 = vmatprep.subr.mxu0 0.0
      %1636 = vmatpush1.msra.mxu0 %v518
      %1637 = vmatprep.subr.mxu0 0.0
      %1638 = vmatpush1.msra.mxu0 %v519
      %1639 = vmatprep.subr.mxu0 0.0
      %1640 = vmatpush1.msra.mxu0 %v520
      %1641 = vmatprep.subr.mxu0 0.0
      %1642 = vmatpush1.msra.mxu0 %v521
      %1643 = vmatprep.subr.mxu0 0.0
      %1644 = vmatpush1.msra.mxu0 0.0
      %1645 = vmatprep.subr.mxu0 0.0
      %1646 = vmatpush1.msra.mxu0 0.0
      %1647 = vmatprep.subr.mxu0 0.0
      %1648 = vmatpush1.msra.mxu0 0.0
      %1649 = vmatprep.subr.mxu0 0.0
      %1650 = vmatpush1.msra.mxu0 0.0
      %1651 = vmatprep.subr.mxu0 0.0
      %1652 = vmatpush1.msra.mxu0 0.0
      %1653 = vmatprep.subr.mxu0 0.0
      %1654 = vmatpush1.msra.mxu0 0.0
      %1655 = vmatprep.subr.mxu0 0.0
      %1656 = vmatpush1.msra.mxu0 0.0
      %1657 = vmatprep.subr.mxu0 0.0
      %1658 = vmatpush1.msra.mxu0 0.0
      %1659 = vmatprep.subr.mxu0 0.0
      %1660 = vmatpush1.msra.mxu0 0.0
      %1661 = vmatprep.subr.mxu0 0.0
      %1662 = vmatpush1.msra.mxu0 0.0
      %1663 = vmatprep.subr.mxu0 0.0
      %1664 = vmatpush1.msra.mxu0 0.0
      %1665 = vmatprep.subr.mxu0 0.0
      %1666 = vmatpush1.msra.mxu0 0.0
      %1667 = vmatprep.subr.mxu0 0.0
      %1668 = vmatpush1.msra.mxu0 0.0
      %1669 = vmatprep.subr.mxu0 0.0
      %1670 = vmatpush1.msra.mxu0 0.0
      %1671 = vmatprep.subr.mxu0 0.0
      %1672 = vmatpush1.msra.mxu0 0.0
      %1673 = vmatprep.subr.mxu0 0.0
      %1674 = vmatpush1.msra.mxu0 0.0
      %1675 = vmatprep.subr.mxu0 0.0
      %1676 = vmatpush1.msra.mxu0 0.0
      %1677 = vmatprep.subr.mxu0 0.0
      %1678 = vmatpush1.msra.mxu0 0.0
      %1679 = vmatprep.subr.mxu0 0.0
      %1680 = vmatpush1.msra.mxu0 0.0
      %1681 = vmatprep.subr.mxu0 0.0
      %1682 = vmatpush1.msra.mxu0 0.0
      %1683 = vmatprep.subr.mxu0 0.0
      %1684 = vmatpush1.msra.mxu0 0.0
      %1685 = vmatprep.subr.mxu0 0.0
      %1686 = vmatpush1.msra.mxu0 0.0
      %1687 = vmatprep.subr.mxu0 0.0
      %1688 = vmatpush1.msra.mxu0 0.0
      %1689 = vmatprep.subr.mxu0 0.0
      %1690 = vmatpush1.msra.mxu0 0.0
      %1691 = vmatprep.subr.mxu0 0.0
      %1692 = vmatpush1.msra.mxu0 0.0
      %1693 = vmatprep.subr.mxu0 0.0
      %1694 = vmatpush1.msra.mxu0 0.0
      %1695 = vmatprep.subr.mxu0 0.0
      %1696 = vmatpush1.msra.mxu0 0.0
      %1697 = vmatprep.subr.mxu0 0.0
      %1698 = vmatpush1.msra.mxu0 0.0
      %1699 = vmatprep.mubr.f32.mxu0 0.0
      %1700 = vmatmul.mubr.f32.gmra.mrb[0].mxu0 %v1588
      %v1701 = vpop.f32.mrb[0].mxu0
      %v1702 = vadd.f32 0.0, %v1701
      %v1703 = vpop.f32.mrb[0].mxu0
      %1704 = vmatprep.mubr.f32.mxu0 0.0
      %1705 = vmatmul.mubr.f32.gmra.mrb[0].mxu0 %v1591
      %v1706 = vpop.f32.mrb[0].mxu0
      %v1707 = vadd.f32 0.0, %v1706
      %v1708 = vpop.f32.mrb[0].mxu0
      %1709 = vmatprep.mubr.f32.mxu0 0.0
      %1710 = vmatmul.mubr.f32.gmra.mrb[0].mxu0 %v1594
      %v1711 = vpop.f32.mrb[0].mxu0
      %v1712 = vadd.f32 0.0, %v1711
      %v1713 = vpop.f32.mrb[0].mxu0
      %1714 = vmatprep.mubr.f32.mxu0 0.0
      %1715 = vmatmul.mubr.f32.gmra.mrb[0].mxu0 %v1597
      %v1716 = vpop.f32.mrb[0].mxu0
      %v1717 = vadd.f32 0.0, %v1716
      %v1718 = vpop.f32.mrb[0].mxu0
      %1719 = vmatprep.mubr.f32.mxu0 0.0
      %1720 = vmatmul.mubr.f32.gmra.mrb[0].mxu0 %v1600
      %v1721 = vpop.f32.mrb[0].mxu0
      %v1722 = vadd.f32 0.0, %v1721
      %v1723 = vpop.f32.mrb[0].mxu0
      %1724 = vmatprep.mubr.f32.mxu0 0.0
      %1725 = vmatmul.mubr.f32.gmra.mrb[0].mxu0 %v1603
      %v1726 = vpop.f32.mrb[0].mxu0
      %v1727 = vadd.f32 0.0, %v1726
      %v1728 = vpop.f32.mrb[0].mxu0
      %1729 = vmatprep.mubr.f32.mxu0 0.0
      %1730 = vmatmul.mubr.f32.gmra.mrb[0].mxu0 %v1606
      %v1731 = vpop.f32.mrb[0].mxu0
      %v1732 = vadd.f32 0.0, %v1731
      %v1733 = vpop.f32.mrb[0].mxu0
      %1734 = vmatprep.mubr.f32.mxu0 0.0
      %1735 = vmatmul.mubr.f32.gmra.mrb[0].mxu0 %v1609
      %v1736 = vpop.f32.mrb[0].mxu0
      %v1737 = vadd.f32 0.0, %v1736
      %v1738 = vpop.f32.mrb[0].mxu0
      %1739 = vmatprep.mubr.f32.mxu0 0.0
      %1740 = vmatmul.mubr.f32.gmra.mrb[0].mxu0 %v1612
      %v1741 = vpop.f32.mrb[0].mxu0
      %v1742 = vadd.f32 0.0, %v1741
      %v1743 = vpop.f32.mrb[0].mxu0
      %1744 = vmatprep.mubr.f32.mxu0 0.0
      %1745 = vmatmul.mubr.f32.gmra.mrb[0].mxu0 %v1615
      %v1746 = vpop.f32.mrb[0].mxu0
      %v1747 = vadd.f32 0.0, %v1746
      %v1748 = vpop.f32.mrb[0].mxu0
      %1749 = vmatprep.mubr.f32.mxu0 0.0
      %1750 = vmatmul.mubr.f32.gmra.mrb[0].mxu0 %v1618
      %v1751 = vpop.f32.mrb[0].mxu0
      %v1752 = vadd.f32 0.0, %v1751
      %v1753 = vpop.f32.mrb[0].mxu0
      %1754 = vmatprep.mubr.f32.mxu0 0.0
      %1755 = vmatmul.mubr.f32.gmra.mrb[0].mxu0 %v1621
      %v1756 = vpop.f32.mrb[0].mxu0
      %v1757 = vadd.f32 0.0, %v1756
      %v1758 = vpop.f32.mrb[0].mxu0
      %1759 = vmatprep.mubr.f32.mxu0 0.0
      %1760 = vmatmul.mubr.f32.gmra.mrb[0].mxu0 %v1624
      %v1761 = vpop.f32.mrb[0].mxu0
      %v1762 = vadd.f32 0.0, %v1761
      %v1763 = vpop.f32.mrb[0].mxu0
      %1764 = vmatprep.mubr.f32.mxu0 0.0
      %1765 = vmatmul.mubr.f32.gmra.mrb[0].mxu0 %v1627
      %v1766 = vpop.f32.mrb[0].mxu0
      %v1767 = vadd.f32 0.0, %v1766
      %v1768 = vpop.f32.mrb[0].mxu0
      %1769 = vmatprep.mubr.f32.mxu0 0.0
      %1770 = vmatmul.mubr.f32.gmra.mrb[0].mxu0 %v1630
      %v1771 = vpop.f32.mrb[0].mxu0
      %v1772 = vadd.f32 0.0, %v1771
      %v1773 = vpop.f32.mrb[0].mxu0
      %1774 = vmatprep.mubr.f32.mxu0 0.0
      %1775 = vmatmul.mubr.f32.gmra.mrb[0].mxu0 %v1633
      %v1776 = vpop.f32.mrb[0].mxu0
      %v1777 = vadd.f32 0.0, %v1776
      %v1778 = vpop.f32.mrb[0].mxu0
      %1779 = vdwg.mxu0
      %v1780 = vlaneseq
      %v1781 = vshrl.u32 %v1780, 7
      %v1782 = vsub.s32 0, %v1781
      %v1783 = vrot.slane %v542, %v1782
      %1784 = vmatprep.subr.mxu0 0.0
      %1785 = vmatpush1.msra.mxu0 %v534
      %1786 = vmatprep.subr.mxu0 0.0
      %1787 = vmatpush1.msra.mxu0 %v535
      %1788 = vmatprep.subr.mxu0 0.0
      %1789 = vmatpush1.msra.mxu0 %v536
      %1790 = vmatprep.subr.mxu0 0.0
      %1791 = vmatpush1.msra.mxu0 %v537
      %1792 = vmatprep.subr.mxu0 0.0
      %1793 = vmatpush1.msra.mxu0 0.0
      %1794 = vmatprep.subr.mxu0 0.0
      %1795 = vmatpush1.msra.mxu0 0.0
      %1796 = vmatprep.subr.mxu0 0.0
      %1797 = vmatpush1.msra.mxu0 0.0
      %1798 = vmatprep.subr.mxu0 0.0
      %1799 = vmatpush1.msra.mxu0 0.0
      %1800 = vmatprep.subr.mxu0 0.0
      %1801 = vmatpush1.msra.mxu0 0.0
      %1802 = vmatprep.subr.mxu0 0.0
      %1803 = vmatpush1.msra.mxu0 0.0
      %1804 = vmatprep.subr.mxu0 0.0
      %1805 = vmatpush1.msra.mxu0 0.0
      %1806 = vmatprep.subr.mxu0 0.0
      %1807 = vmatpush1.msra.mxu0 0.0
      %1808 = vmatprep.subr.mxu0 0.0
      %1809 = vmatpush1.msra.mxu0 0.0
      %1810 = vmatprep.subr.mxu0 0.0
      %1811 = vmatpush1.msra.mxu0 0.0
      %1812 = vmatprep.subr.mxu0 0.0
      %1813 = vmatpush1.msra.mxu0 0.0
      %1814 = vmatprep.subr.mxu0 0.0
      %1815 = vmatpush1.msra.mxu0 0.0
      %1816 = vmatprep.subr.mxu0 0.0
      %1817 = vmatpush1.msra.mxu0 0.0
      %1818 = vmatprep.subr.mxu0 0.0
      %1819 = vmatpush1.msra.mxu0 0.0
      %1820 = vmatprep.subr.mxu0 0.0
      %1821 = vmatpush1.msra.mxu0 0.0
      %1822 = vmatprep.subr.mxu0 0.0
      %1823 = vmatpush1.msra.mxu0 0.0
      %1824 = vmatprep.subr.mxu0 0.0
      %1825 = vmatpush1.msra.mxu0 0.0
      %1826 = vmatprep.subr.mxu0 0.0
      %1827 = vmatpush1.msra.mxu0 0.0
      %1828 = vmatprep.subr.mxu0 0.0
      %1829 = vmatpush1.msra.mxu0 0.0
      %1830 = vmatprep.subr.mxu0 0.0
      %1831 = vmatpush1.msra.mxu0 0.0
      %1832 = vmatprep.subr.mxu0 0.0
      %1833 = vmatpush1.msra.mxu0 0.0
      %1834 = vmatprep.subr.mxu0 0.0
      %1835 = vmatpush1.msra.mxu0 0.0
      %1836 = vmatprep.subr.mxu0 0.0
      %1837 = vmatpush1.msra.mxu0 0.0
      %1838 = vmatprep.subr.mxu0 0.0
      %1839 = vmatpush1.msra.mxu0 0.0
      %1840 = vmatprep.subr.mxu0 0.0
      %1841 = vmatpush1.msra.mxu0 0.0
      %1842 = vmatprep.subr.mxu0 0.0
      %1843 = vmatpush1.msra.mxu0 0.0
      %1844 = vmatprep.subr.mxu0 0.0
      %1845 = vmatpush1.msra.mxu0 0.0
      %1846 = vmatprep.subr.mxu0 0.0
      %1847 = vmatpush1.msra.mxu0 0.0
      %1848 = vmatprep.mubr.f32.mxu0 0.0
      %1849 = vmatmul.mubr.f32.gmra.mrb[0].mxu0 %v1588
      %v1850 = vpop.f32.mrb[0].mxu0
      %v1851 = vadd.f32 %v1783, %v1850
      %v1852 = vpop.f32.mrb[0].mxu0
      %1853 = vmatprep.mubr.f32.mxu0 0.0
      %1854 = vmatmul.mubr.f32.gmra.mrb[0].mxu0 %v1591
      %v1855 = vpop.f32.mrb[0].mxu0
      %v1856 = vadd.f32 %v1783, %v1855
      %v1857 = vpop.f32.mrb[0].mxu0
      %1858 = vmatprep.mubr.f32.mxu0 0.0
      %1859 = vmatmul.mubr.f32.gmra.mrb[0].mxu0 %v1594
      %v1860 = vpop.f32.mrb[0].mxu0
      %v1861 = vadd.f32 %v1783, %v1860
      %v1862 = vpop.f32.mrb[0].mxu0
      %1863 = vmatprep.mubr.f32.mxu0 0.0
      %1864 = vmatmul.mubr.f32.gmra.mrb[0].mxu0 %v1597
      %v1865 = vpop.f32.mrb[0].mxu0
      %v1866 = vadd.f32 %v1783, %v1865
      %v1867 = vpop.f32.mrb[0].mxu0
      %1868 = vmatprep.mubr.f32.mxu0 0.0
      %1869 = vmatmul.mubr.f32.gmra.mrb[0].mxu0 %v1600
      %v1870 = vpop.f32.mrb[0].mxu0
      %v1871 = vadd.f32 %v1783, %v1870
      %v1872 = vpop.f32.mrb[0].mxu0
      %1873 = vmatprep.mubr.f32.mxu0 0.0
      %1874 = vmatmul.mubr.f32.gmra.mrb[0].mxu0 %v1603
      %v1875 = vpop.f32.mrb[0].mxu0
      %v1876 = vadd.f32 %v1783, %v1875
      %v1877 = vpop.f32.mrb[0].mxu0
      %1878 = vmatprep.mubr.f32.mxu0 0.0
      %1879 = vmatmul.mubr.f32.gmra.mrb[0].mxu0 %v1606
      %v1880 = vpop.f32.mrb[0].mxu0
      %v1881 = vadd.f32 %v1783, %v1880
      %v1882 = vpop.f32.mrb[0].mxu0
      %1883 = vmatprep.mubr.f32.mxu0 0.0
      %1884 = vmatmul.mubr.f32.gmra.mrb[0].mxu0 %v1609
      %v1885 = vpop.f32.mrb[0].mxu0
      %v1886 = vadd.f32 %v1783, %v1885
      %v1887 = vpop.f32.mrb[0].mxu0
      %1888 = vmatprep.mubr.f32.mxu0 0.0
      %1889 = vmatmul.mubr.f32.gmra.mrb[0].mxu0 %v1612
      %v1890 = vpop.f32.mrb[0].mxu0
      %v1891 = vadd.f32 %v1783, %v1890
      %v1892 = vpop.f32.mrb[0].mxu0
      %1893 = vmatprep.mubr.f32.mxu0 0.0
      %1894 = vmatmul.mubr.f32.gmra.mrb[0].mxu0 %v1615
      %v1895 = vpop.f32.mrb[0].mxu0
      %v1896 = vadd.f32 %v1783, %v1895
      %v1897 = vpop.f32.mrb[0].mxu0
      %1898 = vmatprep.mubr.f32.mxu0 0.0
      %1899 = vmatmul.mubr.f32.gmra.mrb[0].mxu0 %v1618
      %v1900 = vpop.f32.mrb[0].mxu0
      %v1901 = vadd.f32 %v1783, %v1900
      %v1902 = vpop.f32.mrb[0].mxu0
      %1903 = vmatprep.mubr.f32.mxu0 0.0
      %1904 = vmatmul.mubr.f32.gmra.mrb[0].mxu0 %v1621
      %v1905 = vpop.f32.mrb[0].mxu0
      %v1906 = vadd.f32 %v1783, %v1905
      %v1907 = vpop.f32.mrb[0].mxu0
      %1908 = vmatprep.mubr.f32.mxu0 0.0
      %1909 = vmatmul.mubr.f32.gmra.mrb[0].mxu0 %v1624
      %v1910 = vpop.f32.mrb[0].mxu0
      %v1911 = vadd.f32 %v1783, %v1910
      %v1912 = vpop.f32.mrb[0].mxu0
      %1913 = vmatprep.mubr.f32.mxu0 0.0
      %1914 = vmatmul.mubr.f32.gmra.mrb[0].mxu0 %v1627
      %v1915 = vpop.f32.mrb[0].mxu0
      %v1916 = vadd.f32 %v1783, %v1915
      %v1917 = vpop.f32.mrb[0].mxu0
      %1918 = vmatprep.mubr.f32.mxu0 0.0
      %1919 = vmatmul.mubr.f32.gmra.mrb[0].mxu0 %v1630
      %v1920 = vpop.f32.mrb[0].mxu0
      %v1921 = vadd.f32 %v1783, %v1920
      %v1922 = vpop.f32.mrb[0].mxu0
      %1923 = vmatprep.mubr.f32.mxu0 0.0
      %1924 = vmatmul.mubr.f32.gmra.mrb[0].mxu0 %v1633
      %v1925 = vpop.f32.mrb[0].mxu0
      %v1926 = vadd.f32 %v1783, %v1925
      %v1927 = vpop.f32.mrb[0].mxu0
      %1928 = vdwg.mxu0
      %vm1929 = vcmp.gt.f32.partialorder %v1851, 0.0
      %vm1930 = vcmp.gt.f32.partialorder %v1856, 0.0
      %vm1931 = vcmp.gt.f32.partialorder %v1861, 0.0
      %vm1932 = vcmp.gt.f32.partialorder %v1866, 0.0
      %vm1933 = vcmp.gt.f32.partialorder %v1871, 0.0
      %vm1934 = vcmp.gt.f32.partialorder %v1876, 0.0
      %vm1935 = vcmp.gt.f32.partialorder %v1881, 0.0
      %vm1936 = vcmp.gt.f32.partialorder %v1886, 0.0
      %vm1937 = vcmp.gt.f32.partialorder %v1891, 0.0
      %vm1938 = vcmp.gt.f32.partialorder %v1896, 0.0
      %vm1939 = vcmp.gt.f32.partialorder %v1901, 0.0
      %vm1940 = vcmp.gt.f32.partialorder %v1906, 0.0
      %vm1941 = vcmp.gt.f32.partialorder %v1911, 0.0
      %vm1942 = vcmp.gt.f32.partialorder %v1916, 0.0
      %vm1943 = vcmp.gt.f32.partialorder %v1921, 0.0
      %vm1944 = vcmp.gt.f32.partialorder %v1926, 0.0
      %v1945 = vmul.f32 %v1851, 0.01
      %v1946 = vmul.f32 %v1856, 0.01
      %v1947 = vmul.f32 %v1861, 0.01
      %v1948 = vmul.f32 %v1866, 0.01
      %v1949 = vmul.f32 %v1871, 0.01
      %v1950 = vmul.f32 %v1876, 0.01
      %v1951 = vmul.f32 %v1881, 0.01
      %v1952 = vmul.f32 %v1886, 0.01
      %v1953 = vmul.f32 %v1891, 0.01
      %v1954 = vmul.f32 %v1896, 0.01
      %v1955 = vmul.f32 %v1901, 0.01
      %v1956 = vmul.f32 %v1906, 0.01
      %v1957 = vmul.f32 %v1911, 0.01
      %v1958 = vmul.f32 %v1916, 0.01
      %v1959 = vmul.f32 %v1921, 0.01
      %v1960 = vmul.f32 %v1926, 0.01
      %v1961 = vsel %vm1929, %v1851, %v1945
      %v1962 = vsel %vm1930, %v1856, %v1946
      %v1963 = vsel %vm1931, %v1861, %v1947
      %v1964 = vsel %vm1932, %v1866, %v1948
      %v1965 = vsel %vm1933, %v1871, %v1949
      %v1966 = vsel %vm1934, %v1876, %v1950
      %v1967 = vsel %vm1935, %v1881, %v1951
      %v1968 = vsel %vm1936, %v1886, %v1952
      %v1969 = vsel %vm1937, %v1891, %v1953
      %v1970 = vsel %vm1938, %v1896, %v1954
      %v1971 = vsel %vm1939, %v1901, %v1955
      %v1972 = vsel %vm1940, %v1906, %v1956
      %v1973 = vsel %vm1941, %v1911, %v1957
      %v1974 = vsel %vm1942, %v1916, %v1958
      %v1975 = vsel %vm1943, %v1921, %v1959
      %v1976 = vsel %vm1944, %v1926, %v1960
      %v1978 = vsel %vm1352, %v1328, 0
      %v1981 = vsel %vm1352, %v1329, 0
      %v1984 = vsel %vm1352, %v1330, 0
      %v1987 = vsel %vm1352, %v1331, 0
      %v1990 = vsel %vm1352, %v1332, 0
      %v1993 = vsel %vm1352, %v1333, 0
      %v1996 = vsel %vm1352, %v1334, 0
      %v1999 = vsel %vm1352, %v1335, 0
      %v2002 = vsel %vm1352, %v1336, 0
      %v2005 = vsel %vm1352, %v1337, 0
      %v2008 = vsel %vm1352, %v1338, 0
      %v2011 = vsel %vm1352, %v1339, 0
      %v2014 = vsel %vm1352, %v1340, 0
      %v2017 = vsel %vm1352, %v1341, 0
      %v2020 = vsel %vm1352, %v1342, 0
      %v2023 = vsel %vm1352, %v1343, 0
      %v2026 = vsel %vm1352, %v1344, 0
      %v2029 = vsel %vm1352, %v1345, 0
      %v2032 = vsel %vm1352, %v1346, 0
      %v2035 = vsel %vm1352, %v1347, 0
      %v2038 = vsel %vm1352, %v1348, 0
      %v2041 = vsel %vm1352, %v1349, 0
      %v2044 = vsel %vm1352, %v1350, 0
      %v2047 = vsel %vm1352, %v1351, 0
      %2049 = vmatprep.subr.mxu0 0.0
      %2050 = vmatpush1.msra.mxu0 %v522
      %2051 = vmatprep.subr.mxu0 0.0
      %2052 = vmatpush1.msra.mxu0 %v523
      %2053 = vmatprep.subr.mxu0 0.0
      %2054 = vmatpush1.msra.mxu0 %v524
      %2055 = vmatprep.subr.mxu0 0.0
      %2056 = vmatpush1.msra.mxu0 %v525
      %2057 = vmatprep.subr.mxu0 0.0
      %2058 = vmatpush1.msra.mxu0 0.0
      %2059 = vmatprep.subr.mxu0 0.0
      %2060 = vmatpush1.msra.mxu0 0.0
      %2061 = vmatprep.subr.mxu0 0.0
      %2062 = vmatpush1.msra.mxu0 0.0
      %2063 = vmatprep.subr.mxu0 0.0
      %2064 = vmatpush1.msra.mxu0 0.0
      %2065 = vmatprep.subr.mxu0 0.0
      %2066 = vmatpush1.msra.mxu0 0.0
      %2067 = vmatprep.subr.mxu0 0.0
      %2068 = vmatpush1.msra.mxu0 0.0
      %2069 = vmatprep.subr.mxu0 0.0
      %2070 = vmatpush1.msra.mxu0 0.0
      %2071 = vmatprep.subr.mxu0 0.0
      %2072 = vmatpush1.msra.mxu0 0.0
      %2073 = vmatprep.subr.mxu0 0.0
      %2074 = vmatpush1.msra.mxu0 0.0
      %2075 = vmatprep.subr.mxu0 0.0
      %2076 = vmatpush1.msra.mxu0 0.0
      %2077 = vmatprep.subr.mxu0 0.0
      %2078 = vmatpush1.msra.mxu0 0.0
      %2079 = vmatprep.subr.mxu0 0.0
      %2080 = vmatpush1.msra.mxu0 0.0
      %2081 = vmatprep.subr.mxu0 0.0
      %2082 = vmatpush1.msra.mxu0 0.0
      %2083 = vmatprep.subr.mxu0 0.0
      %2084 = vmatpush1.msra.mxu0 0.0
      %2085 = vmatprep.subr.mxu0 0.0
      %2086 = vmatpush1.msra.mxu0 0.0
      %2087 = vmatprep.subr.mxu0 0.0
      %2088 = vmatpush1.msra.mxu0 0.0
      %2089 = vmatprep.subr.mxu0 0.0
      %2090 = vmatpush1.msra.mxu0 0.0
      %2091 = vmatprep.subr.mxu0 0.0
      %2092 = vmatpush1.msra.mxu0 0.0
      %2093 = vmatprep.subr.mxu0 0.0
      %2094 = vmatpush1.msra.mxu0 0.0
      %2095 = vmatprep.subr.mxu0 0.0
      %2096 = vmatpush1.msra.mxu0 0.0
      %2097 = vmatprep.subr.mxu0 0.0
      %2098 = vmatpush1.msra.mxu0 0.0
      %2099 = vmatprep.subr.mxu0 0.0
      %2100 = vmatpush1.msra.mxu0 0.0
      %2101 = vmatprep.subr.mxu0 0.0
      %2102 = vmatpush1.msra.mxu0 0.0
      %2103 = vmatprep.subr.mxu0 0.0
      %2104 = vmatpush1.msra.mxu0 0.0
      %2105 = vmatprep.subr.mxu0 0.0
      %2106 = vmatpush1.msra.mxu0 0.0
      %2107 = vmatprep.subr.mxu0 0.0
      %2108 = vmatpush1.msra.mxu0 0.0
      %2109 = vmatprep.subr.mxu0 0.0
      %2110 = vmatpush1.msra.mxu0 0.0
      %2111 = vmatprep.subr.mxu0 0.0
      %2112 = vmatpush1.msra.mxu0 0.0
      %2113 = vmatprep.mubr.f32.mxu0 0.0
      %2114 = vmatmul.mubr.f32.gmra.mrb[0].mxu0 %v1978
      %v2115 = vpop.f32.mrb[0].mxu0
      %v2116 = vadd.f32 0.0, %v2115
      %v2117 = vpop.f32.mrb[0].mxu0
      %2118 = vmatprep.mubr.f32.mxu0 0.0
      %2119 = vmatmul.mubr.f32.gmra.mrb[0].mxu0 %v1981
      %v2120 = vpop.f32.mrb[0].mxu0
      %v2121 = vadd.f32 0.0, %v2120
      %v2122 = vpop.f32.mrb[0].mxu0
      %2123 = vmatprep.mubr.f32.mxu0 0.0
      %2124 = vmatmul.mubr.f32.gmra.mrb[0].mxu0 %v1984
      %v2125 = vpop.f32.mrb[0].mxu0
      %v2126 = vadd.f32 0.0, %v2125
      %v2127 = vpop.f32.mrb[0].mxu0
      %2128 = vmatprep.mubr.f32.mxu0 0.0
      %2129 = vmatmul.mubr.f32.gmra.mrb[0].mxu0 %v1987
      %v2130 = vpop.f32.mrb[0].mxu0
      %v2131 = vadd.f32 0.0, %v2130
      %v2132 = vpop.f32.mrb[0].mxu0
      %2133 = vmatprep.mubr.f32.mxu0 0.0
      %2134 = vmatmul.mubr.f32.gmra.mrb[0].mxu0 %v1990
      %v2135 = vpop.f32.mrb[0].mxu0
      %v2136 = vadd.f32 0.0, %v2135
      %v2137 = vpop.f32.mrb[0].mxu0
      %2138 = vmatprep.mubr.f32.mxu0 0.0
      %2139 = vmatmul.mubr.f32.gmra.mrb[0].mxu0 %v1993
      %v2140 = vpop.f32.mrb[0].mxu0
      %v2141 = vadd.f32 0.0, %v2140
      %v2142 = vpop.f32.mrb[0].mxu0
      %2143 = vmatprep.mubr.f32.mxu0 0.0
      %2144 = vmatmul.mubr.f32.gmra.mrb[0].mxu0 %v1996
      %v2145 = vpop.f32.mrb[0].mxu0
      %v2146 = vadd.f32 0.0, %v2145
      %v2147 = vpop.f32.mrb[0].mxu0
      %2148 = vmatprep.mubr.f32.mxu0 0.0
      %2149 = vmatmul.mubr.f32.gmra.mrb[0].mxu0 %v1999
      %v2150 = vpop.f32.mrb[0].mxu0
      %v2151 = vadd.f32 0.0, %v2150
      %v2152 = vpop.f32.mrb[0].mxu0
      %2153 = vmatprep.mubr.f32.mxu0 0.0
      %2154 = vmatmul.mubr.f32.gmra.mrb[0].mxu0 %v2002
      %v2155 = vpop.f32.mrb[0].mxu0
      %v2156 = vadd.f32 0.0, %v2155
      %v2157 = vpop.f32.mrb[0].mxu0
      %2158 = vmatprep.mubr.f32.mxu0 0.0
      %2159 = vmatmul.mubr.f32.gmra.mrb[0].mxu0 %v2005
      %v2160 = vpop.f32.mrb[0].mxu0
      %v2161 = vadd.f32 0.0, %v2160
      %v2162 = vpop.f32.mrb[0].mxu0
      %2163 = vmatprep.mubr.f32.mxu0 0.0
      %2164 = vmatmul.mubr.f32.gmra.mrb[0].mxu0 %v2008
      %v2165 = vpop.f32.mrb[0].mxu0
      %v2166 = vadd.f32 0.0, %v2165
      %v2167 = vpop.f32.mrb[0].mxu0
      %2168 = vmatprep.mubr.f32.mxu0 0.0
      %2169 = vmatmul.mubr.f32.gmra.mrb[0].mxu0 %v2011
      %v2170 = vpop.f32.mrb[0].mxu0
      %v2171 = vadd.f32 0.0, %v2170
      %v2172 = vpop.f32.mrb[0].mxu0
      %2173 = vmatprep.mubr.f32.mxu0 0.0
      %2174 = vmatmul.mubr.f32.gmra.mrb[0].mxu0 %v2014
      %v2175 = vpop.f32.mrb[0].mxu0
      %v2176 = vadd.f32 0.0, %v2175
      %v2177 = vpop.f32.mrb[0].mxu0
      %2178 = vmatprep.mubr.f32.mxu0 0.0
      %2179 = vmatmul.mubr.f32.gmra.mrb[0].mxu0 %v2017
      %v2180 = vpop.f32.mrb[0].mxu0
      %v2181 = vadd.f32 0.0, %v2180
      %v2182 = vpop.f32.mrb[0].mxu0
      %2183 = vmatprep.mubr.f32.mxu0 0.0
      %2184 = vmatmul.mubr.f32.gmra.mrb[0].mxu0 %v2020
      %v2185 = vpop.f32.mrb[0].mxu0
      %v2186 = vadd.f32 0.0, %v2185
      %v2187 = vpop.f32.mrb[0].mxu0
      %2188 = vmatprep.mubr.f32.mxu0 0.0
      %2189 = vmatmul.mubr.f32.gmra.mrb[0].mxu0 %v2023
      %v2190 = vpop.f32.mrb[0].mxu0
      %v2191 = vadd.f32 0.0, %v2190
      %v2192 = vpop.f32.mrb[0].mxu0
      %2193 = vmatprep.mubr.f32.mxu0 0.0
      %2194 = vmatmul.mubr.f32.gmra.mrb[0].mxu0 %v2026
      %v2195 = vpop.f32.mrb[0].mxu0
      %v2196 = vadd.f32 0.0, %v2195
      %v2197 = vpop.f32.mrb[0].mxu0
      %2198 = vmatprep.mubr.f32.mxu0 0.0
      %2199 = vmatmul.mubr.f32.gmra.mrb[0].mxu0 %v2029
      %v2200 = vpop.f32.mrb[0].mxu0
      %v2201 = vadd.f32 0.0, %v2200
      %v2202 = vpop.f32.mrb[0].mxu0
      %2203 = vmatprep.mubr.f32.mxu0 0.0
      %2204 = vmatmul.mubr.f32.gmra.mrb[0].mxu0 %v2032
      %v2205 = vpop.f32.mrb[0].mxu0
      %v2206 = vadd.f32 0.0, %v2205
      %v2207 = vpop.f32.mrb[0].mxu0
      %2208 = vmatprep.mubr.f32.mxu0 0.0
      %2209 = vmatmul.mubr.f32.gmra.mrb[0].mxu0 %v2035
      %v2210 = vpop.f32.mrb[0].mxu0
      %v2211 = vadd.f32 0.0, %v2210
      %v2212 = vpop.f32.mrb[0].mxu0
      %2213 = vmatprep.mubr.f32.mxu0 0.0
      %2214 = vmatmul.mubr.f32.gmra.mrb[0].mxu0 %v2038
      %v2215 = vpop.f32.mrb[0].mxu0
      %v2216 = vadd.f32 0.0, %v2215
      %v2217 = vpop.f32.mrb[0].mxu0
      %2218 = vmatprep.mubr.f32.mxu0 0.0
      %2219 = vmatmul.mubr.f32.gmra.mrb[0].mxu0 %v2041
      %v2220 = vpop.f32.mrb[0].mxu0
      %v2221 = vadd.f32 0.0, %v2220
      %v2222 = vpop.f32.mrb[0].mxu0
      %2223 = vmatprep.mubr.f32.mxu0 0.0
      %2224 = vmatmul.mubr.f32.gmra.mrb[0].mxu0 %v2044
      %v2225 = vpop.f32.mrb[0].mxu0
      %v2226 = vadd.f32 0.0, %v2225
      %v2227 = vpop.f32.mrb[0].mxu0
      %2228 = vmatprep.mubr.f32.mxu0 0.0
      %2229 = vmatmul.mubr.f32.gmra.mrb[0].mxu0 %v2047
      %v2230 = vpop.f32.mrb[0].mxu0
      %v2231 = vadd.f32 0.0, %v2230
      %v2232 = vpop.f32.mrb[0].mxu0
      %2233 = vdwg.mxu0
      %v2234 = vlaneseq
      %v2235 = vshrl.u32 %v2234, 7
      %v2236 = vsub.s32 1, %v2235
      %v2237 = vrot.slane %v542, %v2236
      %2238 = vmatprep.subr.mxu0 0.0
      %2239 = vmatpush1.msra.mxu0 %v538
      %2240 = vmatprep.subr.mxu0 0.0
      %2241 = vmatpush1.msra.mxu0 %v539
      %2242 = vmatprep.subr.mxu0 0.0
      %2243 = vmatpush1.msra.mxu0 %v540
      %2244 = vmatprep.subr.mxu0 0.0
      %2245 = vmatpush1.msra.mxu0 %v541
      %2246 = vmatprep.subr.mxu0 0.0
      %2247 = vmatpush1.msra.mxu0 0.0
      %2248 = vmatprep.subr.mxu0 0.0
      %2249 = vmatpush1.msra.mxu0 0.0
      %2250 = vmatprep.subr.mxu0 0.0
      %2251 = vmatpush1.msra.mxu0 0.0
      %2252 = vmatprep.subr.mxu0 0.0
      %2253 = vmatpush1.msra.mxu0 0.0
      %2254 = vmatprep.subr.mxu0 0.0
      %2255 = vmatpush1.msra.mxu0 0.0
      %2256 = vmatprep.subr.mxu0 0.0
      %2257 = vmatpush1.msra.mxu0 0.0
      %2258 = vmatprep.subr.mxu0 0.0
      %2259 = vmatpush1.msra.mxu0 0.0
      %2260 = vmatprep.subr.mxu0 0.0
      %2261 = vmatpush1.msra.mxu0 0.0
      %2262 = vmatprep.subr.mxu0 0.0
      %2263 = vmatpush1.msra.mxu0 0.0
      %2264 = vmatprep.subr.mxu0 0.0
      %2265 = vmatpush1.msra.mxu0 0.0
      %2266 = vmatprep.subr.mxu0 0.0
      %2267 = vmatpush1.msra.mxu0 0.0
      %2268 = vmatprep.subr.mxu0 0.0
      %2269 = vmatpush1.msra.mxu0 0.0
      %2270 = vmatprep.subr.mxu0 0.0
      %2271 = vmatpush1.msra.mxu0 0.0
      %2272 = vmatprep.subr.mxu0 0.0
      %2273 = vmatpush1.msra.mxu0 0.0
      %2274 = vmatprep.subr.mxu0 0.0
      %2275 = vmatpush1.msra.mxu0 0.0
      %2276 = vmatprep.subr.mxu0 0.0
      %2277 = vmatpush1.msra.mxu0 0.0
      %2278 = vmatprep.subr.mxu0 0.0
      %2279 = vmatpush1.msra.mxu0 0.0
      %2280 = vmatprep.subr.mxu0 0.0
      %2281 = vmatpush1.msra.mxu0 0.0
      %2282 = vmatprep.subr.mxu0 0.0
      %2283 = vmatpush1.msra.mxu0 0.0
      %2284 = vmatprep.subr.mxu0 0.0
      %2285 = vmatpush1.msra.mxu0 0.0
      %2286 = vmatprep.subr.mxu0 0.0
      %2287 = vmatpush1.msra.mxu0 0.0
      %2288 = vmatprep.subr.mxu0 0.0
      %2289 = vmatpush1.msra.mxu0 0.0
      %2290 = vmatprep.subr.mxu0 0.0
      %2291 = vmatpush1.msra.mxu0 0.0
      %2292 = vmatprep.subr.mxu0 0.0
      %2293 = vmatpush1.msra.mxu0 0.0
      %2294 = vmatprep.subr.mxu0 0.0
      %2295 = vmatpush1.msra.mxu0 0.0
      %2296 = vmatprep.subr.mxu0 0.0
      %2297 = vmatpush1.msra.mxu0 0.0
      %2298 = vmatprep.subr.mxu0 0.0
      %2299 = vmatpush1.msra.mxu0 0.0
      %2300 = vmatprep.subr.mxu0 0.0
      %2301 = vmatpush1.msra.mxu0 0.0
      %2302 = vmatprep.mubr.f32.mxu0 0.0
      %2303 = vmatmul.mubr.f32.gmra.mrb[0].mxu0 %v1978
      %v2304 = vpop.f32.mrb[0].mxu0
      %v2305 = vadd.f32 %v2237, %v2304
      %v2306 = vpop.f32.mrb[0].mxu0
      %2307 = vmatprep.mubr.f32.mxu0 0.0
      %2308 = vmatmul.mubr.f32.gmra.mrb[0].mxu0 %v1981
      %v2309 = vpop.f32.mrb[0].mxu0
      %v2310 = vadd.f32 %v2237, %v2309
      %v2311 = vpop.f32.mrb[0].mxu0
      %2312 = vmatprep.mubr.f32.mxu0 0.0
      %2313 = vmatmul.mubr.f32.gmra.mrb[0].mxu0 %v1984
      %v2314 = vpop.f32.mrb[0].mxu0
      %v2315 = vadd.f32 %v2237, %v2314
      %v2316 = vpop.f32.mrb[0].mxu0
      %2317 = vmatprep.mubr.f32.mxu0 0.0
      %2318 = vmatmul.mubr.f32.gmra.mrb[0].mxu0 %v1987
      %v2319 = vpop.f32.mrb[0].mxu0
      %v2320 = vadd.f32 %v2237, %v2319
      %v2321 = vpop.f32.mrb[0].mxu0
      %2322 = vmatprep.mubr.f32.mxu0 0.0
      %2323 = vmatmul.mubr.f32.gmra.mrb[0].mxu0 %v1990
      %v2324 = vpop.f32.mrb[0].mxu0
      %v2325 = vadd.f32 %v2237, %v2324
      %v2326 = vpop.f32.mrb[0].mxu0
      %2327 = vmatprep.mubr.f32.mxu0 0.0
      %2328 = vmatmul.mubr.f32.gmra.mrb[0].mxu0 %v1993
      %v2329 = vpop.f32.mrb[0].mxu0
      %v2330 = vadd.f32 %v2237, %v2329
      %v2331 = vpop.f32.mrb[0].mxu0
      %2332 = vmatprep.mubr.f32.mxu0 0.0
      %2333 = vmatmul.mubr.f32.gmra.mrb[0].mxu0 %v1996
      %v2334 = vpop.f32.mrb[0].mxu0
      %v2335 = vadd.f32 %v2237, %v2334
      %v2336 = vpop.f32.mrb[0].mxu0
      %2337 = vmatprep.mubr.f32.mxu0 0.0
      %2338 = vmatmul.mubr.f32.gmra.mrb[0].mxu0 %v1999
      %v2339 = vpop.f32.mrb[0].mxu0
      %v2340 = vadd.f32 %v2237, %v2339
      %v2341 = vpop.f32.mrb[0].mxu0
      %2342 = vmatprep.mubr.f32.mxu0 0.0
      %2343 = vmatmul.mubr.f32.gmra.mrb[0].mxu0 %v2002
      %v2344 = vpop.f32.mrb[0].mxu0
      %v2345 = vadd.f32 %v2237, %v2344
      %v2346 = vpop.f32.mrb[0].mxu0
      %2347 = vmatprep.mubr.f32.mxu0 0.0
      %2348 = vmatmul.mubr.f32.gmra.mrb[0].mxu0 %v2005
      %v2349 = vpop.f32.mrb[0].mxu0
      %v2350 = vadd.f32 %v2237, %v2349
      %v2351 = vpop.f32.mrb[0].mxu0
      %2352 = vmatprep.mubr.f32.mxu0 0.0
      %2353 = vmatmul.mubr.f32.gmra.mrb[0].mxu0 %v2008
      %v2354 = vpop.f32.mrb[0].mxu0
      %v2355 = vadd.f32 %v2237, %v2354
      %v2356 = vpop.f32.mrb[0].mxu0
      %2357 = vmatprep.mubr.f32.mxu0 0.0
      %2358 = vmatmul.mubr.f32.gmra.mrb[0].mxu0 %v2011
      %v2359 = vpop.f32.mrb[0].mxu0
      %v2360 = vadd.f32 %v2237, %v2359
      %v2361 = vpop.f32.mrb[0].mxu0
      %2362 = vmatprep.mubr.f32.mxu0 0.0
      %2363 = vmatmul.mubr.f32.gmra.mrb[0].mxu0 %v2014
      %v2364 = vpop.f32.mrb[0].mxu0
      %v2365 = vadd.f32 %v2237, %v2364
      %v2366 = vpop.f32.mrb[0].mxu0
      %2367 = vmatprep.mubr.f32.mxu0 0.0
      %2368 = vmatmul.mubr.f32.gmra.mrb[0].mxu0 %v2017
      %v2369 = vpop.f32.mrb[0].mxu0
      %v2370 = vadd.f32 %v2237, %v2369
      %v2371 = vpop.f32.mrb[0].mxu0
      %2372 = vmatprep.mubr.f32.mxu0 0.0
      %2373 = vmatmul.mubr.f32.gmra.mrb[0].mxu0 %v2020
      %v2374 = vpop.f32.mrb[0].mxu0
      %v2375 = vadd.f32 %v2237, %v2374
      %v2376 = vpop.f32.mrb[0].mxu0
      %2377 = vmatprep.mubr.f32.mxu0 0.0
      %2378 = vmatmul.mubr.f32.gmra.mrb[0].mxu0 %v2023
      %v2379 = vpop.f32.mrb[0].mxu0
      %v2380 = vadd.f32 %v2237, %v2379
      %v2381 = vpop.f32.mrb[0].mxu0
      %2382 = vmatprep.mubr.f32.mxu0 0.0
      %2383 = vmatmul.mubr.f32.gmra.mrb[0].mxu0 %v2026
      %v2384 = vpop.f32.mrb[0].mxu0
      %v2385 = vadd.f32 %v2237, %v2384
      %v2386 = vpop.f32.mrb[0].mxu0
      %2387 = vmatprep.mubr.f32.mxu0 0.0
      %2388 = vmatmul.mubr.f32.gmra.mrb[0].mxu0 %v2029
      %v2389 = vpop.f32.mrb[0].mxu0
      %v2390 = vadd.f32 %v2237, %v2389
      %v2391 = vpop.f32.mrb[0].mxu0
      %2392 = vmatprep.mubr.f32.mxu0 0.0
      %2393 = vmatmul.mubr.f32.gmra.mrb[0].mxu0 %v2032
      %v2394 = vpop.f32.mrb[0].mxu0
      %v2395 = vadd.f32 %v2237, %v2394
      %v2396 = vpop.f32.mrb[0].mxu0
      %2397 = vmatprep.mubr.f32.mxu0 0.0
      %2398 = vmatmul.mubr.f32.gmra.mrb[0].mxu0 %v2035
      %v2399 = vpop.f32.mrb[0].mxu0
      %v2400 = vadd.f32 %v2237, %v2399
      %v2401 = vpop.f32.mrb[0].mxu0
      %2402 = vmatprep.mubr.f32.mxu0 0.0
      %2403 = vmatmul.mubr.f32.gmra.mrb[0].mxu0 %v2038
      %v2404 = vpop.f32.mrb[0].mxu0
      %v2405 = vadd.f32 %v2237, %v2404
      %v2406 = vpop.f32.mrb[0].mxu0
      %2407 = vmatprep.mubr.f32.mxu0 0.0
      %2408 = vmatmul.mubr.f32.gmra.mrb[0].mxu0 %v2041
      %v2409 = vpop.f32.mrb[0].mxu0
      %v2410 = vadd.f32 %v2237, %v2409
      %v2411 = vpop.f32.mrb[0].mxu0
      %2412 = vmatprep.mubr.f32.mxu0 0.0
      %2413 = vmatmul.mubr.f32.gmra.mrb[0].mxu0 %v2044
      %v2414 = vpop.f32.mrb[0].mxu0
      %v2415 = vadd.f32 %v2237, %v2414
      %v2416 = vpop.f32.mrb[0].mxu0
      %2417 = vmatprep.mubr.f32.mxu0 0.0
      %2418 = vmatmul.mubr.f32.gmra.mrb[0].mxu0 %v2047
      %v2419 = vpop.f32.mrb[0].mxu0
      %v2420 = vadd.f32 %v2237, %v2419
      %v2421 = vpop.f32.mrb[0].mxu0
      %2422 = vdwg.mxu0
      %vm2423 = vcmp.gt.f32.partialorder %v2305, 0.0
      %vm2424 = vcmp.gt.f32.partialorder %v2310, 0.0
      %vm2425 = vcmp.gt.f32.partialorder %v2315, 0.0
      %vm2426 = vcmp.gt.f32.partialorder %v2320, 0.0
      %vm2427 = vcmp.gt.f32.partialorder %v2325, 0.0
      %vm2428 = vcmp.gt.f32.partialorder %v2330, 0.0
      %vm2429 = vcmp.gt.f32.partialorder %v2335, 0.0
      %vm2430 = vcmp.gt.f32.partialorder %v2340, 0.0
      %vm2431 = vcmp.gt.f32.partialorder %v2345, 0.0
      %vm2432 = vcmp.gt.f32.partialorder %v2350, 0.0
      %vm2433 = vcmp.gt.f32.partialorder %v2355, 0.0
      %vm2434 = vcmp.gt.f32.partialorder %v2360, 0.0
      %vm2435 = vcmp.gt.f32.partialorder %v2365, 0.0
      %vm2436 = vcmp.gt.f32.partialorder %v2370, 0.0
      %vm2437 = vcmp.gt.f32.partialorder %v2375, 0.0
      %vm2438 = vcmp.gt.f32.partialorder %v2380, 0.0
      %vm2439 = vcmp.gt.f32.partialorder %v2385, 0.0
      %vm2440 = vcmp.gt.f32.partialorder %v2390, 0.0
      %vm2441 = vcmp.gt.f32.partialorder %v2395, 0.0
      %vm2442 = vcmp.gt.f32.partialorder %v2400, 0.0
      %vm2443 = vcmp.gt.f32.partialorder %v2405, 0.0
      %vm2444 = vcmp.gt.f32.partialorder %v2410, 0.0
      %vm2445 = vcmp.gt.f32.partialorder %v2415, 0.0
      %vm2446 = vcmp.gt.f32.partialorder %v2420, 0.0
      %v2447 = vmul.f32 %v2305, 0.01
      %v2448 = vmul.f32 %v2310, 0.01
      %v2449 = vmul.f32 %v2315, 0.01
      %v2450 = vmul.f32 %v2320, 0.01
      %v2451 = vmul.f32 %v2325, 0.01
      %v2452 = vmul.f32 %v2330, 0.01
      %v2453 = vmul.f32 %v2335, 0.01
      %v2454 = vmul.f32 %v2340, 0.01
      %v2455 = vmul.f32 %v2345, 0.01
      %v2456 = vmul.f32 %v2350, 0.01
      %v2457 = vmul.f32 %v2355, 0.01
      %v2458 = vmul.f32 %v2360, 0.01
      %v2459 = vmul.f32 %v2365, 0.01
      %v2460 = vmul.f32 %v2370, 0.01
      %v2461 = vmul.f32 %v2375, 0.01
      %v2462 = vmul.f32 %v2380, 0.01
      %v2463 = vmul.f32 %v2385, 0.01
      %v2464 = vmul.f32 %v2390, 0.01
      %v2465 = vmul.f32 %v2395, 0.01
      %v2466 = vmul.f32 %v2400, 0.01
      %v2467 = vmul.f32 %v2405, 0.01
      %v2468 = vmul.f32 %v2410, 0.01
      %v2469 = vmul.f32 %v2415, 0.01
      %v2470 = vmul.f32 %v2420, 0.01
      %v2471 = vsel %vm2423, %v2305, %v2447
      %v2472 = vsel %vm2424, %v2310, %v2448
      %v2473 = vsel %vm2425, %v2315, %v2449
      %v2474 = vsel %vm2426, %v2320, %v2450
      %v2475 = vsel %vm2427, %v2325, %v2451
      %v2476 = vsel %vm2428, %v2330, %v2452
      %v2477 = vsel %vm2429, %v2335, %v2453
      %v2478 = vsel %vm2430, %v2340, %v2454
      %v2479 = vsel %vm2431, %v2345, %v2455
      %v2480 = vsel %vm2432, %v2350, %v2456
      %v2481 = vsel %vm2433, %v2355, %v2457
      %v2482 = vsel %vm2434, %v2360, %v2458
      %v2483 = vsel %vm2435, %v2365, %v2459
      %v2484 = vsel %vm2436, %v2370, %v2460
      %v2485 = vsel %vm2437, %v2375, %v2461
      %v2486 = vsel %vm2438, %v2380, %v2462
      %v2487 = vsel %vm2439, %v2385, %v2463
      %v2488 = vsel %vm2440, %v2390, %v2464
      %v2489 = vsel %vm2441, %v2395, %v2465
      %v2490 = vsel %vm2442, %v2400, %v2466
      %v2491 = vsel %vm2443, %v2405, %v2467
      %v2492 = vsel %vm2444, %v2410, %v2468
      %v2493 = vsel %vm2445, %v2415, %v2469
      %v2494 = vsel %vm2446, %v2420, %v2470
      %v2495 = vmul.f32 %v1444, %v1702
      %v2496 = vmul.f32 %v1449, %v1707
      %v2497 = vmul.f32 %v1454, %v1712
      %v2498 = vmul.f32 %v1459, %v1717
      %v2499 = vmul.f32 %v1464, %v1722
      %v2500 = vmul.f32 %v1469, %v1727
      %v2501 = vmul.f32 %v1474, %v1732
      %v2502 = vmul.f32 %v1479, %v1737
      %v2503 = vmul.f32 %v1444, %v1742
      %v2504 = vmul.f32 %v1449, %v1747
      %v2505 = vmul.f32 %v1454, %v1752
      %v2506 = vmul.f32 %v1459, %v1757
      %v2507 = vmul.f32 %v1464, %v1762
      %v2508 = vmul.f32 %v1469, %v1767
      %v2509 = vmul.f32 %v1474, %v1772
      %v2510 = vmul.f32 %v1479, %v1777
      %v2511 = vsel %vm1352, %v2495, 0.0
      %2512 = vadd.xlane.f32.xlu0 %v2511
      %v2513 = vpop.xlane.xlu0 %2512
      %v2514 = vsel %vm1352, %v2496, 0.0
      %2515 = vadd.xlane.f32.xlu0 %v2514
      %v2516 = vpop.xlane.xlu0 %2515
      %v2517 = vsel %vm1352, %v2497, 0.0
      %2518 = vadd.xlane.f32.xlu0 %v2517
      %v2519 = vpop.xlane.xlu0 %2518
      %v2520 = vsel %vm1352, %v2498, 0.0
      %2521 = vadd.xlane.f32.xlu0 %v2520
      %v2522 = vpop.xlane.xlu0 %2521
      %v2523 = vsel %vm1352, %v2499, 0.0
      %2524 = vadd.xlane.f32.xlu0 %v2523
      %v2525 = vpop.xlane.xlu0 %2524
      %v2526 = vsel %vm1352, %v2500, 0.0
      %2527 = vadd.xlane.f32.xlu0 %v2526
      %v2528 = vpop.xlane.xlu0 %2527
      %v2529 = vsel %vm1352, %v2501, 0.0
      %2530 = vadd.xlane.f32.xlu0 %v2529
      %v2531 = vpop.xlane.xlu0 %2530
      %v2532 = vsel %vm1352, %v2502, 0.0
      %2533 = vadd.xlane.f32.xlu0 %v2532
      %v2534 = vpop.xlane.xlu0 %2533
      %v2535 = vsel %vm1352, %v2503, 0.0
      %2536 = vadd.xlane.f32.xlu0 %v2535
      %v2537 = vpop.xlane.xlu0 %2536
      %v2538 = vsel %vm1352, %v2504, 0.0
      %2539 = vadd.xlane.f32.xlu0 %v2538
      %v2540 = vpop.xlane.xlu0 %2539
      %v2541 = vsel %vm1352, %v2505, 0.0
      %2542 = vadd.xlane.f32.xlu0 %v2541
      %v2543 = vpop.xlane.xlu0 %2542
      %v2544 = vsel %vm1352, %v2506, 0.0
      %2545 = vadd.xlane.f32.xlu0 %v2544
      %v2546 = vpop.xlane.xlu0 %2545
      %v2547 = vsel %vm1352, %v2507, 0.0
      %2548 = vadd.xlane.f32.xlu0 %v2547
      %v2549 = vpop.xlane.xlu0 %2548
      %v2550 = vsel %vm1352, %v2508, 0.0
      %2551 = vadd.xlane.f32.xlu0 %v2550
      %v2552 = vpop.xlane.xlu0 %2551
      %v2553 = vsel %vm1352, %v2509, 0.0
      %2554 = vadd.xlane.f32.xlu0 %v2553
      %v2555 = vpop.xlane.xlu0 %2554
      %v2556 = vsel %vm1352, %v2510, 0.0
      %2557 = vadd.xlane.f32.xlu0 %v2556
      %v2558 = vpop.xlane.xlu0 %2557
      %v2559 = vmul.f32 %v2513, 0.17677669
      %v2560 = vmul.f32 %v2516, 0.17677669
      %v2561 = vmul.f32 %v2519, 0.17677669
      %v2562 = vmul.f32 %v2522, 0.17677669
      %v2563 = vmul.f32 %v2525, 0.17677669
      %v2564 = vmul.f32 %v2528, 0.17677669
      %v2565 = vmul.f32 %v2531, 0.17677669
      %v2566 = vmul.f32 %v2534, 0.17677669
      %v2567 = vmul.f32 %v2537, 0.17677669
      %v2568 = vmul.f32 %v2540, 0.17677669
      %v2569 = vmul.f32 %v2543, 0.17677669
      %v2570 = vmul.f32 %v2546, 0.17677669
      %v2571 = vmul.f32 %v2549, 0.17677669
      %v2572 = vmul.f32 %v2552, 0.17677669
      %v2573 = vmul.f32 %v2555, 0.17677669
      %v2574 = vmul.f32 %v2558, 0.17677669
      %v2575 = vmax.f32 %v2559, %v2567
      %v2576 = vmax.f32 %v2560, %v2568
      %v2577 = vmax.f32 %v2561, %v2569
      %v2578 = vmax.f32 %v2562, %v2570
      %v2579 = vmax.f32 %v2563, %v2571
      %v2580 = vmax.f32 %v2564, %v2572
      %v2581 = vmax.f32 %v2565, %v2573
      %v2582 = vmax.f32 %v2566, %v2574
      %v2583 = vsub.f32 %v2559, %v2575
      %v2584 = vsub.f32 %v2560, %v2576
      %v2585 = vsub.f32 %v2561, %v2577
      %v2586 = vsub.f32 %v2562, %v2578
      %v2587 = vsub.f32 %v2563, %v2579
      %v2588 = vsub.f32 %v2564, %v2580
      %v2589 = vsub.f32 %v2565, %v2581
      %v2590 = vsub.f32 %v2566, %v2582
      %v2591 = vsub.f32 %v2567, %v2575
      %v2592 = vsub.f32 %v2568, %v2576
      %v2593 = vsub.f32 %v2569, %v2577
      %v2594 = vsub.f32 %v2570, %v2578
      %v2595 = vsub.f32 %v2571, %v2579
      %v2596 = vsub.f32 %v2572, %v2580
      %v2597 = vsub.f32 %v2573, %v2581
      %v2598 = vsub.f32 %v2574, %v2582
      %v2599 = vmul.f32 %v2583, 1.442695
      %v2600 = vpow.pop %v2599
      %v2601 = vmul.f32 %v2584, 1.442695
      %v2602 = vpow.pop %v2601
      %v2603 = vmul.f32 %v2585, 1.442695
      %v2604 = vpow.pop %v2603
      %v2605 = vmul.f32 %v2586, 1.442695
      %v2606 = vpow.pop %v2605
      %v2607 = vmul.f32 %v2587, 1.442695
      %v2608 = vpow.pop %v2607
      %v2609 = vmul.f32 %v2588, 1.442695
      %v2610 = vpow.pop %v2609
      %v2611 = vmul.f32 %v2589, 1.442695
      %v2612 = vpow.pop %v2611
      %v2613 = vmul.f32 %v2590, 1.442695
      %v2614 = vpow.pop %v2613
      %v2615 = vmul.f32 %v2591, 1.442695
      %v2616 = vpow.pop %v2615
      %v2617 = vmul.f32 %v2592, 1.442695
      %v2618 = vpow.pop %v2617
      %v2619 = vmul.f32 %v2593, 1.442695
      %v2620 = vpow.pop %v2619
      %v2621 = vmul.f32 %v2594, 1.442695
      %v2622 = vpow.pop %v2621
      %v2623 = vmul.f32 %v2595, 1.442695
      %v2624 = vpow.pop %v2623
      %v2625 = vmul.f32 %v2596, 1.442695
      %v2626 = vpow.pop %v2625
      %v2627 = vmul.f32 %v2597, 1.442695
      %v2628 = vpow.pop %v2627
      %v2629 = vmul.f32 %v2598, 1.442695
      %v2630 = vpow.pop %v2629
      %v2631 = vadd.f32 %v2600, %v2616
      %v2632 = vadd.f32 %v2602, %v2618
      %v2633 = vadd.f32 %v2604, %v2620
      %v2634 = vadd.f32 %v2606, %v2622
      %v2635 = vadd.f32 %v2608, %v2624
      %v2636 = vadd.f32 %v2610, %v2626
      %v2637 = vadd.f32 %v2612, %v2628
      %v2638 = vadd.f32 %v2614, %v2630
      %v2639 = vrcp.pop %v2631
      %v2640 = vrcp.pop %v2632
      %v2641 = vrcp.pop %v2633
      %v2642 = vrcp.pop %v2634
      %v2643 = vrcp.pop %v2635
      %v2644 = vrcp.pop %v2636
      %v2645 = vrcp.pop %v2637
      %v2646 = vrcp.pop %v2638
      %v2647 = vmul.f32 %v2600, %v2639
      %v2648 = vmul.f32 %v2602, %v2640
      %v2649 = vmul.f32 %v2604, %v2641
      %v2650 = vmul.f32 %v2606, %v2642
      %v2651 = vmul.f32 %v2608, %v2643
      %v2652 = vmul.f32 %v2610, %v2644
      %v2653 = vmul.f32 %v2612, %v2645
      %v2654 = vmul.f32 %v2614, %v2646
      %v2655 = vmul.f32 %v2616, %v2639
      %v2656 = vmul.f32 %v2618, %v2640
      %v2657 = vmul.f32 %v2620, %v2641
      %v2658 = vmul.f32 %v2622, %v2642
      %v2659 = vmul.f32 %v2624, %v2643
      %v2660 = vmul.f32 %v2626, %v2644
      %v2661 = vmul.f32 %v2628, %v2645
      %v2662 = vmul.f32 %v2630, %v2646
      %v2663 = vmul.f32 %v2647, %v1961
      %v2664 = vmul.f32 %v2648, %v1962
      %v2665 = vmul.f32 %v2649, %v1963
      %v2666 = vmul.f32 %v2650, %v1964
      %v2667 = vmul.f32 %v2651, %v1965
      %v2668 = vmul.f32 %v2652, %v1966
      %v2669 = vmul.f32 %v2653, %v1967
      %v2670 = vmul.f32 %v2654, %v1968
      %v2671 = vmul.f32 %v2655, %v1969
      %v2672 = vmul.f32 %v2656, %v1970
      %v2673 = vmul.f32 %v2657, %v1971
      %v2674 = vmul.f32 %v2658, %v1972
      %v2675 = vmul.f32 %v2659, %v1973
      %v2676 = vmul.f32 %v2660, %v1974
      %v2677 = vmul.f32 %v2661, %v1975
      %v2678 = vmul.f32 %v2662, %v1976
      %v2679 = vsel %vm1352, %v2663, 0.0
      %v2680 = vsel %vm1352, %v2671, 0.0
      %v2681 = vadd.f32 %v2679, %v2680
      %v2682 = vsel %vm1352, %v2664, 0.0
      %v2683 = vsel %vm1352, %v2672, 0.0
      %v2684 = vadd.f32 %v2682, %v2683
      %v2685 = vsel %vm1352, %v2665, 0.0
      %v2686 = vsel %vm1352, %v2673, 0.0
      %v2687 = vadd.f32 %v2685, %v2686
      %v2688 = vsel %vm1352, %v2666, 0.0
      %v2689 = vsel %vm1352, %v2674, 0.0
      %v2690 = vadd.f32 %v2688, %v2689
      %v2691 = vsel %vm1352, %v2667, 0.0
      %v2692 = vsel %vm1352, %v2675, 0.0
      %v2693 = vadd.f32 %v2691, %v2692
      %v2694 = vsel %vm1352, %v2668, 0.0
      %v2695 = vsel %vm1352, %v2676, 0.0
      %v2696 = vadd.f32 %v2694, %v2695
      %v2697 = vsel %vm1352, %v2669, 0.0
      %v2698 = vsel %vm1352, %v2677, 0.0
      %v2699 = vadd.f32 %v2697, %v2698
      %v2700 = vsel %vm1352, %v2670, 0.0
      %v2701 = vsel %vm1352, %v2678, 0.0
      %v2702 = vadd.f32 %v2700, %v2701
      %v2703 = vmul.f32 %v1549, %v2116
      %v2704 = vmul.f32 %v1554, %v2121
      %v2705 = vmul.f32 %v1559, %v2126
      %v2706 = vmul.f32 %v1564, %v2131
      %v2707 = vmul.f32 %v1569, %v2136
      %v2708 = vmul.f32 %v1574, %v2141
      %v2709 = vmul.f32 %v1579, %v2146
      %v2710 = vmul.f32 %v1584, %v2151
      %v2711 = vmul.f32 %v1549, %v2156
      %v2712 = vmul.f32 %v1554, %v2161
      %v2713 = vmul.f32 %v1559, %v2166
      %v2714 = vmul.f32 %v1564, %v2171
      %v2715 = vmul.f32 %v1569, %v2176
      %v2716 = vmul.f32 %v1574, %v2181
      %v2717 = vmul.f32 %v1579, %v2186
      %v2718 = vmul.f32 %v1584, %v2191
      %v2719 = vmul.f32 %v1549, %v2196
      %v2720 = vmul.f32 %v1554, %v2201
      %v2721 = vmul.f32 %v1559, %v2206
      %v2722 = vmul.f32 %v1564, %v2211
      %v2723 = vmul.f32 %v1569, %v2216
      %v2724 = vmul.f32 %v1574, %v2221
      %v2725 = vmul.f32 %v1579, %v2226
      %v2726 = vmul.f32 %v1584, %v2231
      %v2727 = vsel %vm1352, %v2703, 0.0
      %2728 = vadd.xlane.f32.xlu0 %v2727
      %v2729 = vpop.xlane.xlu0 %2728
      %v2730 = vsel %vm1352, %v2704, 0.0
      %2731 = vadd.xlane.f32.xlu0 %v2730
      %v2732 = vpop.xlane.xlu0 %2731
      %v2733 = vsel %vm1352, %v2705, 0.0
      %2734 = vadd.xlane.f32.xlu0 %v2733
      %v2735 = vpop.xlane.xlu0 %2734
      %v2736 = vsel %vm1352, %v2706, 0.0
      %2737 = vadd.xlane.f32.xlu0 %v2736
      %v2738 = vpop.xlane.xlu0 %2737
      %v2739 = vsel %vm1352, %v2707, 0.0
      %2740 = vadd.xlane.f32.xlu0 %v2739
      %v2741 = vpop.xlane.xlu0 %2740
      %v2742 = vsel %vm1352, %v2708, 0.0
      %2743 = vadd.xlane.f32.xlu0 %v2742
      %v2744 = vpop.xlane.xlu0 %2743
      %v2745 = vsel %vm1352, %v2709, 0.0
      %2746 = vadd.xlane.f32.xlu0 %v2745
      %v2747 = vpop.xlane.xlu0 %2746
      %v2748 = vsel %vm1352, %v2710, 0.0
      %2749 = vadd.xlane.f32.xlu0 %v2748
      %v2750 = vpop.xlane.xlu0 %2749
      %v2751 = vsel %vm1352, %v2711, 0.0
      %2752 = vadd.xlane.f32.xlu0 %v2751
      %v2753 = vpop.xlane.xlu0 %2752
      %v2754 = vsel %vm1352, %v2712, 0.0
      %2755 = vadd.xlane.f32.xlu0 %v2754
      %v2756 = vpop.xlane.xlu0 %2755
      %v2757 = vsel %vm1352, %v2713, 0.0
      %2758 = vadd.xlane.f32.xlu0 %v2757
      %v2759 = vpop.xlane.xlu0 %2758
      %v2760 = vsel %vm1352, %v2714, 0.0
      %2761 = vadd.xlane.f32.xlu0 %v2760
      %v2762 = vpop.xlane.xlu0 %2761
      %v2763 = vsel %vm1352, %v2715, 0.0
      %2764 = vadd.xlane.f32.xlu0 %v2763
      %v2765 = vpop.xlane.xlu0 %2764
      %v2766 = vsel %vm1352, %v2716, 0.0
      %2767 = vadd.xlane.f32.xlu0 %v2766
      %v2768 = vpop.xlane.xlu0 %2767
      %v2769 = vsel %vm1352, %v2717, 0.0
      %2770 = vadd.xlane.f32.xlu0 %v2769
      %v2771 = vpop.xlane.xlu0 %2770
      %v2772 = vsel %vm1352, %v2718, 0.0
      %2773 = vadd.xlane.f32.xlu0 %v2772
      %v2774 = vpop.xlane.xlu0 %2773
      %v2775 = vsel %vm1352, %v2719, 0.0
      %2776 = vadd.xlane.f32.xlu0 %v2775
      %v2777 = vpop.xlane.xlu0 %2776
      %v2778 = vsel %vm1352, %v2720, 0.0
      %2779 = vadd.xlane.f32.xlu0 %v2778
      %v2780 = vpop.xlane.xlu0 %2779
      %v2781 = vsel %vm1352, %v2721, 0.0
      %2782 = vadd.xlane.f32.xlu0 %v2781
      %v2783 = vpop.xlane.xlu0 %2782
      %v2784 = vsel %vm1352, %v2722, 0.0
      %2785 = vadd.xlane.f32.xlu0 %v2784
      %v2786 = vpop.xlane.xlu0 %2785
      %v2787 = vsel %vm1352, %v2723, 0.0
      %2788 = vadd.xlane.f32.xlu0 %v2787
      %v2789 = vpop.xlane.xlu0 %2788
      %v2790 = vsel %vm1352, %v2724, 0.0
      %2791 = vadd.xlane.f32.xlu0 %v2790
      %v2792 = vpop.xlane.xlu0 %2791
      %v2793 = vsel %vm1352, %v2725, 0.0
      %2794 = vadd.xlane.f32.xlu0 %v2793
      %v2795 = vpop.xlane.xlu0 %2794
      %v2796 = vsel %vm1352, %v2726, 0.0
      %2797 = vadd.xlane.f32.xlu0 %v2796
      %v2798 = vpop.xlane.xlu0 %2797
      %v2799 = vmul.f32 %v2729, 0.17677669
      %v2800 = vmul.f32 %v2732, 0.17677669
      %v2801 = vmul.f32 %v2735, 0.17677669
      %v2802 = vmul.f32 %v2738, 0.17677669
      %v2803 = vmul.f32 %v2741, 0.17677669
      %v2804 = vmul.f32 %v2744, 0.17677669
      %v2805 = vmul.f32 %v2747, 0.17677669
      %v2806 = vmul.f32 %v2750, 0.17677669
      %v2807 = vmul.f32 %v2753, 0.17677669
      %v2808 = vmul.f32 %v2756, 0.17677669
      %v2809 = vmul.f32 %v2759, 0.17677669
      %v2810 = vmul.f32 %v2762, 0.17677669
      %v2811 = vmul.f32 %v2765, 0.17677669
      %v2812 = vmul.f32 %v2768, 0.17677669
      %v2813 = vmul.f32 %v2771, 0.17677669
      %v2814 = vmul.f32 %v2774, 0.17677669
      %v2815 = vmul.f32 %v2777, 0.17677669
      %v2816 = vmul.f32 %v2780, 0.17677669
      %v2817 = vmul.f32 %v2783, 0.17677669
      %v2818 = vmul.f32 %v2786, 0.17677669
      %v2819 = vmul.f32 %v2789, 0.17677669
      %v2820 = vmul.f32 %v2792, 0.17677669
      %v2821 = vmul.f32 %v2795, 0.17677669
      %v2822 = vmul.f32 %v2798, 0.17677669
      %v2823 = vmax.f32 %v2799, %v2807
      %v2824 = vmax.f32 %v2823, %v2815
      %v2825 = vmax.f32 %v2800, %v2808
      %v2826 = vmax.f32 %v2825, %v2816
      %v2827 = vmax.f32 %v2801, %v2809
      %v2828 = vmax.f32 %v2827, %v2817
      %v2829 = vmax.f32 %v2802, %v2810
      %v2830 = vmax.f32 %v2829, %v2818
      %v2831 = vmax.f32 %v2803, %v2811
      %v2832 = vmax.f32 %v2831, %v2819
      %v2833 = vmax.f32 %v2804, %v2812
      %v2834 = vmax.f32 %v2833, %v2820
      %v2835 = vmax.f32 %v2805, %v2813
      %v2836 = vmax.f32 %v2835, %v2821
      %v2837 = vmax.f32 %v2806, %v2814
      %v2838 = vmax.f32 %v2837, %v2822
      %v2839 = vsub.f32 %v2799, %v2824
      %v2840 = vsub.f32 %v2800, %v2826
      %v2841 = vsub.f32 %v2801, %v2828
      %v2842 = vsub.f32 %v2802, %v2830
      %v2843 = vsub.f32 %v2803, %v2832
      %v2844 = vsub.f32 %v2804, %v2834
      %v2845 = vsub.f32 %v2805, %v2836
      %v2846 = vsub.f32 %v2806, %v2838
      %v2847 = vsub.f32 %v2807, %v2824
      %v2848 = vsub.f32 %v2808, %v2826
      %v2849 = vsub.f32 %v2809, %v2828
      %v2850 = vsub.f32 %v2810, %v2830
      %v2851 = vsub.f32 %v2811, %v2832
      %v2852 = vsub.f32 %v2812, %v2834
      %v2853 = vsub.f32 %v2813, %v2836
      %v2854 = vsub.f32 %v2814, %v2838
      %v2855 = vsub.f32 %v2815, %v2824
      %v2856 = vsub.f32 %v2816, %v2826
      %v2857 = vsub.f32 %v2817, %v2828
      %v2858 = vsub.f32 %v2818, %v2830
      %v2859 = vsub.f32 %v2819, %v2832
      %v2860 = vsub.f32 %v2820, %v2834
      %v2861 = vsub.f32 %v2821, %v2836
      %v2862 = vsub.f32 %v2822, %v2838
      %v2863 = vmul.f32 %v2839, 1.442695
      %v2864 = vpow.pop %v2863
      %v2865 = vmul.f32 %v2840, 1.442695
      %v2866 = vpow.pop %v2865
      %v2867 = vmul.f32 %v2841, 1.442695
      %v2868 = vpow.pop %v2867
      %v2869 = vmul.f32 %v2842, 1.442695
      %v2870 = vpow.pop %v2869
      %v2871 = vmul.f32 %v2843, 1.442695
      %v2872 = vpow.pop %v2871
      %v2873 = vmul.f32 %v2844, 1.442695
      %v2874 = vpow.pop %v2873
      %v2875 = vmul.f32 %v2845, 1.442695
      %v2876 = vpow.pop %v2875
      %v2877 = vmul.f32 %v2846, 1.442695
      %v2878 = vpow.pop %v2877
      %v2879 = vmul.f32 %v2847, 1.442695
      %v2880 = vpow.pop %v2879
      %v2881 = vmul.f32 %v2848, 1.442695
      %v2882 = vpow.pop %v2881
      %v2883 = vmul.f32 %v2849, 1.442695
      %v2884 = vpow.pop %v2883
      %v2885 = vmul.f32 %v2850, 1.442695
      %v2886 = vpow.pop %v2885
      %v2887 = vmul.f32 %v2851, 1.442695
      %v2888 = vpow.pop %v2887
      %v2889 = vmul.f32 %v2852, 1.442695
      %v2890 = vpow.pop %v2889
      %v2891 = vmul.f32 %v2853, 1.442695
      %v2892 = vpow.pop %v2891
      %v2893 = vmul.f32 %v2854, 1.442695
      %v2894 = vpow.pop %v2893
      %v2895 = vmul.f32 %v2855, 1.442695
      %v2896 = vpow.pop %v2895
      %v2897 = vmul.f32 %v2856, 1.442695
      %v2898 = vpow.pop %v2897
      %v2899 = vmul.f32 %v2857, 1.442695
      %v2900 = vpow.pop %v2899
      %v2901 = vmul.f32 %v2858, 1.442695
      %v2902 = vpow.pop %v2901
      %v2903 = vmul.f32 %v2859, 1.442695
      %v2904 = vpow.pop %v2903
      %v2905 = vmul.f32 %v2860, 1.442695
      %v2906 = vpow.pop %v2905
      %v2907 = vmul.f32 %v2861, 1.442695
      %v2908 = vpow.pop %v2907
      %v2909 = vmul.f32 %v2862, 1.442695
      %v2910 = vpow.pop %v2909
      %v2911 = vadd.f32 %v2864, %v2880
      %v2912 = vadd.f32 %v2911, %v2896
      %v2913 = vadd.f32 %v2866, %v2882
      %v2914 = vadd.f32 %v2913, %v2898
      %v2915 = vadd.f32 %v2868, %v2884
      %v2916 = vadd.f32 %v2915, %v2900
      %v2917 = vadd.f32 %v2870, %v2886
      %v2918 = vadd.f32 %v2917, %v2902
      %v2919 = vadd.f32 %v2872, %v2888
      %v2920 = vadd.f32 %v2919, %v2904
      %v2921 = vadd.f32 %v2874, %v2890
      %v2922 = vadd.f32 %v2921, %v2906
      %v2923 = vadd.f32 %v2876, %v2892
      %v2924 = vadd.f32 %v2923, %v2908
      %v2925 = vadd.f32 %v2878, %v2894
      %v2926 = vadd.f32 %v2925, %v2910
      %v2927 = vrcp.pop %v2912
      %v2928 = vrcp.pop %v2914
      %v2929 = vrcp.pop %v2916
      %v2930 = vrcp.pop %v2918
      %v2931 = vrcp.pop %v2920
      %v2932 = vrcp.pop %v2922
      %v2933 = vrcp.pop %v2924
      %v2934 = vrcp.pop %v2926
      %v2935 = vmul.f32 %v2864, %v2927
      %v2936 = vmul.f32 %v2866, %v2928
      %v2937 = vmul.f32 %v2868, %v2929
      %v2938 = vmul.f32 %v2870, %v2930
      %v2939 = vmul.f32 %v2872, %v2931
      %v2940 = vmul.f32 %v2874, %v2932
      %v2941 = vmul.f32 %v2876, %v2933
      %v2942 = vmul.f32 %v2878, %v2934
      %v2943 = vmul.f32 %v2880, %v2927
      %v2944 = vmul.f32 %v2882, %v2928
      %v2945 = vmul.f32 %v2884, %v2929
      %v2946 = vmul.f32 %v2886, %v2930
      %v2947 = vmul.f32 %v2888, %v2931
      %v2948 = vmul.f32 %v2890, %v2932
      %v2949 = vmul.f32 %v2892, %v2933
      %v2950 = vmul.f32 %v2894, %v2934
      %v2951 = vmul.f32 %v2896, %v2927
      %v2952 = vmul.f32 %v2898, %v2928
      %v2953 = vmul.f32 %v2900, %v2929
      %v2954 = vmul.f32 %v2902, %v2930
      %v2955 = vmul.f32 %v2904, %v2931
      %v2956 = vmul.f32 %v2906, %v2932
      %v2957 = vmul.f32 %v2908, %v2933
      %v2958 = vmul.f32 %v2910, %v2934
      %v2959 = vmul.f32 %v2935, %v2471
      %v2960 = vmul.f32 %v2936, %v2472
      %v2961 = vmul.f32 %v2937, %v2473
      %v2962 = vmul.f32 %v2938, %v2474
      %v2963 = vmul.f32 %v2939, %v2475
      %v2964 = vmul.f32 %v2940, %v2476
      %v2965 = vmul.f32 %v2941, %v2477
      %v2966 = vmul.f32 %v2942, %v2478
      %v2967 = vmul.f32 %v2943, %v2479
      %v2968 = vmul.f32 %v2944, %v2480
      %v2969 = vmul.f32 %v2945, %v2481
      %v2970 = vmul.f32 %v2946, %v2482
      %v2971 = vmul.f32 %v2947, %v2483
      %v2972 = vmul.f32 %v2948, %v2484
      %v2973 = vmul.f32 %v2949, %v2485
      %v2974 = vmul.f32 %v2950, %v2486
      %v2975 = vmul.f32 %v2951, %v2487
      %v2976 = vmul.f32 %v2952, %v2488
      %v2977 = vmul.f32 %v2953, %v2489
      %v2978 = vmul.f32 %v2954, %v2490
      %v2979 = vmul.f32 %v2955, %v2491
      %v2980 = vmul.f32 %v2956, %v2492
      %v2981 = vmul.f32 %v2957, %v2493
      %v2982 = vmul.f32 %v2958, %v2494
      %v2983 = vsel %vm1352, %v2959, 0.0
      %v2984 = vsel %vm1352, %v2967, 0.0
      %v2985 = vadd.f32 %v2983, %v2984
      %v2986 = vsel %vm1352, %v2975, 0.0
      %v2987 = vadd.f32 %v2985, %v2986
      %v2988 = vsel %vm1352, %v2960, 0.0
      %v2989 = vsel %vm1352, %v2968, 0.0
      %v2990 = vadd.f32 %v2988, %v2989
      %v2991 = vsel %vm1352, %v2976, 0.0
      %v2992 = vadd.f32 %v2990, %v2991
      %v2993 = vsel %vm1352, %v2961, 0.0
      %v2994 = vsel %vm1352, %v2969, 0.0
      %v2995 = vadd.f32 %v2993, %v2994
      %v2996 = vsel %vm1352, %v2977, 0.0
      %v2997 = vadd.f32 %v2995, %v2996
      %v2998 = vsel %vm1352, %v2962, 0.0
      %v2999 = vsel %vm1352, %v2970, 0.0
      %v3000 = vadd.f32 %v2998, %v2999
      %v3001 = vsel %vm1352, %v2978, 0.0
      %v3002 = vadd.f32 %v3000, %v3001
      %v3003 = vsel %vm1352, %v2963, 0.0
      %v3004 = vsel %vm1352, %v2971, 0.0
      %v3005 = vadd.f32 %v3003, %v3004
      %v3006 = vsel %vm1352, %v2979, 0.0
      %v3007 = vadd.f32 %v3005, %v3006
      %v3008 = vsel %vm1352, %v2964, 0.0
      %v3009 = vsel %vm1352, %v2972, 0.0
      %v3010 = vadd.f32 %v3008, %v3009
      %v3011 = vsel %vm1352, %v2980, 0.0
      %v3012 = vadd.f32 %v3010, %v3011
      %v3013 = vsel %vm1352, %v2965, 0.0
      %v3014 = vsel %vm1352, %v2973, 0.0
      %v3015 = vadd.f32 %v3013, %v3014
      %v3016 = vsel %vm1352, %v2981, 0.0
      %v3017 = vadd.f32 %v3015, %v3016
      %v3018 = vsel %vm1352, %v2966, 0.0
      %v3019 = vsel %vm1352, %v2974, 0.0
      %v3020 = vadd.f32 %v3018, %v3019
      %v3021 = vsel %vm1352, %v2982, 0.0
      %v3022 = vadd.f32 %v3020, %v3021
      %v3024 = vsel %vm1352, %v2681, 0
      %v3027 = vsel %vm1352, %v2684, 0
      %v3030 = vsel %vm1352, %v2687, 0
      %v3033 = vsel %vm1352, %v2690, 0
      %v3036 = vsel %vm1352, %v2693, 0
      %v3039 = vsel %vm1352, %v2696, 0
      %v3042 = vsel %vm1352, %v2699, 0
      %v3045 = vsel %vm1352, %v2702, 0
      %3047 = vmatprep.subr.mxu0 0.0
      %3048 = vmatpush1.msra.mxu0 %v547
      %3049 = vmatprep.subr.mxu0 0.0
      %3050 = vmatpush1.msra.mxu0 %v548
      %3051 = vmatprep.subr.mxu0 0.0
      %3052 = vmatpush1.msra.mxu0 %v549
      %3053 = vmatprep.subr.mxu0 0.0
      %3054 = vmatpush1.msra.mxu0 %v550
      %3055 = vmatprep.subr.mxu0 0.0
      %3056 = vmatpush1.msra.mxu0 0.0
      %3057 = vmatprep.subr.mxu0 0.0
      %3058 = vmatpush1.msra.mxu0 0.0
      %3059 = vmatprep.subr.mxu0 0.0
      %3060 = vmatpush1.msra.mxu0 0.0
      %3061 = vmatprep.subr.mxu0 0.0
      %3062 = vmatpush1.msra.mxu0 0.0
      %3063 = vmatprep.subr.mxu0 0.0
      %3064 = vmatpush1.msra.mxu0 0.0
      %3065 = vmatprep.subr.mxu0 0.0
      %3066 = vmatpush1.msra.mxu0 0.0
      %3067 = vmatprep.subr.mxu0 0.0
      %3068 = vmatpush1.msra.mxu0 0.0
      %3069 = vmatprep.subr.mxu0 0.0
      %3070 = vmatpush1.msra.mxu0 0.0
      %3071 = vmatprep.subr.mxu0 0.0
      %3072 = vmatpush1.msra.mxu0 0.0
      %3073 = vmatprep.subr.mxu0 0.0
      %3074 = vmatpush1.msra.mxu0 0.0
      %3075 = vmatprep.subr.mxu0 0.0
      %3076 = vmatpush1.msra.mxu0 0.0
      %3077 = vmatprep.subr.mxu0 0.0
      %3078 = vmatpush1.msra.mxu0 0.0
      %3079 = vmatprep.subr.mxu0 0.0
      %3080 = vmatpush1.msra.mxu0 0.0
      %3081 = vmatprep.subr.mxu0 0.0
      %3082 = vmatpush1.msra.mxu0 0.0
      %3083 = vmatprep.subr.mxu0 0.0
      %3084 = vmatpush1.msra.mxu0 0.0
      %3085 = vmatprep.subr.mxu0 0.0
      %3086 = vmatpush1.msra.mxu0 0.0
      %3087 = vmatprep.subr.mxu0 0.0
      %3088 = vmatpush1.msra.mxu0 0.0
      %3089 = vmatprep.subr.mxu0 0.0
      %3090 = vmatpush1.msra.mxu0 0.0
      %3091 = vmatprep.subr.mxu0 0.0
      %3092 = vmatpush1.msra.mxu0 0.0
      %3093 = vmatprep.subr.mxu0 0.0
      %3094 = vmatpush1.msra.mxu0 0.0
      %3095 = vmatprep.subr.mxu0 0.0
      %3096 = vmatpush1.msra.mxu0 0.0
      %3097 = vmatprep.subr.mxu0 0.0
      %3098 = vmatpush1.msra.mxu0 0.0
      %3099 = vmatprep.subr.mxu0 0.0
      %3100 = vmatpush1.msra.mxu0 0.0
      %3101 = vmatprep.subr.mxu0 0.0
      %3102 = vmatpush1.msra.mxu0 0.0
      %3103 = vmatprep.subr.mxu0 0.0
      %3104 = vmatpush1.msra.mxu0 0.0
      %3105 = vmatprep.subr.mxu0 0.0
      %3106 = vmatpush1.msra.mxu0 0.0
      %3107 = vmatprep.subr.mxu0 0.0
      %3108 = vmatpush1.msra.mxu0 0.0
      %3109 = vmatprep.subr.mxu0 0.0
      %3110 = vmatpush1.msra.mxu0 0.0
      %3111 = vmatprep.mubr.f32.mxu0 0.0
      %3112 = vmatmul.mubr.f32.gmra.mrb[0].mxu0 %v3024
      %v3113 = vpop.f32.mrb[0].mxu0
      %v3114 = vadd.f32 0.0, %v3113
      %v3115 = vpop.f32.mrb[0].mxu0
      %3116 = vmatprep.mubr.f32.mxu0 0.0
      %3117 = vmatmul.mubr.f32.gmra.mrb[0].mxu0 %v3027
      %v3118 = vpop.f32.mrb[0].mxu0
      %v3119 = vadd.f32 0.0, %v3118
      %v3120 = vpop.f32.mrb[0].mxu0
      %3121 = vmatprep.mubr.f32.mxu0 0.0
      %3122 = vmatmul.mubr.f32.gmra.mrb[0].mxu0 %v3030
      %v3123 = vpop.f32.mrb[0].mxu0
      %v3124 = vadd.f32 0.0, %v3123
      %v3125 = vpop.f32.mrb[0].mxu0
      %3126 = vmatprep.mubr.f32.mxu0 0.0
      %3127 = vmatmul.mubr.f32.gmra.mrb[0].mxu0 %v3033
      %v3128 = vpop.f32.mrb[0].mxu0
      %v3129 = vadd.f32 0.0, %v3128
      %v3130 = vpop.f32.mrb[0].mxu0
      %3131 = vmatprep.mubr.f32.mxu0 0.0
      %3132 = vmatmul.mubr.f32.gmra.mrb[0].mxu0 %v3036
      %v3133 = vpop.f32.mrb[0].mxu0
      %v3134 = vadd.f32 0.0, %v3133
      %v3135 = vpop.f32.mrb[0].mxu0
      %3136 = vmatprep.mubr.f32.mxu0 0.0
      %3137 = vmatmul.mubr.f32.gmra.mrb[0].mxu0 %v3039
      %v3138 = vpop.f32.mrb[0].mxu0
      %v3139 = vadd.f32 0.0, %v3138
      %v3140 = vpop.f32.mrb[0].mxu0
      %3141 = vmatprep.mubr.f32.mxu0 0.0
      %3142 = vmatmul.mubr.f32.gmra.mrb[0].mxu0 %v3042
      %v3143 = vpop.f32.mrb[0].mxu0
      %v3144 = vadd.f32 0.0, %v3143
      %v3145 = vpop.f32.mrb[0].mxu0
      %3146 = vmatprep.mubr.f32.mxu0 0.0
      %3147 = vmatmul.mubr.f32.gmra.mrb[0].mxu0 %v3045
      %v3148 = vpop.f32.mrb[0].mxu0
      %v3149 = vadd.f32 0.0, %v3148
      %v3150 = vpop.f32.mrb[0].mxu0
      %3151 = vdwg.mxu0
      %3152 = vmatprep.subr.mxu0 0.0
      %3153 = vmatpush1.msra.mxu0 %v543
      %3154 = vmatprep.subr.mxu0 0.0
      %3155 = vmatpush1.msra.mxu0 %v544
      %3156 = vmatprep.subr.mxu0 0.0
      %3157 = vmatpush1.msra.mxu0 %v545
      %3158 = vmatprep.subr.mxu0 0.0
      %3159 = vmatpush1.msra.mxu0 %v546
      %3160 = vmatprep.subr.mxu0 0.0
      %3161 = vmatpush1.msra.mxu0 0.0
      %3162 = vmatprep.subr.mxu0 0.0
      %3163 = vmatpush1.msra.mxu0 0.0
      %3164 = vmatprep.subr.mxu0 0.0
      %3165 = vmatpush1.msra.mxu0 0.0
      %3166 = vmatprep.subr.mxu0 0.0
      %3167 = vmatpush1.msra.mxu0 0.0
      %3168 = vmatprep.subr.mxu0 0.0
      %3169 = vmatpush1.msra.mxu0 0.0
      %3170 = vmatprep.subr.mxu0 0.0
      %3171 = vmatpush1.msra.mxu0 0.0
      %3172 = vmatprep.subr.mxu0 0.0
      %3173 = vmatpush1.msra.mxu0 0.0
      %3174 = vmatprep.subr.mxu0 0.0
      %3175 = vmatpush1.msra.mxu0 0.0
      %3176 = vmatprep.subr.mxu0 0.0
      %3177 = vmatpush1.msra.mxu0 0.0
      %3178 = vmatprep.subr.mxu0 0.0
      %3179 = vmatpush1.msra.mxu0 0.0
      %3180 = vmatprep.subr.mxu0 0.0
      %3181 = vmatpush1.msra.mxu0 0.0
      %3182 = vmatprep.subr.mxu0 0.0
      %3183 = vmatpush1.msra.mxu0 0.0
      %3184 = vmatprep.subr.mxu0 0.0
      %3185 = vmatpush1.msra.mxu0 0.0
      %3186 = vmatprep.subr.mxu0 0.0
      %3187 = vmatpush1.msra.mxu0 0.0
      %3188 = vmatprep.subr.mxu0 0.0
      %3189 = vmatpush1.msra.mxu0 0.0
      %3190 = vmatprep.subr.mxu0 0.0
      %3191 = vmatpush1.msra.mxu0 0.0
      %3192 = vmatprep.subr.mxu0 0.0
      %3193 = vmatpush1.msra.mxu0 0.0
      %3194 = vmatprep.subr.mxu0 0.0
      %3195 = vmatpush1.msra.mxu0 0.0
      %3196 = vmatprep.subr.mxu0 0.0
      %3197 = vmatpush1.msra.mxu0 0.0
      %3198 = vmatprep.subr.mxu0 0.0
      %3199 = vmatpush1.msra.mxu0 0.0
      %3200 = vmatprep.subr.mxu0 0.0
      %3201 = vmatpush1.msra.mxu0 0.0
      %3202 = vmatprep.subr.mxu0 0.0
      %3203 = vmatpush1.msra.mxu0 0.0
      %3204 = vmatprep.subr.mxu0 0.0
      %3205 = vmatpush1.msra.mxu0 0.0
      %3206 = vmatprep.subr.mxu0 0.0
      %3207 = vmatpush1.msra.mxu0 0.0
      %3208 = vmatprep.subr.mxu0 0.0
      %3209 = vmatpush1.msra.mxu0 0.0
      %3210 = vmatprep.subr.mxu0 0.0
      %3211 = vmatpush1.msra.mxu0 0.0
      %3212 = vmatprep.subr.mxu0 0.0
      %3213 = vmatpush1.msra.mxu0 0.0
      %3214 = vmatprep.subr.mxu0 0.0
      %3215 = vmatpush1.msra.mxu0 0.0
      %3216 = vmatprep.mubr.f32.mxu0 0.0
      %3217 = vmatmul.mubr.f32.gmra.mrb[0].mxu0 %v1354
      %v3218 = vpop.f32.mrb[0].mxu0
      %v3219 = vadd.f32 %v3114, %v3218
      %v3220 = vpop.f32.mrb[0].mxu0
      %3221 = vmatprep.mubr.f32.mxu0 0.0
      %3222 = vmatmul.mubr.f32.gmra.mrb[0].mxu0 %v1357
      %v3223 = vpop.f32.mrb[0].mxu0
      %v3224 = vadd.f32 %v3119, %v3223
      %v3225 = vpop.f32.mrb[0].mxu0
      %3226 = vmatprep.mubr.f32.mxu0 0.0
      %3227 = vmatmul.mubr.f32.gmra.mrb[0].mxu0 %v1360
      %v3228 = vpop.f32.mrb[0].mxu0
      %v3229 = vadd.f32 %v3124, %v3228
      %v3230 = vpop.f32.mrb[0].mxu0
      %3231 = vmatprep.mubr.f32.mxu0 0.0
      %3232 = vmatmul.mubr.f32.gmra.mrb[0].mxu0 %v1363
      %v3233 = vpop.f32.mrb[0].mxu0
      %v3234 = vadd.f32 %v3129, %v3233
      %v3235 = vpop.f32.mrb[0].mxu0
      %3236 = vmatprep.mubr.f32.mxu0 0.0
      %3237 = vmatmul.mubr.f32.gmra.mrb[0].mxu0 %v1366
      %v3238 = vpop.f32.mrb[0].mxu0
      %v3239 = vadd.f32 %v3134, %v3238
      %v3240 = vpop.f32.mrb[0].mxu0
      %3241 = vmatprep.mubr.f32.mxu0 0.0
      %3242 = vmatmul.mubr.f32.gmra.mrb[0].mxu0 %v1369
      %v3243 = vpop.f32.mrb[0].mxu0
      %v3244 = vadd.f32 %v3139, %v3243
      %v3245 = vpop.f32.mrb[0].mxu0
      %3246 = vmatprep.mubr.f32.mxu0 0.0
      %3247 = vmatmul.mubr.f32.gmra.mrb[0].mxu0 %v1372
      %v3248 = vpop.f32.mrb[0].mxu0
      %v3249 = vadd.f32 %v3144, %v3248
      %v3250 = vpop.f32.mrb[0].mxu0
      %3251 = vmatprep.mubr.f32.mxu0 0.0
      %3252 = vmatmul.mubr.f32.gmra.mrb[0].mxu0 %v1375
      %v3253 = vpop.f32.mrb[0].mxu0
      %v3254 = vadd.f32 %v3149, %v3253
      %v3255 = vpop.f32.mrb[0].mxu0
      %3256 = vdwg.mxu0
      %v3258 = vsel %vm1352, %v2987, 0
      %v3261 = vsel %vm1352, %v2992, 0
      %v3264 = vsel %vm1352, %v2997, 0
      %v3267 = vsel %vm1352, %v3002, 0
      %v3270 = vsel %vm1352, %v3007, 0
      %v3273 = vsel %vm1352, %v3012, 0
      %v3276 = vsel %vm1352, %v3017, 0
      %v3279 = vsel %vm1352, %v3022, 0
      %3281 = vmatprep.subr.mxu0 0.0
      %3282 = vmatpush1.msra.mxu0 %v551
      %3283 = vmatprep.subr.mxu0 0.0
      %3284 = vmatpush1.msra.mxu0 %v552
      %3285 = vmatprep.subr.mxu0 0.0
      %3286 = vmatpush1.msra.mxu0 %v553
      %3287 = vmatprep.subr.mxu0 0.0
      %3288 = vmatpush1.msra.mxu0 %v554
      %3289 = vmatprep.subr.mxu0 0.0
      %3290 = vmatpush1.msra.mxu0 0.0
      %3291 = vmatprep.subr.mxu0 0.0
      %3292 = vmatpush1.msra.mxu0 0.0
      %3293 = vmatprep.subr.mxu0 0.0
      %3294 = vmatpush1.msra.mxu0 0.0
      %3295 = vmatprep.subr.mxu0 0.0
      %3296 = vmatpush1.msra.mxu0 0.0
      %3297 = vmatprep.subr.mxu0 0.0
      %3298 = vmatpush1.msra.mxu0 0.0
      %3299 = vmatprep.subr.mxu0 0.0
      %3300 = vmatpush1.msra.mxu0 0.0
      %3301 = vmatprep.subr.mxu0 0.0
      %3302 = vmatpush1.msra.mxu0 0.0
      %3303 = vmatprep.subr.mxu0 0.0
      %3304 = vmatpush1.msra.mxu0 0.0
      %3305 = vmatprep.subr.mxu0 0.0
      %3306 = vmatpush1.msra.mxu0 0.0
      %3307 = vmatprep.subr.mxu0 0.0
      %3308 = vmatpush1.msra.mxu0 0.0
      %3309 = vmatprep.subr.mxu0 0.0
      %3310 = vmatpush1.msra.mxu0 0.0
      %3311 = vmatprep.subr.mxu0 0.0
      %3312 = vmatpush1.msra.mxu0 0.0
      %3313 = vmatprep.subr.mxu0 0.0
      %3314 = vmatpush1.msra.mxu0 0.0
      %3315 = vmatprep.subr.mxu0 0.0
      %3316 = vmatpush1.msra.mxu0 0.0
      %3317 = vmatprep.subr.mxu0 0.0
      %3318 = vmatpush1.msra.mxu0 0.0
      %3319 = vmatprep.subr.mxu0 0.0
      %3320 = vmatpush1.msra.mxu0 0.0
      %3321 = vmatprep.subr.mxu0 0.0
      %3322 = vmatpush1.msra.mxu0 0.0
      %3323 = vmatprep.subr.mxu0 0.0
      %3324 = vmatpush1.msra.mxu0 0.0
      %3325 = vmatprep.subr.mxu0 0.0
      %3326 = vmatpush1.msra.mxu0 0.0
      %3327 = vmatprep.subr.mxu0 0.0
      %3328 = vmatpush1.msra.mxu0 0.0
      %3329 = vmatprep.subr.mxu0 0.0
      %3330 = vmatpush1.msra.mxu0 0.0
      %3331 = vmatprep.subr.mxu0 0.0
      %3332 = vmatpush1.msra.mxu0 0.0
      %3333 = vmatprep.subr.mxu0 0.0
      %3334 = vmatpush1.msra.mxu0 0.0
      %3335 = vmatprep.subr.mxu0 0.0
      %3336 = vmatpush1.msra.mxu0 0.0
      %3337 = vmatprep.subr.mxu0 0.0
      %3338 = vmatpush1.msra.mxu0 0.0
      %3339 = vmatprep.subr.mxu0 0.0
      %3340 = vmatpush1.msra.mxu0 0.0
      %3341 = vmatprep.subr.mxu0 0.0
      %3342 = vmatpush1.msra.mxu0 0.0
      %3343 = vmatprep.subr.mxu0 0.0
      %3344 = vmatpush1.msra.mxu0 0.0
      %3345 = vmatprep.mubr.f32.mxu0 0.0
      %3346 = vmatmul.mubr.f32.gmra.mrb[0].mxu0 %v3258
      %v3347 = vpop.f32.mrb[0].mxu0
      %v3348 = vadd.f32 0.0, %v3347
      %v3349 = vpop.f32.mrb[0].mxu0
      %3350 = vmatprep.mubr.f32.mxu0 0.0
      %3351 = vmatmul.mubr.f32.gmra.mrb[0].mxu0 %v3261
      %v3352 = vpop.f32.mrb[0].mxu0
      %v3353 = vadd.f32 0.0, %v3352
      %v3354 = vpop.f32.mrb[0].mxu0
      %3355 = vmatprep.mubr.f32.mxu0 0.0
      %3356 = vmatmul.mubr.f32.gmra.mrb[0].mxu0 %v3264
      %v3357 = vpop.f32.mrb[0].mxu0
      %v3358 = vadd.f32 0.0, %v3357
      %v3359 = vpop.f32.mrb[0].mxu0
      %3360 = vmatprep.mubr.f32.mxu0 0.0
      %3361 = vmatmul.mubr.f32.gmra.mrb[0].mxu0 %v3267
      %v3362 = vpop.f32.mrb[0].mxu0
      %v3363 = vadd.f32 0.0, %v3362
      %v3364 = vpop.f32.mrb[0].mxu0
      %3365 = vmatprep.mubr.f32.mxu0 0.0
      %3366 = vmatmul.mubr.f32.gmra.mrb[0].mxu0 %v3270
      %v3367 = vpop.f32.mrb[0].mxu0
      %v3368 = vadd.f32 0.0, %v3367
      %v3369 = vpop.f32.mrb[0].mxu0
      %3370 = vmatprep.mubr.f32.mxu0 0.0
      %3371 = vmatmul.mubr.f32.gmra.mrb[0].mxu0 %v3273
      %v3372 = vpop.f32.mrb[0].mxu0
      %v3373 = vadd.f32 0.0, %v3372
      %v3374 = vpop.f32.mrb[0].mxu0
      %3375 = vmatprep.mubr.f32.mxu0 0.0
      %3376 = vmatmul.mubr.f32.gmra.mrb[0].mxu0 %v3276
      %v3377 = vpop.f32.mrb[0].mxu0
      %v3378 = vadd.f32 0.0, %v3377
      %v3379 = vpop.f32.mrb[0].mxu0
      %3380 = vmatprep.mubr.f32.mxu0 0.0
      %3381 = vmatmul.mubr.f32.gmra.mrb[0].mxu0 %v3279
      %v3382 = vpop.f32.mrb[0].mxu0
      %v3383 = vadd.f32 0.0, %v3382
      %v3384 = vpop.f32.mrb[0].mxu0
      %3385 = vdwg.mxu0
      %v3386 = vadd.f32 %v3219, %v3348
      %v3387 = vadd.f32 %v3224, %v3353
      %v3388 = vadd.f32 %v3229, %v3358
      %v3389 = vadd.f32 %v3234, %v3363
      %v3390 = vadd.f32 %v3239, %v3368
      %v3391 = vadd.f32 %v3244, %v3373
      %v3392 = vadd.f32 %v3249, %v3378
      %v3393 = vadd.f32 %v3254, %v3383
      %v3395 = vlaneseq
      %v3396 = vshrl.u32 %v3395, 7
      %v3397 = vsub.s32 0, %v3396
      %v3398 = vrot.slane %v555, %v3397
      %v3400 = vadd.f32 %v3386, %v3398
      %v3401 = vadd.f32 %v3387, %v3398
      %v3402 = vadd.f32 %v3388, %v3398
      %v3403 = vadd.f32 %v3389, %v3398
      %v3404 = vadd.f32 %v3390, %v3398
      %v3405 = vadd.f32 %v3391, %v3398
      %v3406 = vadd.f32 %v3392, %v3398
      %v3407 = vadd.f32 %v3393, %v3398
      %v3408 = vtanh.pop %v3400
      %v3409 = vtanh.pop %v3401
      %v3410 = vtanh.pop %v3402
      %v3411 = vtanh.pop %v3403
      %v3412 = vtanh.pop %v3404
      %v3413 = vtanh.pop %v3405
      %v3414 = vtanh.pop %v3406
      %v3415 = vtanh.pop %v3407
      %3416 = vst.msk [vmem:[%s513] sm:$0xff] %vm1018, %v3408
      %3417 = vst.msk [vmem:[%s513 + $0x8] sm:$0xff] %vm1018, %v3409
      %3418 = vst.msk [vmem:[%s513 + $0x10] sm:$0xff] %vm1018, %v3410
      %3419 = vst.msk [vmem:[%s513 + $0x18] sm:$0xff] %vm1018, %v3411
      %3420 = vst.msk [vmem:[%s513 + $0x20] sm:$0xff] %vm1018, %v3412
      %3421 = vst.msk [vmem:[%s513 + $0x28] sm:$0xff] %vm1018, %v3413
      %3422 = vst.msk [vmem:[%s513 + $0x30] sm:$0xff] %vm1018, %v3414
      %3423 = vst.msk [vmem:[%s513 + $0x38] sm:$0xff] %vm1018, %v3415
      %s3424 = smul.u32 8, %s25
      %p3425 = scmp.lt.s32.totalorder %s24, 2
      %s3426 = scalar_select %p3425, %s24, 2
      %p3427 = scmp.lt.s32.totalorder %s3424, 7
      %s3428 = scalar_select %p3427, %s3424, 7
      %s3429 = smul.addr %s3426, 8
      %s3430 = sadd.s32 %s3428, %s3429
      %s3431 = smul.addr %s3430, 8
      %s3432 = scalar_lea.vmem %s9, %s3431
      // Predicated region
      $region57: #{attention_actor_forward.1} parent=55 // pred_check
        %p3433 = pneg %p282
      $region58: #{attention_actor_forward.1} parent=55 // pred_check_branch
        %3435 = sbr.rel (%p3433) target = $region60
      $region59: #{attention_actor_forward.1} parent=55 // pred_region
        %s3436 = smul.u32 8, %s25
      $region60: #{attention_actor_forward.1} parent=55 // pred_fallthru
        _
    $region56: #{attention_actor_forward.1} parent=5 // pred_fallthru
      _
    %p3437 = scmp.le.s32.totalorder 2, %s15
    // Predicated region
    $region61: #{attention_actor_forward.1} parent=5 // pred_check
      %p3438 = pneg %p3437
    $region62: #{attention_actor_forward.1} parent=5 // pred_check_branch
      %3440 = sbr.rel (%p3438) target = $region64
    $region63: #{attention_actor_forward.1} parent=5 // pred_region
      %s3441 = ssub.s32 %s15, 2
      // Predicated region
      $region65: #{attention_actor_forward.1} parent=63 // pred_check
        %p3442 = pneg %p288
      $region66: #{attention_actor_forward.1} parent=63 // pred_check_branch
        %3444 = sbr.rel (%p3442) target = $region68
      $region67: #{attention_actor_forward.1} parent=63 // pred_region
        %s3445 = smul.u32 8, %s27
        %p3446 = scmp.lt.s32.totalorder %s26, 2
        %s3447 = scalar_select %p3446, %s26, 2
        %p3448 = scmp.lt.s32.totalorder %s3445, 7
        %s3449 = scalar_select %p3448, %s3445, 7
        %s3450 = smul.addr %s3447, 8
        %s3451 = sadd.s32 %s3449, %s3450
        %s3452 = smul.addr %s3451, 8
        %s3453 = scalar_lea.vmem %s9, %s3452
      $region68: #{attention_actor_forward.1} parent=63 // pred_fallthru
        _
    $region64: #{attention_actor_forward.1} parent=5 // pred_fallthru
      _
  $region6: #{attention_actor_forward.1} parent=0 // loop_footer
    %s19 = sadd.s32 1, %s15
  $region7: #{attention_actor_forward.1} parent=0 // loop_footer_branch
    %14 = sbr.rel target = $region3
  $region8: #{attention_actor_forward.1} parent=0 // loop_exit
    _

</llo_original>
